<compile_context>
chip_gen: v7x
topology: tpu7x:2x2x1
jax: 0.10.0
libtpu: 0.0.40
codegen_flags: <defaults>
</compile_context>

<pallas_src>
import functools

import jax
import jax.numpy as jnp
from jax import lax
from jax.experimental import pallas as pl
from jax.experimental.pallas import tpu as pltpu


# ---------------------------------------------------------------------------
# Pallas kernels
# ---------------------------------------------------------------------------
def conv_relu_pool_kernel(p_ref, w_ref, b_ref, o_ref, *, pool_p):
    """Fused 3x3-conv (as im2col matmul) + 2x2 max-pool + bias + ReLU.

    p_ref: (1, F, 4*P) bf16   patches, lane index = pool_tap * P + pooled_pixel
    w_ref: (Cout, F)   bf16
    b_ref: (Cout, 1)   f32
    o_ref: (1, Cout, P)        pooled output, NCHW(-flattened) order
    """
    P = pool_p
    # One MXU call for all 4 pool taps (shared weights), f32 accumulation.
    y = jnp.dot(w_ref[...], p_ref[0], preferred_element_type=jnp.float32)   # (Cout, 4P)
    # 2x2 max-pool: max over four 128-aligned lane slices.
    m = jnp.maximum(jnp.maximum(y[:, 0 * P:1 * P], y[:, 1 * P:2 * P]),
                    jnp.maximum(y[:, 2 * P:3 * P], y[:, 3 * P:4 * P]))
    # Bias + ReLU hoisted out of the tap reduction (b is tap-invariant, ReLU monotone).
    o_ref[0] = jnp.maximum(m + b_ref[...], 0.0).astype(o_ref.dtype)


def mlp_kernel(x_ref, w1_ref, b1_ref, w2_ref, b2_ref, o_ref, acc_ref):
    """relu(x @ W1 + b1) @ W2 + b2, K-tiled over Din (grid axis 0 is the reduction).

    x_ref: (N, TK) bf16, w1_ref: (TK, Dh) bf16, b1: (1, Dh) f32,
    w2: (Dh, Dout) f32, b2: (1, Dout) f32, o_ref: (N, Dout) f32, acc_ref: (N, Dh) f32.
    """
    k = pl.program_id(0)

    @pl.when(k == 0)
    def _init():
        acc_ref[...] = jnp.zeros_like(acc_ref)

    acc_ref[...] += jnp.dot(x_ref[...], w1_ref[...], preferred_element_type=jnp.float32)

    @pl.when(k == pl.num_programs(0) - 1)
    def _finalize():
        h = jnp.maximum(acc_ref[...] + b1_ref[...], 0.0)
        o_ref[...] = (jnp.dot(h, w2_ref[...], preferred_element_type=jnp.float32)
                      + b2_ref[...]).astype(o_ref.dtype)


# ---------------------------------------------------------------------------
# XLA-side glue: build pool-grouped im2col patches directly in (F, 4*P) layout
# ---------------------------------------------------------------------------
def build_pool_patches(x_nchw):
    """x: (N, C, H, W) -> patches (N, C*9, 4*P) bf16, with P = (H//2)*(W//2).

    patches[n, c*9 + dy*3 + dx, t*P + p] = xpad[n, c, 2*ph + ty + dy, 2*pw + tx + dx]
    where t = ty*2 + tx and p = ph*(W//2) + pw.  Built from 16 strided slices of the
    padded input (no full-resolution stack/transpose round-trips, everything bf16).
    """
    x = x_nchw.astype(jnp.bfloat16)
    N, C, H, W = x.shape
    Hp, Wp = H // 2, W // 2
    P = Hp * Wp
    xpad = jnp.pad(x, ((0, 0), (0, 0), (1, 1), (1, 1)))

    def tap(ry, rx):  # strided (stride-2) sub-image, shape (N, C, Hp, Wp)
        return xpad[:, :, ry:ry + H:2, rx:rx + W:2].reshape(N, C, 1, 1, P)

    taps = {(ry, rx): tap(ry, rx) for ry in range(4) for rx in range(4)}

    blocks = []
    for dy in range(3):
        for dx in range(3):
            blocks.append(jnp.concatenate(
                [taps[(ty + dy, tx + dx)] for ty in (0, 1) for tx in (0, 1)], axis=3))
    patches = jnp.concatenate(blocks, axis=2)            # (N, C, 9, 4, P)
    return patches.reshape(N, C * 9, 4 * P)


# ---------------------------------------------------------------------------
# Wrappers
# ---------------------------------------------------------------------------
def conv3x3_relu_pool(x_nchw, w_oihw, b):
    """3x3 conv (pad=1) + bias + ReLU + 2x2 max-pool.  Returns (N, Cout, (H/2)*(W/2)) bf16."""
    N, Cin, H, W = x_nchw.shape
    Cout = w_oihw.shape[0]
    Hp, Wp = H // 2, W // 2
    P = Hp * Wp
    F = Cin * 9

    patches = build_pool_patches(x_nchw)                         # (N, F, 4P) bf16
    wm = w_oihw.reshape(Cout, F).astype(jnp.bfloat16)            # (Cout, F), (c,kh,kw) order
    bm = b.reshape(Cout, 1).astype(jnp.float32)

    kernel = functools.partial(conv_relu_pool_kernel, pool_p=P)
    return pl.pallas_call(
        kernel,
        out_shape=jax.ShapeDtypeStruct((N, Cout, P), jnp.bfloat16),
        grid_spec=pltpu.PrefetchScalarGridSpec(
            num_scalar_prefetch=0,
            grid=(N,),
            in_specs=[
                pl.BlockSpec((1, F, 4 * P), lambda n: (n, 0, 0)),
                pl.BlockSpec((Cout, F), lambda n: (0, 0)),
                pl.BlockSpec((Cout, 1), lambda n: (0, 0)),
            ],
            out_specs=pl.BlockSpec((1, Cout, P), lambda n: (n, 0, 0)),
        ),
        compiler_params=pltpu.CompilerParams(dimension_semantics=("parallel",)),
    )(patches, wm, bm)


def mlp(x, w1, b1, w2, b2, *, tk=2048):
    """relu(x @ w1 + b1) @ w2 + b2 with the Din reduction tiled over the grid."""
    N, Din = x.shape
    Dh = w1.shape[1]
    Dout = w2.shape[1]
    assert Din % tk == 0
    nk = Din // tk

    x16 = x.astype(jnp.bfloat16)
    w1_16 = w1.astype(jnp.bfloat16)
    return pl.pallas_call(
        mlp_kernel,
        out_shape=jax.ShapeDtypeStruct((N, Dout), jnp.float32),
        grid_spec=pltpu.PrefetchScalarGridSpec(
            num_scalar_prefetch=0,
            grid=(nk,),
            in_specs=[
                pl.BlockSpec((N, tk), lambda k: (0, k)),
                pl.BlockSpec((tk, Dh), lambda k: (k, 0)),
                pl.BlockSpec((1, Dh), lambda k: (0, 0)),
                pl.BlockSpec((Dh, Dout), lambda k: (0, 0)),
                pl.BlockSpec((1, Dout), lambda k: (0, 0)),
            ],
            out_specs=pl.BlockSpec((N, Dout), lambda k: (0, 0)),
            scratch_shapes=[pltpu.VMEM((N, Dh), jnp.float32)],
        ),
        compiler_params=pltpu.CompilerParams(dimension_semantics=("arbitrary",)),
    )(x16, w1_16,
      b1.reshape(1, -1).astype(jnp.float32),
      w2.astype(jnp.float32),
      b2.reshape(1, -1).astype(jnp.float32))


@jax.jit
def mon_cnn_forward(x_nchw, params):
    """Equivalent of MonCNN.forward on NCHW input (N, 3, 64, 64)."""
    w1, b1, w2, b2, wf1, bf1, wf2, bf2 = params
    N = x_nchw.shape[0]
    y1 = conv3x3_relu_pool(x_nchw, w1, b1)                 # (N, 16, 32*32), NCHW order
    y1 = y1.reshape(N, 16, 32, 32)
    y2 = conv3x3_relu_pool(y1, w2, b2)                     # (N, 32, 16*16), NCHW order
    flat = y2.reshape(N, 32 * 16 * 16)                     # already PyTorch flatten order
    return mlp(flat, wf1, bf1, wf2, bf2)                   # (N, num_classes)


# ---------------------------------------------------------------------------
# Deterministic synthetic parameters (shapes from MonCNN.__init__)
# ---------------------------------------------------------------------------
def init_params(key):
    ks = jax.random.split(key, 8)
    w1 = jax.random.normal(ks[0], (16, 3, 3, 3), jnp.float32) * 0.10    # Conv2d(3,16,3)
    b1 = jax.random.normal(ks[1], (16,), jnp.float32) * 0.10
    w2 = jax.random.normal(ks[2], (32, 16, 3, 3), jnp.float32) * 0.05   # Conv2d(16,32,3)
    b2 = jax.random.normal(ks[3], (32,), jnp.float32) * 0.10
    wf1 = jax.random.normal(ks[4], (32 * 16 * 16, 64), jnp.float32) * 0.01  # Linear(8192,64)
    bf1 = jax.random.normal(ks[5], (64,), jnp.float32) * 0.10
    wf2 = jax.random.normal(ks[6], (64, 3), jnp.float32) * 0.10          # Linear(64,3)
    bf2 = jax.random.normal(ks[7], (3,), jnp.float32) * 0.10
    return (w1, b1, w2, b2, wf1, bf1, wf2, bf2)


# ---------------------------------------------------------------------------
# Pure-JAX f32 reference (mirrors PyTorch semantics exactly)
# ---------------------------------------------------------------------------
def reference_forward(x_nchw, params):
    w1, b1, w2, b2, wf1, bf1, wf2, bf2 = params

    def conv_block(x, w, b):
        y = lax.conv_general_dilated(x, w, (1, 1), "SAME",
                                     dimension_numbers=("NCHW", "OIHW", "NCHW"))
        y = jnp.maximum(y + b[None, :, None, None], 0.0)
        N, C, H, W = y.shape
        return y.reshape(N, C, H // 2, 2, W // 2, 2).max(axis=(3, 5))

    y = conv_block(x_nchw, w1, b1)
    y = conv_block(y, w2, b2)
    y = y.reshape(y.shape[0], -1)
    y = jnp.maximum(y @ wf1 + bf1, 0.0)
    return y @ wf2 + bf2


if __name__ == "__main__":
    key = jax.random.PRNGKey(0)
    kx, kp = jax.random.split(key)
    # Spatial size 64x64 is implied by Linear(32*16*16, 64) after two MaxPool2d(2).
    x = jax.random.normal(kx, (2, 3, 64, 64), jnp.float32)
    params = init_params(kp)

    out = mon_cnn_forward(x, params)
    out = jax.block_until_ready(out)
    assert out.shape == (2, 3), out.shape

    ref = reference_forward(x, params)
    # bf16 MXU operands (f32 accumulation) -> slightly relaxed tolerance vs pure-f32 reference.
    if not jnp.allclose(out, ref, atol=3e-2, rtol=3e-2):
        raise AssertionError(
            f"Pallas output mismatch: max abs err = {jnp.max(jnp.abs(out - ref))}")

    print("KERNEL_OK")
</pallas_src>

<mosaic_0001>
module attributes {stable_mosaic.version = 11 : i64} {
  func.func @conv_relu_pool_kernel(%arg0: i32, %arg1: memref<1x27x4096xbf16, #tpu.memory_space<vmem>>, %arg2: memref<16x27xbf16, #tpu.memory_space<vmem>>, %arg3: memref<16x1xf32, #tpu.memory_space<vmem>>, %arg4: memref<1x16x1024xbf16, #tpu.memory_space<vmem>>) attributes {dimension_semantics = [#tpu.dimension_semantics<parallel>], iteration_bounds = array<i64: 2>, scalar_prefetch = 0 : i64, scratch_operands = 0 : i64, tpu.core_type = #tpu.core_type<tc>, window_params = [{transform_indices = @transform_0, window_bounds = array<i64: 1, 27, 4096>}, {pipeline_mode = #tpu.pipeline_mode<synchronous>, transform_indices = @transform_1, window_bounds = array<i64: 16, 27>}, {pipeline_mode = #tpu.pipeline_mode<synchronous>, transform_indices = @transform_2, window_bounds = array<i64: 16, 1>}, {transform_indices = @transform_3, window_bounds = array<i64: 1, 16, 1024>}]} {
    %c0 = arith.constant 0 : index
    %c0_0 = arith.constant 0 : index
    %0 = vector.load %arg2[%c0, %c0_0] : memref<16x27xbf16, #tpu.memory_space<vmem>>, vector<16x27xbf16>
    %c0_1 = arith.constant 0 : index
    %c0_2 = arith.constant 0 : index
    %c0_3 = arith.constant 0 : index
    %1 = vector.load %arg1[%c0_1, %c0_2, %c0_3] : memref<1x27x4096xbf16, #tpu.memory_space<vmem>>, vector<1x27x4096xbf16>
    %2 = vector.shape_cast %1 : vector<1x27x4096xbf16> to vector<27x4096xbf16>
    %cst = arith.constant dense<0.000000e+00> : vector<16x4096xf32>
    %3 = tpu.matmul %0, %2, %cst {dimension_numbers = #tpu.dot_dimension_numbers<[1], [0], [0], [1], [0, 0, 1, 1], [], []>} : vector<16x27xbf16>, vector<27x4096xbf16>, vector<16x4096xf32> -> vector<16x4096xf32>
    %4 = vector.extract_strided_slice %3 {offsets = [0, 0], sizes = [16, 1024], strides = [1, 1]} : vector<16x4096xf32> to vector<16x1024xf32>
    %5 = vector.extract_strided_slice %3 {offsets = [0, 1024], sizes = [16, 1024], strides = [1, 1]} : vector<16x4096xf32> to vector<16x1024xf32>
    %6 = arith.maximumf %4, %5 : vector<16x1024xf32>
    %7 = vector.extract_strided_slice %3 {offsets = [0, 2048], sizes = [16, 1024], strides = [1, 1]} : vector<16x4096xf32> to vector<16x1024xf32>
    %8 = vector.extract_strided_slice %3 {offsets = [0, 3072], sizes = [16, 1024], strides = [1, 1]} : vector<16x4096xf32> to vector<16x1024xf32>
    %9 = arith.maximumf %7, %8 : vector<16x1024xf32>
    %10 = arith.maximumf %6, %9 : vector<16x1024xf32>
    %c0_4 = arith.constant 0 : index
    %c0_5 = arith.constant 0 : index
    %11 = vector.load %arg3[%c0_4, %c0_5] : memref<16x1xf32, #tpu.memory_space<vmem>>, vector<16x1xf32>
    %12 = vector.broadcast %11 : vector<16x1xf32> to vector<16x1024xf32>
    %13 = arith.addf %10, %12 : vector<16x1024xf32>
    %cst_6 = arith.constant 0.000000e+00 : f32
    %14 = vector.broadcast %cst_6 : f32 to vector<16x1024xf32>
    %15 = arith.maximumf %13, %14 : vector<16x1024xf32>
    %16 = arith.truncf %15 : vector<16x1024xf32> to vector<16x1024xbf16>
    %c0_7 = arith.constant 0 : index
    %c0_8 = arith.constant 0 : index
    %c0_9 = arith.constant 0 : index
    %17 = vector.load %arg4[%c0_7, %c0_8, %c0_9] : memref<1x16x1024xbf16, #tpu.memory_space<vmem>>, vector<1x16x1024xbf16>
    %18 = vector.shape_cast %17 : vector<1x16x1024xbf16> to vector<16x1024xbf16>
    %19 = vector.shape_cast %16 : vector<16x1024xbf16> to vector<1x16x1024xbf16>
    tpu.vector_store %arg4[%c0_7, %c0_8, %c0_9], %19 {strides = array<i32>} : memref<1x16x1024xbf16, #tpu.memory_space<vmem>>, vector<1x16x1024xbf16>,
    return
  }
  func.func @transform_0(%arg0: i32) -> (i32, i32, i32) {
    %c0_i32 = arith.constant 0 : i32
    %c0_i32_0 = arith.constant 0 : i32
    %c0_i32_1 = arith.constant 0 : i32
    return %arg0, %c0_i32, %c0_i32_0 : i32, i32, i32
  }
  func.func @transform_1(%arg0: i32) -> (i32, i32) {
    %c0_i32 = arith.constant 0 : i32
    %c0_i32_0 = arith.constant 0 : i32
    %c0_i32_1 = arith.constant 0 : i32
    return %c0_i32, %c0_i32_0 : i32, i32
  }
  func.func @transform_2(%arg0: i32) -> (i32, i32) {
    %c0_i32 = arith.constant 0 : i32
    %c0_i32_0 = arith.constant 0 : i32
    %c0_i32_1 = arith.constant 0 : i32
    return %c0_i32, %c0_i32_0 : i32, i32
  }
  func.func @transform_3(%arg0: i32) -> (i32, i32, i32) {
    %c0_i32 = arith.constant 0 : i32
    %c0_i32_0 = arith.constant 0 : i32
    %c0_i32_1 = arith.constant 0 : i32
    return %arg0, %c0_i32, %c0_i32_0 : i32, i32, i32
  }
}

module attributes {stable_mosaic.version = 11 : i64} {
  func.func @conv_relu_pool_kernel(%arg0: i32, %arg1: memref<1x144x1024xbf16, #tpu.memory_space<vmem>>, %arg2: memref<32x144xbf16, #tpu.memory_space<vmem>>, %arg3: memref<32x1xf32, #tpu.memory_space<vmem>>, %arg4: memref<1x32x256xbf16, #tpu.memory_space<vmem>>) attributes {dimension_semantics = [#tpu.dimension_semantics<parallel>], iteration_bounds = array<i64: 2>, scalar_prefetch = 0 : i64, scratch_operands = 0 : i64, tpu.core_type = #tpu.core_type<tc>, window_params = [{transform_indices = @transform_0, window_bounds = array<i64: 1, 144, 1024>}, {pipeline_mode = #tpu.pipeline_mode<synchronous>, transform_indices = @transform_1, window_bounds = array<i64: 32, 144>}, {pipeline_mode = #tpu.pipeline_mode<synchronous>, transform_indices = @transform_2, window_bounds = array<i64: 32, 1>}, {transform_indices = @transform_3, window_bounds = array<i64: 1, 32, 256>}]} {
    %c0 = arith.constant 0 : index
    %c0_0 = arith.constant 0 : index
    %0 = vector.load %arg2[%c0, %c0_0] : memref<32x144xbf16, #tpu.memory_space<vmem>>, vector<32x144xbf16>
    %c0_1 = arith.constant 0 : index
    %c0_2 = arith.constant 0 : index
    %c0_3 = arith.constant 0 : index
    %1 = vector.load %arg1[%c0_1, %c0_2, %c0_3] : memref<1x144x1024xbf16, #tpu.memory_space<vmem>>, vector<1x144x1024xbf16>
    %2 = vector.shape_cast %1 : vector<1x144x1024xbf16> to vector<144x1024xbf16>
    %cst = arith.constant dense<0.000000e+00> : vector<32x1024xf32>
    %3 = tpu.matmul %0, %2, %cst {dimension_numbers = #tpu.dot_dimension_numbers<[1], [0], [0], [1], [0, 0, 1, 1], [], []>} : vector<32x144xbf16>, vector<144x1024xbf16>, vector<32x1024xf32> -> vector<32x1024xf32>
    %4 = vector.extract_strided_slice %3 {offsets = [0, 0], sizes = [32, 256], strides = [1, 1]} : vector<32x1024xf32> to vector<32x256xf32>
    %5 = vector.extract_strided_slice %3 {offsets = [0, 256], sizes = [32, 256], strides = [1, 1]} : vector<32x1024xf32> to vector<32x256xf32>
    %6 = arith.maximumf %4, %5 : vector<32x256xf32>
    %7 = vector.extract_strided_slice %3 {offsets = [0, 512], sizes = [32, 256], strides = [1, 1]} : vector<32x1024xf32> to vector<32x256xf32>
    %8 = vector.extract_strided_slice %3 {offsets = [0, 768], sizes = [32, 256], strides = [1, 1]} : vector<32x1024xf32> to vector<32x256xf32>
    %9 = arith.maximumf %7, %8 : vector<32x256xf32>
    %10 = arith.maximumf %6, %9 : vector<32x256xf32>
    %c0_4 = arith.constant 0 : index
    %c0_5 = arith.constant 0 : index
    %11 = vector.load %arg3[%c0_4, %c0_5] : memref<32x1xf32, #tpu.memory_space<vmem>>, vector<32x1xf32>
    %12 = vector.broadcast %11 : vector<32x1xf32> to vector<32x256xf32>
    %13 = arith.addf %10, %12 : vector<32x256xf32>
    %cst_6 = arith.constant 0.000000e+00 : f32
    %14 = vector.broadcast %cst_6 : f32 to vector<32x256xf32>
    %15 = arith.maximumf %13, %14 : vector<32x256xf32>
    %16 = arith.truncf %15 : vector<32x256xf32> to vector<32x256xbf16>
    %c0_7 = arith.constant 0 : index
    %c0_8 = arith.constant 0 : index
    %c0_9 = arith.constant 0 : index
    %17 = vector.load %arg4[%c0_7, %c0_8, %c0_9] : memref<1x32x256xbf16, #tpu.memory_space<vmem>>, vector<1x32x256xbf16>
    %18 = vector.shape_cast %17 : vector<1x32x256xbf16> to vector<32x256xbf16>
    %19 = vector.shape_cast %16 : vector<32x256xbf16> to vector<1x32x256xbf16>
    tpu.vector_store %arg4[%c0_7, %c0_8, %c0_9], %19 {strides = array<i32>} : memref<1x32x256xbf16, #tpu.memory_space<vmem>>, vector<1x32x256xbf16>,
    return
  }
  func.func @transform_0(%arg0: i32) -> (i32, i32, i32) {
    %c0_i32 = arith.constant 0 : i32
    %c0_i32_0 = arith.constant 0 : i32
    %c0_i32_1 = arith.constant 0 : i32
    return %arg0, %c0_i32, %c0_i32_0 : i32, i32, i32
  }
  func.func @transform_1(%arg0: i32) -> (i32, i32) {
    %c0_i32 = arith.constant 0 : i32
    %c0_i32_0 = arith.constant 0 : i32
    %c0_i32_1 = arith.constant 0 : i32
    return %c0_i32, %c0_i32_0 : i32, i32
  }
  func.func @transform_2(%arg0: i32) -> (i32, i32) {
    %c0_i32 = arith.constant 0 : i32
    %c0_i32_0 = arith.constant 0 : i32
    %c0_i32_1 = arith.constant 0 : i32
    return %c0_i32, %c0_i32_0 : i32, i32
  }
  func.func @transform_3(%arg0: i32) -> (i32, i32, i32) {
    %c0_i32 = arith.constant 0 : i32
    %c0_i32_0 = arith.constant 0 : i32
    %c0_i32_1 = arith.constant 0 : i32
    return %arg0, %c0_i32, %c0_i32_0 : i32, i32, i32
  }
}

module attributes {stable_mosaic.version = 11 : i64} {
  func.func @mlp_kernel(%arg0: i32, %arg1: memref<2x2048xbf16, #tpu.memory_space<vmem>>, %arg2: memref<2048x64xbf16, #tpu.memory_space<vmem>>, %arg3: memref<1x64xf32, #tpu.memory_space<vmem>>, %arg4: memref<64x3xf32, #tpu.memory_space<vmem>>, %arg5: memref<1x3xf32, #tpu.memory_space<vmem>>, %arg6: memref<2x3xf32, #tpu.memory_space<vmem>>, %arg7: memref<2x64xf32, #tpu.memory_space<vmem>>) attributes {dimension_semantics = [#tpu.dimension_semantics<arbitrary>], iteration_bounds = array<i64: 4>, scalar_prefetch = 0 : i64, scratch_operands = 1 : i64, tpu.core_type = #tpu.core_type<tc>, window_params = [{transform_indices = @transform_0, window_bounds = array<i64: 2, 2048>}, {transform_indices = @transform_1, window_bounds = array<i64: 2048, 64>}, {pipeline_mode = #tpu.pipeline_mode<synchronous>, transform_indices = @transform_2, window_bounds = array<i64: 1, 64>}, {pipeline_mode = #tpu.pipeline_mode<synchronous>, transform_indices = @transform_3, window_bounds = array<i64: 64, 3>}, {pipeline_mode = #tpu.pipeline_mode<synchronous>, transform_indices = @transform_4, window_bounds = array<i64: 1, 3>}, {pipeline_mode = #tpu.pipeline_mode<synchronous>, transform_indices = @transform_5, window_bounds = array<i64: 2, 3>}]} {
    %c0_i32 = arith.constant 0 : i32
    %0 = arith.cmpi eq, %arg0, %c0_i32 : i32
    %1 = arith.extui %0 : i1 to i32
    %c0_i32_0 = arith.constant 0 : i32
    %2 = arith.cmpi ne, %1, %c0_i32_0 : i32
    scf.if %2 {
      %cst_9 = arith.constant 0.000000e+00 : f32
      %12 = vector.broadcast %cst_9 : f32 to vector<2x64xf32>
      %c0_10 = arith.constant 0 : index
      %c0_11 = arith.constant 0 : index
      %13 = vector.load %arg7[%c0_10, %c0_11] : memref<2x64xf32, #tpu.memory_space<vmem>>, vector<2x64xf32>
      tpu.vector_store %arg7[%c0_10, %c0_11], %12 {strides = array<i32>} : memref<2x64xf32, #tpu.memory_space<vmem>>, vector<2x64xf32>,
    } else {
    }
    %c0 = arith.constant 0 : index
    %c0_1 = arith.constant 0 : index
    %3 = vector.load %arg7[%c0, %c0_1] : memref<2x64xf32, #tpu.memory_space<vmem>>, vector<2x64xf32>
    %c0_2 = arith.constant 0 : index
    %c0_3 = arith.constant 0 : index
    %4 = vector.load %arg1[%c0_2, %c0_3] : memref<2x2048xbf16, #tpu.memory_space<vmem>>, vector<2x2048xbf16>
    %c0_4 = arith.constant 0 : index
    %c0_5 = arith.constant 0 : index
    %5 = vector.load %arg2[%c0_4, %c0_5] : memref<2048x64xbf16, #tpu.memory_space<vmem>>, vector<2048x64xbf16>
    %cst = arith.constant dense<0.000000e+00> : vector<2x64xf32>
    %6 = tpu.matmul %4, %5, %cst {dimension_numbers = #tpu.dot_dimension_numbers<[1], [0], [0], [1], [0, 0, 1, 1], [], []>} : vector<2x2048xbf16>, vector<2048x64xbf16>, vector<2x64xf32> -> vector<2x64xf32>
    %7 = arith.addf %3, %6 : vector<2x64xf32>
    %c0_6 = arith.constant 0 : index
    %c0_7 = arith.constant 0 : index
    %8 = vector.load %arg7[%c0_6, %c0_7] : memref<2x64xf32, #tpu.memory_space<vmem>>, vector<2x64xf32>
    tpu.vector_store %arg7[%c0_6, %c0_7], %7 {strides = array<i32>} : memref<2x64xf32, #tpu.memory_space<vmem>>, vector<2x64xf32>,
    %c3_i32 = arith.constant 3 : i32
    %9 = arith.cmpi eq, %arg0, %c3_i32 : i32
    %10 = arith.extui %9 : i1 to i32
    %c0_i32_8 = arith.constant 0 : i32
    %11 = arith.cmpi ne, %10, %c0_i32_8 : i32
    scf.if %11 {
      %c0_9 = arith.constant 0 : index
      %c0_10 = arith.constant 0 : index
      %12 = vector.load %arg7[%c0_9, %c0_10] : memref<2x64xf32, #tpu.memory_space<vmem>>, vector<2x64xf32>
      %c0_11 = arith.constant 0 : index
      %c0_12 = arith.constant 0 : index
      %13 = vector.load %arg3[%c0_11, %c0_12] : memref<1x64xf32, #tpu.memory_space<vmem>>, vector<1x64xf32>
      %14 = vector.broadcast %13 : vector<1x64xf32> to vector<2x64xf32>
      %15 = arith.addf %12, %14 : vector<2x64xf32>
      %cst_13 = arith.constant 0.000000e+00 : f32
      %16 = vector.broadcast %cst_13 : f32 to vector<2x64xf32>
      %17 = arith.maximumf %15, %16 : vector<2x64xf32>
      %c0_14 = arith.constant 0 : index
      %c0_15 = arith.constant 0 : index
      %18 = vector.load %arg4[%c0_14, %c0_15] : memref<64x3xf32, #tpu.memory_space<vmem>>, vector<64x3xf32>
      %cst_16 = arith.constant dense<0.000000e+00> : vector<2x3xf32>
      %19 = tpu.matmul %17, %18, %cst_16 {dimension_numbers = #tpu.dot_dimension_numbers<[1], [0], [0], [1], [0, 0, 1, 1], [], []>} : vector<2x64xf32>, vector<64x3xf32>, vector<2x3xf32> -> vector<2x3xf32>
      %c0_17 = arith.constant 0 : index
      %c0_18 = arith.constant 0 : index
      %20 = vector.load %arg5[%c0_17, %c0_18] : memref<1x3xf32, #tpu.memory_space<vmem>>, vector<1x3xf32>
      %21 = vector.broadcast %20 : vector<1x3xf32> to vector<2x3xf32>
      %22 = arith.addf %19, %21 : vector<2x3xf32>
      %c0_19 = arith.constant 0 : index
      %c0_20 = arith.constant 0 : index
      %23 = vector.load %arg6[%c0_19, %c0_20] : memref<2x3xf32, #tpu.memory_space<vmem>>, vector<2x3xf32>
      tpu.vector_store %arg6[%c0_19, %c0_20], %22 {strides = array<i32>} : memref<2x3xf32, #tpu.memory_space<vmem>>, vector<2x3xf32>,
    } else {
    }
    return
  }
  func.func @transform_0(%arg0: i32) -> (i32, i32) {
    %c0_i32 = arith.constant 0 : i32
    %c0_i32_0 = arith.constant 0 : i32
    return %c0_i32, %arg0 : i32, i32
  }
  func.func @transform_1(%arg0: i32) -> (i32, i32) {
    %c0_i32 = arith.constant 0 : i32
    %c0_i32_0 = arith.constant 0 : i32
    return %arg0, %c0_i32 : i32, i32
  }
  func.func @transform_2(%arg0: i32) -> (i32, i32) {
    %c0_i32 = arith.constant 0 : i32
    %c0_i32_0 = arith.constant 0 : i32
    %c0_i32_1 = arith.constant 0 : i32
    return %c0_i32, %c0_i32_0 : i32, i32
  }
  func.func @transform_3(%arg0: i32) -> (i32, i32) {
    %c0_i32 = arith.constant 0 : i32
    %c0_i32_0 = arith.constant 0 : i32
    %c0_i32_1 = arith.constant 0 : i32
    return %c0_i32, %c0_i32_0 : i32, i32
  }
  func.func @transform_4(%arg0: i32) -> (i32, i32) {
    %c0_i32 = arith.constant 0 : i32
    %c0_i32_0 = arith.constant 0 : i32
    %c0_i32_1 = arith.constant 0 : i32
    return %c0_i32, %c0_i32_0 : i32, i32
  }
  func.func @transform_5(%arg0: i32) -> (i32, i32) {
    %c0_i32 = arith.constant 0 : i32
    %c0_i32_0 = arith.constant 0 : i32
    %c0_i32_1 = arith.constant 0 : i32
    return %c0_i32, %c0_i32_0 : i32, i32
  }
}

</mosaic_0001>

<llo_original>
// kernel: mon_cnn_forward.3
$region0: #{mon_cnn_forward.3}
  #allocation0 [shape = 'u32[]', space=smem, size = 0x4, offset = 0x4, fixed_abs, tag = 'smem constant byte address 0x4 - core index']
  #allocation1 [shape = 'u32[144,128]{1,0:T(1,128)}', space=vmem, size = 0x12000, scoped, tag = 'internal scratch']
  %s0 = inlined_call_operand.vmem [shape: bf16[2,27,4096], index: 0, kind: input, shape index: {}]
  %s1 = inlined_call_operand.vmem [shape: bf16[16,27], index: 1, kind: input, shape index: {}]
  %s2 = inlined_call_operand.vmem [shape: f32[16,1], index: 2, kind: input, shape index: {}]
  %s3 = inlined_call_operand.vmem [shape: bf16[2,16,1024], index: 3, kind: output, shape index: {}]
  %s4 = sld [smem:[#allocation0]]
  $region45: #{mon_cnn_forward.3} parent=0
    _
  %s6 = ssub.s32 1, %s4
  %s7 = scalar_select 0, %s6, %s4
  loop: start=0, step=1, limit=4
  $region2: #{mon_cnn_forward.3} parent=0 // loop_pre_header
    _
  $region3: #{mon_cnn_forward.3} parent=0 // loop_header
    %s9 = sphi 0, %s13
    %p10 = scmp.ge.s32.totalorder %s9, 4
    %s19 = sphi 0, %s21
    %s22 = sphi 0, %s19
    %s23 = sphi 0, %s22
    %s39 = sphi 0, %s23
    %s43 = sphi 0, %s43
    %s45 = sphi 0, %s43
    %s46 = sphi 0, %s45
    %s60 = sphi 0, %s46
    %s64 = sphi 0, %s64
    %s66 = sphi 0, %s64
    %s67 = sphi 0, %s66
    %s81 = sphi 0, %s67
    %s87 = sphi 0, %s89
    %s90 = sphi 0, %s87
    %s91 = sphi 0, %s90
    %s107 = sphi 0, %s91
  $region4: #{mon_cnn_forward.3} parent=0 // loop_header_branch
    %12 = sbr.rel (%p10) target = $region8
  $region5: #{mon_cnn_forward.3} parent=0 // loop_body
    %s14 = ssub.s32 %s9, 1
    %s15 = ssub.s32 %s9, 2
    %s16 = sadd.s32 %s9, 1
    %s17 = ssub.s32 %s9, %s16
    %p18 = scmp.eq.s32.totalorder %s17, 0
    %s20 = sadd.s32 %s19, 1
    %s21 = scalar_select %p18, %s19, %s20
    %p24 = pneg %p18
    %p25 = scmp.eq.s32.totalorder %s9, 1
    %p26 = por %p24, %p25
    %p27 = scmp.ne.s32.totalorder %s19, %s22
    %p28 = scmp.eq.s32.totalorder %s9, 0
    %p29 = por %p27, %p28
    %p30 = scmp.ne.s32.totalorder %s19, %s22
    %p31 = scmp.eq.s32.totalorder %s14, 1
    %p32 = por %p30, %p31
    %p33 = scmp.ne.s32.totalorder %s22, %s23
    %p34 = scmp.eq.s32.totalorder %s14, 0
    %p35 = por %p33, %p34
    %p36 = scmp.ne.s32.totalorder %s22, %s23
    %p37 = scmp.eq.s32.totalorder %s15, 1
    %p38 = por %p36, %p37
    %p40 = scmp.ne.s32.totalorder %s23, %s39
    %p41 = scmp.eq.s32.totalorder %s15, 0
    %p42 = por %p40, %p41
    %s44 = sadd.s32 %s43, 1
    %p47 = scmp.eq.s32.totalorder %s9, 1
    %p48 = scmp.ne.s32.totalorder %s43, %s45
    %p49 = scmp.eq.s32.totalorder %s9, 0
    %p50 = por %p48, %p49
    %p51 = scmp.ne.s32.totalorder %s43, %s45
    %p52 = scmp.eq.s32.totalorder %s14, 1
    %p53 = por %p51, %p52
    %p54 = scmp.ne.s32.totalorder %s45, %s46
    %p55 = scmp.eq.s32.totalorder %s14, 0
    %p56 = por %p54, %p55
    %p57 = scmp.ne.s32.totalorder %s45, %s46
    %p58 = scmp.eq.s32.totalorder %s15, 1
    %p59 = por %p57, %p58
    %p61 = scmp.ne.s32.totalorder %s46, %s60
    %p62 = scmp.eq.s32.totalorder %s15, 0
    %p63 = por %p61, %p62
    %s65 = sadd.s32 %s64, 1
    %p68 = scmp.eq.s32.totalorder %s9, 1
    %p69 = scmp.ne.s32.totalorder %s64, %s66
    %p70 = scmp.eq.s32.totalorder %s9, 0
    %p71 = por %p69, %p70
    %p72 = scmp.ne.s32.totalorder %s64, %s66
    %p73 = scmp.eq.s32.totalorder %s14, 1
    %p74 = por %p72, %p73
    %p75 = scmp.ne.s32.totalorder %s66, %s67
    %p76 = scmp.eq.s32.totalorder %s14, 0
    %p77 = por %p75, %p76
    %p78 = scmp.ne.s32.totalorder %s66, %s67
    %p79 = scmp.eq.s32.totalorder %s15, 1
    %p80 = por %p78, %p79
    %p82 = scmp.ne.s32.totalorder %s67, %s81
    %p83 = scmp.eq.s32.totalorder %s15, 0
    %p84 = por %p82, %p83
    %s85 = ssub.s32 %s9, %s16
    %p86 = scmp.eq.s32.totalorder %s85, 0
    %s88 = sadd.s32 %s87, 1
    %s89 = scalar_select %p86, %s87, %s88
    %p92 = pneg %p86
    %p93 = scmp.eq.s32.totalorder %s9, 1
    %p94 = por %p92, %p93
    %p95 = scmp.ne.s32.totalorder %s87, %s90
    %p96 = scmp.eq.s32.totalorder %s9, 0
    %p97 = por %p95, %p96
    %p98 = scmp.ne.s32.totalorder %s87, %s90
    %p99 = scmp.eq.s32.totalorder %s14, 1
    %p100 = por %p98, %p99
    %p101 = scmp.ne.s32.totalorder %s90, %s91
    %p102 = scmp.eq.s32.totalorder %s14, 0
    %p103 = por %p101, %p102
    %p104 = scmp.ne.s32.totalorder %s90, %s91
    %p105 = scmp.eq.s32.totalorder %s15, 1
    %p106 = por %p104, %p105
    %p108 = scmp.ne.s32.totalorder %s91, %s107
    %p109 = scmp.eq.s32.totalorder %s15, 0
    %p110 = por %p108, %p109
    %p111 = scmp.le.s32.totalorder 1, %s9
    %p112 = scmp.lt.s32.totalorder %s9, 3
    %p113 = pnand %p111, %p112
    %p114 = pneg %p113
    // Predicated region
    $region9: #{mon_cnn_forward.3} parent=5 // pred_check
      _
    $region10: #{mon_cnn_forward.3} parent=5 // pred_check_branch
      %116 = sbr.rel (%p113) target = $region12
    $region11: #{mon_cnn_forward.3} parent=5 // pred_region
      %s117 = ssub.s32 %s9, 1
      // Predicated region
      $region13: #{mon_cnn_forward.3} parent=11 // pred_check
        %p118 = pneg %p56
      $region14: #{mon_cnn_forward.3} parent=11 // pred_check_branch
        %120 = sbr.rel (%p118) target = $region16
      $region15: #{mon_cnn_forward.3} parent=11 // pred_region
        _
      $region16: #{mon_cnn_forward.3} parent=11 // pred_fallthru
        _
      // Predicated region
      $region17: #{mon_cnn_forward.3} parent=11 // pred_check
        %p121 = pneg %p77
      $region18: #{mon_cnn_forward.3} parent=11 // pred_check_branch
        %123 = sbr.rel (%p121) target = $region20
      $region19: #{mon_cnn_forward.3} parent=11 // pred_region
        _
      $region20: #{mon_cnn_forward.3} parent=11 // pred_fallthru
        _
    $region12: #{mon_cnn_forward.3} parent=5 // pred_fallthru
      _
    %p124 = scmp.lt.s32.totalorder %s9, 2
    // Predicated region
    $region21: #{mon_cnn_forward.3} parent=5 // pred_check
      %p125 = pneg %p124
    $region22: #{mon_cnn_forward.3} parent=5 // pred_check_branch
      %127 = sbr.rel (%p125) target = $region24
    $region23: #{mon_cnn_forward.3} parent=5 // pred_region
      // Predicated region
      $region25: #{mon_cnn_forward.3} parent=23 // pred_check
        %p128 = pneg %p29
      $region26: #{mon_cnn_forward.3} parent=23 // pred_check_branch
        %130 = sbr.rel (%p128) target = $region28
      $region27: #{mon_cnn_forward.3} parent=23 // pred_region
        %p131 = scmp.lt.s32.totalorder %s9, 1
        %s132 = scalar_select %p131, %s9, 1
        %s133 = smul.addr %s132, 128
        %s134 = smul.addr %s133, 4
        %s135 = scalar_lea.vmem %s0, %s134
      $region28: #{mon_cnn_forward.3} parent=23 // pred_fallthru
        _
    $region24: #{mon_cnn_forward.3} parent=5 // pred_fallthru
      _
    %p136 = scmp.le.s32.totalorder 1, %s9
    %p137 = scmp.lt.s32.totalorder %s9, 3
    %p138 = pnand %p136, %p137
    %p139 = pneg %p138
    // Predicated region
    $region29: #{mon_cnn_forward.3} parent=5 // pred_check
      _
    $region30: #{mon_cnn_forward.3} parent=5 // pred_check_branch
      %141 = sbr.rel (%p138) target = $region32
    $region31: #{mon_cnn_forward.3} parent=5 // pred_region
      %s142 = ssub.s32 %s9, 1
      %p143 = scmp.lt.s32.totalorder %s14, 1
      %s144 = scalar_select %p143, %s14, 1
      %s145 = smul.addr %s144, 128
      %s146 = smul.addr %s145, 4
      %s147 = scalar_lea.vmem %s0, %s146
      %p148 = pneg %p35
      %p149 = pneg %p32
      %p150 = pneg %p56
      %p151 = pneg %p53
      %p152 = pneg %p77
      %p153 = pneg %p74
      %p154 = pneg %p103
      %p155 = pneg %p100
      %p156 = scmp.lt.s32.totalorder %s14, 1
      %s157 = scalar_select %p156, %s14, 1
      %s158 = smul.addr %s157, 16
      %s159 = smul.addr %s158, 4
      %s160 = scalar_lea.vmem %s3, %s159
      %p161 = scmp.lt.s32.totalorder %s14, 1
      %s162 = scalar_select %p161, %s14, 1
      %s163 = smul.addr %s162, 128
      %s164 = smul.addr %s163, 4
      %s165 = scalar_lea.vmem %s0, %s164
      %p166 = scmp.lt.s32.totalorder %s14, 1
      %s167 = scalar_select %p166, %s14, 1
      %s168 = smul.addr %s167, 16
      %s169 = smul.addr %s168, 4
      %s170 = scalar_lea.vmem %s3, %s169
      %v172 = vld [vmem:[%s1] sm:$0xf]
      %v173 = vld [vmem:[%s1 + $0x4] sm:$0xf]
      %v174 = vld [vmem:[%s165] sm:$0xff]
      %v175 = vld [vmem:[%s165 + $0x8] sm:$0xff]
      %v176 = vld [vmem:[%s165 + $0x10] sm:$0xff]
      %v177 = vld [vmem:[%s165 + $0x18] sm:$0xff]
      %v178 = vld [vmem:[%s165 + $0x20] sm:$0xff]
      %v179 = vld [vmem:[%s165 + $0x28] sm:$0xff]
      %v180 = vld [vmem:[%s165 + $0x30] sm:$0xff]
      %v181 = vld [vmem:[%s165 + $0x38] sm:$0xff]
      %v182 = vld [vmem:[%s165 + $0x40] sm:$0xff]
      %v183 = vld [vmem:[%s165 + $0x48] sm:$0xff]
      %v184 = vld [vmem:[%s165 + $0x50] sm:$0xff]
      %v185 = vld [vmem:[%s165 + $0x58] sm:$0xff]
      %v186 = vld [vmem:[%s165 + $0x60] sm:$0xff]
      %v187 = vld [vmem:[%s165 + $0x68] sm:$0xff]
      %v188 = vld [vmem:[%s165 + $0x70] sm:$0xff]
      %v189 = vld [vmem:[%s165 + $0x78] sm:$0xff]
      %v190 = vld [vmem:[%s165 + $0x80] sm:$0xff]
      %v191 = vld [vmem:[%s165 + $0x88] sm:$0xff]
      %v192 = vld [vmem:[%s165 + $0x90] sm:$0xff]
      %v193 = vld [vmem:[%s165 + $0x98] sm:$0xff]
      %v194 = vld [vmem:[%s165 + $0xa0] sm:$0xff]
      %v195 = vld [vmem:[%s165 + $0xa8] sm:$0xff]
      %v196 = vld [vmem:[%s165 + $0xb0] sm:$0xff]
      %v197 = vld [vmem:[%s165 + $0xb8] sm:$0xff]
      %v198 = vld [vmem:[%s165 + $0xc0] sm:$0xff]
      %v199 = vld [vmem:[%s165 + $0xc8] sm:$0xff]
      %v200 = vld [vmem:[%s165 + $0xd0] sm:$0xff]
      %v201 = vld [vmem:[%s165 + $0xd8] sm:$0xff]
      %v202 = vld [vmem:[%s165 + $0xe0] sm:$0xff]
      %v203 = vld [vmem:[%s165 + $0xe8] sm:$0xff]
      %v204 = vld [vmem:[%s165 + $0xf0] sm:$0xff]
      %v205 = vld [vmem:[%s165 + $0xf8] sm:$0xff]
      %v206 = vld [vmem:[%s165 + $0x100] sm:$0xff]
      %v207 = vld [vmem:[%s165 + $0x108] sm:$0xff]
      %v208 = vld [vmem:[%s165 + $0x110] sm:$0xff]
      %v209 = vld [vmem:[%s165 + $0x118] sm:$0xff]
      %v210 = vld [vmem:[%s165 + $0x120] sm:$0xff]
      %v211 = vld [vmem:[%s165 + $0x128] sm:$0xff]
      %v212 = vld [vmem:[%s165 + $0x130] sm:$0xff]
      %v213 = vld [vmem:[%s165 + $0x138] sm:$0xff]
      %v214 = vld [vmem:[%s165 + $0x140] sm:$0xff]
      %v215 = vld [vmem:[%s165 + $0x148] sm:$0xff]
      %v216 = vld [vmem:[%s165 + $0x150] sm:$0xff]
      %v217 = vld [vmem:[%s165 + $0x158] sm:$0xff]
      %v218 = vld [vmem:[%s165 + $0x160] sm:$0xff]
      %v219 = vld [vmem:[%s165 + $0x168] sm:$0xff]
      %v220 = vld [vmem:[%s165 + $0x170] sm:$0xff]
      %v221 = vld [vmem:[%s165 + $0x178] sm:$0xff]
      %v222 = vld [vmem:[%s165 + $0x180] sm:$0x33]
      %v223 = vld [vmem:[%s165 + $0x188] sm:$0x33]
      %v224 = vld [vmem:[%s165 + $0x190] sm:$0x33]
      %v225 = vld [vmem:[%s165 + $0x198] sm:$0x33]
      %v226 = vld [vmem:[%s165 + $0x1a0] sm:$0x33]
      %v227 = vld [vmem:[%s165 + $0x1a8] sm:$0x33]
      %v228 = vld [vmem:[%s165 + $0x1b0] sm:$0x33]
      %v229 = vld [vmem:[%s165 + $0x1b8] sm:$0x33]
      %v230 = vld [vmem:[%s165 + $0x1c0] sm:$0x33]
      %v231 = vld [vmem:[%s165 + $0x1c8] sm:$0x33]
      %v232 = vld [vmem:[%s165 + $0x1d0] sm:$0x33]
      %v233 = vld [vmem:[%s165 + $0x1d8] sm:$0x33]
      %v234 = vld [vmem:[%s165 + $0x1e0] sm:$0x33]
      %v235 = vld [vmem:[%s165 + $0x1e8] sm:$0x33]
      %v236 = vld [vmem:[%s165 + $0x1f0] sm:$0x33]
      %v237 = vld [vmem:[%s165 + $0x1f8] sm:$0x33]
      %v240 = vunpack.c.l.b16 %v172
      %v241 = vunpack.c.l.b16 %v173
      %v242 = vpack.c.b16 %v241, %v240
      %v307 = vunpack.c.l.b16 %v174
      %v308 = vunpack.c.h.b16 %v174
      %v309 = vunpack.c.l.b16 %v175
      %v310 = vunpack.c.h.b16 %v175
      %v311 = vunpack.c.l.b16 %v176
      %v312 = vunpack.c.h.b16 %v176
      %v313 = vunpack.c.l.b16 %v177
      %v314 = vunpack.c.h.b16 %v177
      %v315 = vunpack.c.l.b16 %v178
      %v316 = vunpack.c.h.b16 %v178
      %v317 = vunpack.c.l.b16 %v179
      %v318 = vunpack.c.h.b16 %v179
      %v319 = vunpack.c.l.b16 %v180
      %v320 = vunpack.c.h.b16 %v180
      %v321 = vunpack.c.l.b16 %v181
      %v322 = vunpack.c.h.b16 %v181
      %v323 = vunpack.c.l.b16 %v182
      %v324 = vunpack.c.h.b16 %v182
      %v325 = vunpack.c.l.b16 %v183
      %v326 = vunpack.c.h.b16 %v183
      %v327 = vunpack.c.l.b16 %v184
      %v328 = vunpack.c.h.b16 %v184
      %v329 = vunpack.c.l.b16 %v185
      %v330 = vunpack.c.h.b16 %v185
      %v331 = vunpack.c.l.b16 %v186
      %v332 = vunpack.c.h.b16 %v186
      %v333 = vunpack.c.l.b16 %v187
      %v334 = vunpack.c.h.b16 %v187
      %v335 = vunpack.c.l.b16 %v188
      %v336 = vunpack.c.h.b16 %v188
      %v337 = vunpack.c.l.b16 %v189
      %v338 = vunpack.c.h.b16 %v189
      %v339 = vunpack.c.l.b16 %v190
      %v340 = vunpack.c.h.b16 %v190
      %v341 = vunpack.c.l.b16 %v191
      %v342 = vunpack.c.h.b16 %v191
      %v343 = vunpack.c.l.b16 %v192
      %v344 = vunpack.c.h.b16 %v192
      %v345 = vunpack.c.l.b16 %v193
      %v346 = vunpack.c.h.b16 %v193
      %v347 = vunpack.c.l.b16 %v194
      %v348 = vunpack.c.h.b16 %v194
      %v349 = vunpack.c.l.b16 %v195
      %v350 = vunpack.c.h.b16 %v195
      %v351 = vunpack.c.l.b16 %v196
      %v352 = vunpack.c.h.b16 %v196
      %v353 = vunpack.c.l.b16 %v197
      %v354 = vunpack.c.h.b16 %v197
      %v355 = vunpack.c.l.b16 %v198
      %v356 = vunpack.c.h.b16 %v198
      %v357 = vunpack.c.l.b16 %v199
      %v358 = vunpack.c.h.b16 %v199
      %v359 = vunpack.c.l.b16 %v200
      %v360 = vunpack.c.h.b16 %v200
      %v361 = vunpack.c.l.b16 %v201
      %v362 = vunpack.c.h.b16 %v201
      %v363 = vunpack.c.l.b16 %v202
      %v364 = vunpack.c.h.b16 %v202
      %v365 = vunpack.c.l.b16 %v203
      %v366 = vunpack.c.h.b16 %v203
      %v367 = vunpack.c.l.b16 %v204
      %v368 = vunpack.c.h.b16 %v204
      %v369 = vunpack.c.l.b16 %v205
      %v370 = vunpack.c.h.b16 %v205
      %v371 = vunpack.c.l.b16 %v206
      %v372 = vunpack.c.h.b16 %v206
      %v373 = vunpack.c.l.b16 %v207
      %v374 = vunpack.c.h.b16 %v207
      %v375 = vunpack.c.l.b16 %v208
      %v376 = vunpack.c.h.b16 %v208
      %v377 = vunpack.c.l.b16 %v209
      %v378 = vunpack.c.h.b16 %v209
      %v379 = vunpack.c.l.b16 %v210
      %v380 = vunpack.c.h.b16 %v210
      %v381 = vunpack.c.l.b16 %v211
      %v382 = vunpack.c.h.b16 %v211
      %v383 = vunpack.c.l.b16 %v212
      %v384 = vunpack.c.h.b16 %v212
      %v385 = vunpack.c.l.b16 %v213
      %v386 = vunpack.c.h.b16 %v213
      %v387 = vunpack.c.l.b16 %v214
      %v388 = vunpack.c.h.b16 %v214
      %v389 = vunpack.c.l.b16 %v215
      %v390 = vunpack.c.h.b16 %v215
      %v391 = vunpack.c.l.b16 %v216
      %v392 = vunpack.c.h.b16 %v216
      %v393 = vunpack.c.l.b16 %v217
      %v394 = vunpack.c.h.b16 %v217
      %v395 = vunpack.c.l.b16 %v218
      %v396 = vunpack.c.h.b16 %v218
      %v397 = vunpack.c.l.b16 %v219
      %v398 = vunpack.c.h.b16 %v219
      %v399 = vunpack.c.l.b16 %v220
      %v400 = vunpack.c.h.b16 %v220
      %v401 = vunpack.c.l.b16 %v221
      %v402 = vunpack.c.h.b16 %v221
      %v403 = vunpack.c.l.b16 %v222
      %v404 = vunpack.c.h.b16 %v222
      %v405 = vunpack.c.l.b16 %v223
      %v406 = vunpack.c.h.b16 %v223
      %v407 = vunpack.c.l.b16 %v224
      %v408 = vunpack.c.h.b16 %v224
      %v409 = vunpack.c.l.b16 %v225
      %v410 = vunpack.c.h.b16 %v225
      %v411 = vunpack.c.l.b16 %v226
      %v412 = vunpack.c.h.b16 %v226
      %v413 = vunpack.c.l.b16 %v227
      %v414 = vunpack.c.h.b16 %v227
      %v415 = vunpack.c.l.b16 %v228
      %v416 = vunpack.c.h.b16 %v228
      %v417 = vunpack.c.l.b16 %v229
      %v418 = vunpack.c.h.b16 %v229
      %v419 = vunpack.c.l.b16 %v230
      %v420 = vunpack.c.h.b16 %v230
      %v421 = vunpack.c.l.b16 %v231
      %v422 = vunpack.c.h.b16 %v231
      %v423 = vunpack.c.l.b16 %v232
      %v424 = vunpack.c.h.b16 %v232
      %v425 = vunpack.c.l.b16 %v233
      %v426 = vunpack.c.h.b16 %v233
      %v427 = vunpack.c.l.b16 %v234
      %v428 = vunpack.c.h.b16 %v234
      %v429 = vunpack.c.l.b16 %v235
      %v430 = vunpack.c.h.b16 %v235
      %v431 = vunpack.c.l.b16 %v236
      %v432 = vunpack.c.h.b16 %v236
      %v433 = vunpack.c.l.b16 %v237
      %v434 = vunpack.c.h.b16 %v237
      %v435 = vpack.c.b16 %v339, %v307
      %v436 = vpack.c.b16 %v340, %v308
      %v437 = vpack.c.b16 %v341, %v309
      %v438 = vpack.c.b16 %v342, %v310
      %v439 = vpack.c.b16 %v343, %v311
      %v440 = vpack.c.b16 %v344, %v312
      %v441 = vpack.c.b16 %v345, %v313
      %v442 = vpack.c.b16 %v346, %v314
      %v443 = vpack.c.b16 %v347, %v315
      %v444 = vpack.c.b16 %v348, %v316
      %v445 = vpack.c.b16 %v349, %v317
      %v446 = vpack.c.b16 %v350, %v318
      %v447 = vpack.c.b16 %v351, %v319
      %v448 = vpack.c.b16 %v352, %v320
      %v449 = vpack.c.b16 %v353, %v321
      %v450 = vpack.c.b16 %v354, %v322
      %v451 = vpack.c.b16 %v355, %v323
      %v452 = vpack.c.b16 %v356, %v324
      %v453 = vpack.c.b16 %v357, %v325
      %v454 = vpack.c.b16 %v358, %v326
      %v455 = vpack.c.b16 %v359, %v327
      %v456 = vpack.c.b16 %v360, %v328
      %v457 = vpack.c.b16 %v361, %v329
      %v458 = vpack.c.b16 %v362, %v330
      %v459 = vpack.c.b16 %v363, %v331
      %v460 = vpack.c.b16 %v364, %v332
      %v461 = vpack.c.b16 %v365, %v333
      %v462 = vpack.c.b16 %v366, %v334
      %v463 = vpack.c.b16 %v367, %v335
      %v464 = vpack.c.b16 %v368, %v336
      %v465 = vpack.c.b16 %v369, %v337
      %v466 = vpack.c.b16 %v370, %v338
      %v467 = vpack.c.b16 %v403, %v371
      %v468 = vpack.c.b16 %v404, %v372
      %v469 = vpack.c.b16 %v405, %v373
      %v470 = vpack.c.b16 %v406, %v374
      %v471 = vpack.c.b16 %v407, %v375
      %v472 = vpack.c.b16 %v408, %v376
      %v473 = vpack.c.b16 %v409, %v377
      %v474 = vpack.c.b16 %v410, %v378
      %v475 = vpack.c.b16 %v411, %v379
      %v476 = vpack.c.b16 %v412, %v380
      %v477 = vpack.c.b16 %v413, %v381
      %v478 = vpack.c.b16 %v414, %v382
      %v479 = vpack.c.b16 %v415, %v383
      %v480 = vpack.c.b16 %v416, %v384
      %v481 = vpack.c.b16 %v417, %v385
      %v482 = vpack.c.b16 %v418, %v386
      %v483 = vpack.c.b16 %v419, %v387
      %v484 = vpack.c.b16 %v420, %v388
      %v485 = vpack.c.b16 %v421, %v389
      %v486 = vpack.c.b16 %v422, %v390
      %v487 = vpack.c.b16 %v423, %v391
      %v488 = vpack.c.b16 %v424, %v392
      %v489 = vpack.c.b16 %v425, %v393
      %v490 = vpack.c.b16 %v426, %v394
      %v491 = vpack.c.b16 %v427, %v395
      %v492 = vpack.c.b16 %v428, %v396
      %v493 = vpack.c.b16 %v429, %v397
      %v494 = vpack.c.b16 %v430, %v398
      %v495 = vpack.c.b16 %v431, %v399
      %v496 = vpack.c.b16 %v432, %v400
      %v497 = vpack.c.b16 %v433, %v401
      %v498 = vpack.c.b16 %v434, %v402
      %vm531 = vcmask 220160
      %v533 = vsel %vm531, %v242, 0
      %vm535 = vcmask 1044480
      %vm536 = vcmask 1045504
      %v537 = vsel %vm535, 4294967295, 65535
      %v538 = vsel %vm536, %v537, 0
      %v540 = vand.u32 %v467, %v538
      %v543 = vand.u32 %v468, %v538
      %v546 = vand.u32 %v469, %v538
      %v549 = vand.u32 %v470, %v538
      %v552 = vand.u32 %v471, %v538
      %v555 = vand.u32 %v472, %v538
      %v558 = vand.u32 %v473, %v538
      %v561 = vand.u32 %v474, %v538
      %v564 = vand.u32 %v475, %v538
      %v567 = vand.u32 %v476, %v538
      %v570 = vand.u32 %v477, %v538
      %v573 = vand.u32 %v478, %v538
      %v576 = vand.u32 %v479, %v538
      %v579 = vand.u32 %v480, %v538
      %v582 = vand.u32 %v481, %v538
      %v585 = vand.u32 %v482, %v538
      %v588 = vand.u32 %v483, %v538
      %v591 = vand.u32 %v484, %v538
      %v594 = vand.u32 %v485, %v538
      %v597 = vand.u32 %v486, %v538
      %v600 = vand.u32 %v487, %v538
      %v603 = vand.u32 %v488, %v538
      %v606 = vand.u32 %v489, %v538
      %v609 = vand.u32 %v490, %v538
      %v612 = vand.u32 %v491, %v538
      %v615 = vand.u32 %v492, %v538
      %v618 = vand.u32 %v493, %v538
      %v621 = vand.u32 %v494, %v538
      %v624 = vand.u32 %v495, %v538
      %v627 = vand.u32 %v496, %v538
      %v630 = vand.u32 %v497, %v538
      %v633 = vand.u32 %v498, %v538
      %635 = vmatprep.subr.bf16.mxu0 %v436
      %636 = vmatpush1.bf16.msra.mxu0 %v435
      %637 = vmatprep.subr.bf16.mxu0 %v543
      %638 = vmatpush1.bf16.msra.mxu0 %v540
      %639 = vmatprep.subr.bf16.mxu0 0
      %640 = vmatpush1.bf16.msra.mxu0 0
      %641 = vmatprep.subr.bf16.mxu0 0
      %642 = vmatpush1.bf16.msra.mxu0 0
      %643 = vmatprep.subr.bf16.mxu0 0
      %644 = vmatpush1.bf16.msra.mxu0 0
      %645 = vmatprep.subr.bf16.mxu0 0
      %646 = vmatpush1.bf16.msra.mxu0 0
      %647 = vmatprep.subr.bf16.mxu0 0
      %648 = vmatpush1.bf16.msra.mxu0 0
      %649 = vmatprep.subr.bf16.mxu0 0
      %650 = vmatpush1.bf16.msra.mxu0 0
      %651 = vmatprep.subr.bf16.mxu0 0
      %652 = vmatpush1.bf16.msra.mxu0 0
      %653 = vmatprep.subr.bf16.mxu0 0
      %654 = vmatpush1.bf16.msra.mxu0 0
      %655 = vmatprep.subr.bf16.mxu0 0
      %656 = vmatpush1.bf16.msra.mxu0 0
      %657 = vmatprep.subr.bf16.mxu0 0
      %658 = vmatpush1.bf16.msra.mxu0 0
      %659 = vmatprep.subr.bf16.mxu0 0
      %660 = vmatpush1.bf16.msra.mxu0 0
      %661 = vmatprep.subr.bf16.mxu0 0
      %662 = vmatpush1.bf16.msra.mxu0 0
      %663 = vmatprep.subr.bf16.mxu0 0
      %664 = vmatpush1.bf16.msra.mxu0 0
      %665 = vmatprep.subr.bf16.mxu0 0
      %666 = vmatpush1.bf16.msra.mxu0 0
      %667 = vmatprep.mubr.bf16.mxu0 0
      %668 = vmatmul.mubr.bf16.gmra.mrb[0].mxu0 %v533
      %v669 = vpop.f32.mrb[0].mxu0
      %v670 = vadd.f32 0.0, %v669
      %v671 = vpop.f32.mrb[0].mxu0
      %v672 = vadd.f32 0.0, %v671
      %v673 = vpop.f32.mrb[0].mxu0
      %v674 = vadd.f32 0.0, %v673
      %v675 = vpop.f32.mrb[0].mxu0
      %v676 = vadd.f32 0.0, %v675
      %677 = vdwg.mxu0
      %678 = vmatprep.subr.bf16.mxu0 %v438
      %679 = vmatpush1.bf16.msra.mxu0 %v437
      %680 = vmatprep.subr.bf16.mxu0 %v549
      %681 = vmatpush1.bf16.msra.mxu0 %v546
      %682 = vmatprep.subr.bf16.mxu0 0
      %683 = vmatpush1.bf16.msra.mxu0 0
      %684 = vmatprep.subr.bf16.mxu0 0
      %685 = vmatpush1.bf16.msra.mxu0 0
      %686 = vmatprep.subr.bf16.mxu0 0
      %687 = vmatpush1.bf16.msra.mxu0 0
      %688 = vmatprep.subr.bf16.mxu0 0
      %689 = vmatpush1.bf16.msra.mxu0 0
      %690 = vmatprep.subr.bf16.mxu0 0
      %691 = vmatpush1.bf16.msra.mxu0 0
      %692 = vmatprep.subr.bf16.mxu0 0
      %693 = vmatpush1.bf16.msra.mxu0 0
      %694 = vmatprep.subr.bf16.mxu0 0
      %695 = vmatpush1.bf16.msra.mxu0 0
      %696 = vmatprep.subr.bf16.mxu0 0
      %697 = vmatpush1.bf16.msra.mxu0 0
      %698 = vmatprep.subr.bf16.mxu0 0
      %699 = vmatpush1.bf16.msra.mxu0 0
      %700 = vmatprep.subr.bf16.mxu0 0
      %701 = vmatpush1.bf16.msra.mxu0 0
      %702 = vmatprep.subr.bf16.mxu0 0
      %703 = vmatpush1.bf16.msra.mxu0 0
      %704 = vmatprep.subr.bf16.mxu0 0
      %705 = vmatpush1.bf16.msra.mxu0 0
      %706 = vmatprep.subr.bf16.mxu0 0
      %707 = vmatpush1.bf16.msra.mxu0 0
      %708 = vmatprep.subr.bf16.mxu0 0
      %709 = vmatpush1.bf16.msra.mxu0 0
      %710 = vmatprep.mubr.bf16.mxu0 0
      %711 = vmatmul.mubr.bf16.gmra.mrb[0].mxu0 %v533
      %v712 = vpop.f32.mrb[0].mxu0
      %v713 = vadd.f32 0.0, %v712
      %v714 = vpop.f32.mrb[0].mxu0
      %v715 = vadd.f32 0.0, %v714
      %v716 = vpop.f32.mrb[0].mxu0
      %v717 = vadd.f32 0.0, %v716
      %v718 = vpop.f32.mrb[0].mxu0
      %v719 = vadd.f32 0.0, %v718
      %720 = vdwg.mxu0
      %721 = vmatprep.subr.bf16.mxu0 %v440
      %722 = vmatpush1.bf16.msra.mxu0 %v439
      %723 = vmatprep.subr.bf16.mxu0 %v555
      %724 = vmatpush1.bf16.msra.mxu0 %v552
      %725 = vmatprep.subr.bf16.mxu0 0
      %726 = vmatpush1.bf16.msra.mxu0 0
      %727 = vmatprep.subr.bf16.mxu0 0
      %728 = vmatpush1.bf16.msra.mxu0 0
      %729 = vmatprep.subr.bf16.mxu0 0
      %730 = vmatpush1.bf16.msra.mxu0 0
      %731 = vmatprep.subr.bf16.mxu0 0
      %732 = vmatpush1.bf16.msra.mxu0 0
      %733 = vmatprep.subr.bf16.mxu0 0
      %734 = vmatpush1.bf16.msra.mxu0 0
      %735 = vmatprep.subr.bf16.mxu0 0
      %736 = vmatpush1.bf16.msra.mxu0 0
      %737 = vmatprep.subr.bf16.mxu0 0
      %738 = vmatpush1.bf16.msra.mxu0 0
      %739 = vmatprep.subr.bf16.mxu0 0
      %740 = vmatpush1.bf16.msra.mxu0 0
      %741 = vmatprep.subr.bf16.mxu0 0
      %742 = vmatpush1.bf16.msra.mxu0 0
      %743 = vmatprep.subr.bf16.mxu0 0
      %744 = vmatpush1.bf16.msra.mxu0 0
      %745 = vmatprep.subr.bf16.mxu0 0
      %746 = vmatpush1.bf16.msra.mxu0 0
      %747 = vmatprep.subr.bf16.mxu0 0
      %748 = vmatpush1.bf16.msra.mxu0 0
      %749 = vmatprep.subr.bf16.mxu0 0
      %750 = vmatpush1.bf16.msra.mxu0 0
      %751 = vmatprep.subr.bf16.mxu0 0
      %752 = vmatpush1.bf16.msra.mxu0 0
      %753 = vmatprep.mubr.bf16.mxu0 0
      %754 = vmatmul.mubr.bf16.gmra.mrb[0].mxu0 %v533
      %v755 = vpop.f32.mrb[0].mxu0
      %v756 = vadd.f32 0.0, %v755
      %v757 = vpop.f32.mrb[0].mxu0
      %v758 = vadd.f32 0.0, %v757
      %v759 = vpop.f32.mrb[0].mxu0
      %v760 = vadd.f32 0.0, %v759
      %v761 = vpop.f32.mrb[0].mxu0
      %v762 = vadd.f32 0.0, %v761
      %763 = vdwg.mxu0
      %764 = vmatprep.subr.bf16.mxu0 %v442
      %765 = vmatpush1.bf16.msra.mxu0 %v441
      %766 = vmatprep.subr.bf16.mxu0 %v561
      %767 = vmatpush1.bf16.msra.mxu0 %v558
      %768 = vmatprep.subr.bf16.mxu0 0
      %769 = vmatpush1.bf16.msra.mxu0 0
      %770 = vmatprep.subr.bf16.mxu0 0
      %771 = vmatpush1.bf16.msra.mxu0 0
      %772 = vmatprep.subr.bf16.mxu0 0
      %773 = vmatpush1.bf16.msra.mxu0 0
      %774 = vmatprep.subr.bf16.mxu0 0
      %775 = vmatpush1.bf16.msra.mxu0 0
      %776 = vmatprep.subr.bf16.mxu0 0
      %777 = vmatpush1.bf16.msra.mxu0 0
      %778 = vmatprep.subr.bf16.mxu0 0
      %779 = vmatpush1.bf16.msra.mxu0 0
      %780 = vmatprep.subr.bf16.mxu0 0
      %781 = vmatpush1.bf16.msra.mxu0 0
      %782 = vmatprep.subr.bf16.mxu0 0
      %783 = vmatpush1.bf16.msra.mxu0 0
      %784 = vmatprep.subr.bf16.mxu0 0
      %785 = vmatpush1.bf16.msra.mxu0 0
      %786 = vmatprep.subr.bf16.mxu0 0
      %787 = vmatpush1.bf16.msra.mxu0 0
      %788 = vmatprep.subr.bf16.mxu0 0
      %789 = vmatpush1.bf16.msra.mxu0 0
      %790 = vmatprep.subr.bf16.mxu0 0
      %791 = vmatpush1.bf16.msra.mxu0 0
      %792 = vmatprep.subr.bf16.mxu0 0
      %793 = vmatpush1.bf16.msra.mxu0 0
      %794 = vmatprep.subr.bf16.mxu0 0
      %795 = vmatpush1.bf16.msra.mxu0 0
      %796 = vmatprep.mubr.bf16.mxu0 0
      %797 = vmatmul.mubr.bf16.gmra.mrb[0].mxu0 %v533
      %v798 = vpop.f32.mrb[0].mxu0
      %v799 = vadd.f32 0.0, %v798
      %v800 = vpop.f32.mrb[0].mxu0
      %v801 = vadd.f32 0.0, %v800
      %v802 = vpop.f32.mrb[0].mxu0
      %v803 = vadd.f32 0.0, %v802
      %v804 = vpop.f32.mrb[0].mxu0
      %v805 = vadd.f32 0.0, %v804
      %806 = vdwg.mxu0
      %807 = vmatprep.subr.bf16.mxu0 %v444
      %808 = vmatpush1.bf16.msra.mxu0 %v443
      %809 = vmatprep.subr.bf16.mxu0 %v567
      %810 = vmatpush1.bf16.msra.mxu0 %v564
      %811 = vmatprep.subr.bf16.mxu0 0
      %812 = vmatpush1.bf16.msra.mxu0 0
      %813 = vmatprep.subr.bf16.mxu0 0
      %814 = vmatpush1.bf16.msra.mxu0 0
      %815 = vmatprep.subr.bf16.mxu0 0
      %816 = vmatpush1.bf16.msra.mxu0 0
      %817 = vmatprep.subr.bf16.mxu0 0
      %818 = vmatpush1.bf16.msra.mxu0 0
      %819 = vmatprep.subr.bf16.mxu0 0
      %820 = vmatpush1.bf16.msra.mxu0 0
      %821 = vmatprep.subr.bf16.mxu0 0
      %822 = vmatpush1.bf16.msra.mxu0 0
      %823 = vmatprep.subr.bf16.mxu0 0
      %824 = vmatpush1.bf16.msra.mxu0 0
      %825 = vmatprep.subr.bf16.mxu0 0
      %826 = vmatpush1.bf16.msra.mxu0 0
      %827 = vmatprep.subr.bf16.mxu0 0
      %828 = vmatpush1.bf16.msra.mxu0 0
      %829 = vmatprep.subr.bf16.mxu0 0
      %830 = vmatpush1.bf16.msra.mxu0 0
      %831 = vmatprep.subr.bf16.mxu0 0
      %832 = vmatpush1.bf16.msra.mxu0 0
      %833 = vmatprep.subr.bf16.mxu0 0
      %834 = vmatpush1.bf16.msra.mxu0 0
      %835 = vmatprep.subr.bf16.mxu0 0
      %836 = vmatpush1.bf16.msra.mxu0 0
      %837 = vmatprep.subr.bf16.mxu0 0
      %838 = vmatpush1.bf16.msra.mxu0 0
      %839 = vmatprep.mubr.bf16.mxu0 0
      %840 = vmatmul.mubr.bf16.gmra.mrb[0].mxu0 %v533
      %v841 = vpop.f32.mrb[0].mxu0
      %v842 = vadd.f32 0.0, %v841
      %v843 = vpop.f32.mrb[0].mxu0
      %v844 = vadd.f32 0.0, %v843
      %v845 = vpop.f32.mrb[0].mxu0
      %v846 = vadd.f32 0.0, %v845
      %v847 = vpop.f32.mrb[0].mxu0
      %v848 = vadd.f32 0.0, %v847
      %849 = vdwg.mxu0
      %850 = vmatprep.subr.bf16.mxu0 %v446
      %851 = vmatpush1.bf16.msra.mxu0 %v445
      %852 = vmatprep.subr.bf16.mxu0 %v573
      %853 = vmatpush1.bf16.msra.mxu0 %v570
      %854 = vmatprep.subr.bf16.mxu0 0
      %855 = vmatpush1.bf16.msra.mxu0 0
      %856 = vmatprep.subr.bf16.mxu0 0
      %857 = vmatpush1.bf16.msra.mxu0 0
      %858 = vmatprep.subr.bf16.mxu0 0
      %859 = vmatpush1.bf16.msra.mxu0 0
      %860 = vmatprep.subr.bf16.mxu0 0
      %861 = vmatpush1.bf16.msra.mxu0 0
      %862 = vmatprep.subr.bf16.mxu0 0
      %863 = vmatpush1.bf16.msra.mxu0 0
      %864 = vmatprep.subr.bf16.mxu0 0
      %865 = vmatpush1.bf16.msra.mxu0 0
      %866 = vmatprep.subr.bf16.mxu0 0
      %867 = vmatpush1.bf16.msra.mxu0 0
      %868 = vmatprep.subr.bf16.mxu0 0
      %869 = vmatpush1.bf16.msra.mxu0 0
      %870 = vmatprep.subr.bf16.mxu0 0
      %871 = vmatpush1.bf16.msra.mxu0 0
      %872 = vmatprep.subr.bf16.mxu0 0
      %873 = vmatpush1.bf16.msra.mxu0 0
      %874 = vmatprep.subr.bf16.mxu0 0
      %875 = vmatpush1.bf16.msra.mxu0 0
      %876 = vmatprep.subr.bf16.mxu0 0
      %877 = vmatpush1.bf16.msra.mxu0 0
      %878 = vmatprep.subr.bf16.mxu0 0
      %879 = vmatpush1.bf16.msra.mxu0 0
      %880 = vmatprep.subr.bf16.mxu0 0
      %881 = vmatpush1.bf16.msra.mxu0 0
      %882 = vmatprep.mubr.bf16.mxu0 0
      %883 = vmatmul.mubr.bf16.gmra.mrb[0].mxu0 %v533
      %v884 = vpop.f32.mrb[0].mxu0
      %v885 = vadd.f32 0.0, %v884
      %v886 = vpop.f32.mrb[0].mxu0
      %v887 = vadd.f32 0.0, %v886
      %v888 = vpop.f32.mrb[0].mxu0
      %v889 = vadd.f32 0.0, %v888
      %v890 = vpop.f32.mrb[0].mxu0
      %v891 = vadd.f32 0.0, %v890
      %892 = vdwg.mxu0
      %893 = vmatprep.subr.bf16.mxu0 %v448
      %894 = vmatpush1.bf16.msra.mxu0 %v447
      %895 = vmatprep.subr.bf16.mxu0 %v579
      %896 = vmatpush1.bf16.msra.mxu0 %v576
      %897 = vmatprep.subr.bf16.mxu0 0
      %898 = vmatpush1.bf16.msra.mxu0 0
      %899 = vmatprep.subr.bf16.mxu0 0
      %900 = vmatpush1.bf16.msra.mxu0 0
      %901 = vmatprep.subr.bf16.mxu0 0
      %902 = vmatpush1.bf16.msra.mxu0 0
      %903 = vmatprep.subr.bf16.mxu0 0
      %904 = vmatpush1.bf16.msra.mxu0 0
      %905 = vmatprep.subr.bf16.mxu0 0
      %906 = vmatpush1.bf16.msra.mxu0 0
      %907 = vmatprep.subr.bf16.mxu0 0
      %908 = vmatpush1.bf16.msra.mxu0 0
      %909 = vmatprep.subr.bf16.mxu0 0
      %910 = vmatpush1.bf16.msra.mxu0 0
      %911 = vmatprep.subr.bf16.mxu0 0
      %912 = vmatpush1.bf16.msra.mxu0 0
      %913 = vmatprep.subr.bf16.mxu0 0
      %914 = vmatpush1.bf16.msra.mxu0 0
      %915 = vmatprep.subr.bf16.mxu0 0
      %916 = vmatpush1.bf16.msra.mxu0 0
      %917 = vmatprep.subr.bf16.mxu0 0
      %918 = vmatpush1.bf16.msra.mxu0 0
      %919 = vmatprep.subr.bf16.mxu0 0
      %920 = vmatpush1.bf16.msra.mxu0 0
      %921 = vmatprep.subr.bf16.mxu0 0
      %922 = vmatpush1.bf16.msra.mxu0 0
      %923 = vmatprep.subr.bf16.mxu0 0
      %924 = vmatpush1.bf16.msra.mxu0 0
      %925 = vmatprep.mubr.bf16.mxu0 0
      %926 = vmatmul.mubr.bf16.gmra.mrb[0].mxu0 %v533
      %v927 = vpop.f32.mrb[0].mxu0
      %v928 = vadd.f32 0.0, %v927
      %v929 = vpop.f32.mrb[0].mxu0
      %v930 = vadd.f32 0.0, %v929
      %v931 = vpop.f32.mrb[0].mxu0
      %v932 = vadd.f32 0.0, %v931
      %v933 = vpop.f32.mrb[0].mxu0
      %v934 = vadd.f32 0.0, %v933
      %935 = vdwg.mxu0
      %936 = vmatprep.subr.bf16.mxu0 %v450
      %937 = vmatpush1.bf16.msra.mxu0 %v449
      %938 = vmatprep.subr.bf16.mxu0 %v585
      %939 = vmatpush1.bf16.msra.mxu0 %v582
      %940 = vmatprep.subr.bf16.mxu0 0
      %941 = vmatpush1.bf16.msra.mxu0 0
      %942 = vmatprep.subr.bf16.mxu0 0
      %943 = vmatpush1.bf16.msra.mxu0 0
      %944 = vmatprep.subr.bf16.mxu0 0
      %945 = vmatpush1.bf16.msra.mxu0 0
      %946 = vmatprep.subr.bf16.mxu0 0
      %947 = vmatpush1.bf16.msra.mxu0 0
      %948 = vmatprep.subr.bf16.mxu0 0
      %949 = vmatpush1.bf16.msra.mxu0 0
      %950 = vmatprep.subr.bf16.mxu0 0
      %951 = vmatpush1.bf16.msra.mxu0 0
      %952 = vmatprep.subr.bf16.mxu0 0
      %953 = vmatpush1.bf16.msra.mxu0 0
      %954 = vmatprep.subr.bf16.mxu0 0
      %955 = vmatpush1.bf16.msra.mxu0 0
      %956 = vmatprep.subr.bf16.mxu0 0
      %957 = vmatpush1.bf16.msra.mxu0 0
      %958 = vmatprep.subr.bf16.mxu0 0
      %959 = vmatpush1.bf16.msra.mxu0 0
      %960 = vmatprep.subr.bf16.mxu0 0
      %961 = vmatpush1.bf16.msra.mxu0 0
      %962 = vmatprep.subr.bf16.mxu0 0
      %963 = vmatpush1.bf16.msra.mxu0 0
      %964 = vmatprep.subr.bf16.mxu0 0
      %965 = vmatpush1.bf16.msra.mxu0 0
      %966 = vmatprep.subr.bf16.mxu0 0
      %967 = vmatpush1.bf16.msra.mxu0 0
      %968 = vmatprep.mubr.bf16.mxu0 0
      %969 = vmatmul.mubr.bf16.gmra.mrb[0].mxu0 %v533
      %v970 = vpop.f32.mrb[0].mxu0
      %v971 = vadd.f32 0.0, %v970
      %v972 = vpop.f32.mrb[0].mxu0
      %v973 = vadd.f32 0.0, %v972
      %v974 = vpop.f32.mrb[0].mxu0
      %v975 = vadd.f32 0.0, %v974
      %v976 = vpop.f32.mrb[0].mxu0
      %v977 = vadd.f32 0.0, %v976
      %978 = vdwg.mxu0
      %979 = vmatprep.subr.bf16.mxu0 %v452
      %980 = vmatpush1.bf16.msra.mxu0 %v451
      %981 = vmatprep.subr.bf16.mxu0 %v591
      %982 = vmatpush1.bf16.msra.mxu0 %v588
      %983 = vmatprep.subr.bf16.mxu0 0
      %984 = vmatpush1.bf16.msra.mxu0 0
      %985 = vmatprep.subr.bf16.mxu0 0
      %986 = vmatpush1.bf16.msra.mxu0 0
      %987 = vmatprep.subr.bf16.mxu0 0
      %988 = vmatpush1.bf16.msra.mxu0 0
      %989 = vmatprep.subr.bf16.mxu0 0
      %990 = vmatpush1.bf16.msra.mxu0 0
      %991 = vmatprep.subr.bf16.mxu0 0
      %992 = vmatpush1.bf16.msra.mxu0 0
      %993 = vmatprep.subr.bf16.mxu0 0
      %994 = vmatpush1.bf16.msra.mxu0 0
      %995 = vmatprep.subr.bf16.mxu0 0
      %996 = vmatpush1.bf16.msra.mxu0 0
      %997 = vmatprep.subr.bf16.mxu0 0
      %998 = vmatpush1.bf16.msra.mxu0 0
      %999 = vmatprep.subr.bf16.mxu0 0
      %1000 = vmatpush1.bf16.msra.mxu0 0
      %1001 = vmatprep.subr.bf16.mxu0 0
      %1002 = vmatpush1.bf16.msra.mxu0 0
      %1003 = vmatprep.subr.bf16.mxu0 0
      %1004 = vmatpush1.bf16.msra.mxu0 0
      %1005 = vmatprep.subr.bf16.mxu0 0
      %1006 = vmatpush1.bf16.msra.mxu0 0
      %1007 = vmatprep.subr.bf16.mxu0 0
      %1008 = vmatpush1.bf16.msra.mxu0 0
      %1009 = vmatprep.subr.bf16.mxu0 0
      %1010 = vmatpush1.bf16.msra.mxu0 0
      %1011 = vmatprep.mubr.bf16.mxu0 0
      %1012 = vmatmul.mubr.bf16.gmra.mrb[0].mxu0 %v533
      %v1013 = vpop.f32.mrb[0].mxu0
      %v1014 = vadd.f32 0.0, %v1013
      %v1015 = vpop.f32.mrb[0].mxu0
      %v1016 = vadd.f32 0.0, %v1015
      %v1017 = vpop.f32.mrb[0].mxu0
      %v1018 = vadd.f32 0.0, %v1017
      %v1019 = vpop.f32.mrb[0].mxu0
      %v1020 = vadd.f32 0.0, %v1019
      %1021 = vdwg.mxu0
      %1022 = vmatprep.subr.bf16.mxu0 %v454
      %1023 = vmatpush1.bf16.msra.mxu0 %v453
      %1024 = vmatprep.subr.bf16.mxu0 %v597
      %1025 = vmatpush1.bf16.msra.mxu0 %v594
      %1026 = vmatprep.subr.bf16.mxu0 0
      %1027 = vmatpush1.bf16.msra.mxu0 0
      %1028 = vmatprep.subr.bf16.mxu0 0
      %1029 = vmatpush1.bf16.msra.mxu0 0
      %1030 = vmatprep.subr.bf16.mxu0 0
      %1031 = vmatpush1.bf16.msra.mxu0 0
      %1032 = vmatprep.subr.bf16.mxu0 0
      %1033 = vmatpush1.bf16.msra.mxu0 0
      %1034 = vmatprep.subr.bf16.mxu0 0
      %1035 = vmatpush1.bf16.msra.mxu0 0
      %1036 = vmatprep.subr.bf16.mxu0 0
      %1037 = vmatpush1.bf16.msra.mxu0 0
      %1038 = vmatprep.subr.bf16.mxu0 0
      %1039 = vmatpush1.bf16.msra.mxu0 0
      %1040 = vmatprep.subr.bf16.mxu0 0
      %1041 = vmatpush1.bf16.msra.mxu0 0
      %1042 = vmatprep.subr.bf16.mxu0 0
      %1043 = vmatpush1.bf16.msra.mxu0 0
      %1044 = vmatprep.subr.bf16.mxu0 0
      %1045 = vmatpush1.bf16.msra.mxu0 0
      %1046 = vmatprep.subr.bf16.mxu0 0
      %1047 = vmatpush1.bf16.msra.mxu0 0
      %1048 = vmatprep.subr.bf16.mxu0 0
      %1049 = vmatpush1.bf16.msra.mxu0 0
      %1050 = vmatprep.subr.bf16.mxu0 0
      %1051 = vmatpush1.bf16.msra.mxu0 0
      %1052 = vmatprep.subr.bf16.mxu0 0
      %1053 = vmatpush1.bf16.msra.mxu0 0
      %1054 = vmatprep.mubr.bf16.mxu0 0
      %1055 = vmatmul.mubr.bf16.gmra.mrb[0].mxu0 %v533
      %v1056 = vpop.f32.mrb[0].mxu0
      %v1057 = vadd.f32 0.0, %v1056
      %v1058 = vpop.f32.mrb[0].mxu0
      %v1059 = vadd.f32 0.0, %v1058
      %v1060 = vpop.f32.mrb[0].mxu0
      %v1061 = vadd.f32 0.0, %v1060
      %v1062 = vpop.f32.mrb[0].mxu0
      %v1063 = vadd.f32 0.0, %v1062
      %1064 = vdwg.mxu0
      %1065 = vmatprep.subr.bf16.mxu0 %v456
      %1066 = vmatpush1.bf16.msra.mxu0 %v455
      %1067 = vmatprep.subr.bf16.mxu0 %v603
      %1068 = vmatpush1.bf16.msra.mxu0 %v600
      %1069 = vmatprep.subr.bf16.mxu0 0
      %1070 = vmatpush1.bf16.msra.mxu0 0
      %1071 = vmatprep.subr.bf16.mxu0 0
      %1072 = vmatpush1.bf16.msra.mxu0 0
      %1073 = vmatprep.subr.bf16.mxu0 0
      %1074 = vmatpush1.bf16.msra.mxu0 0
      %1075 = vmatprep.subr.bf16.mxu0 0
      %1076 = vmatpush1.bf16.msra.mxu0 0
      %1077 = vmatprep.subr.bf16.mxu0 0
      %1078 = vmatpush1.bf16.msra.mxu0 0
      %1079 = vmatprep.subr.bf16.mxu0 0
      %1080 = vmatpush1.bf16.msra.mxu0 0
      %1081 = vmatprep.subr.bf16.mxu0 0
      %1082 = vmatpush1.bf16.msra.mxu0 0
      %1083 = vmatprep.subr.bf16.mxu0 0
      %1084 = vmatpush1.bf16.msra.mxu0 0
      %1085 = vmatprep.subr.bf16.mxu0 0
      %1086 = vmatpush1.bf16.msra.mxu0 0
      %1087 = vmatprep.subr.bf16.mxu0 0
      %1088 = vmatpush1.bf16.msra.mxu0 0
      %1089 = vmatprep.subr.bf16.mxu0 0
      %1090 = vmatpush1.bf16.msra.mxu0 0
      %1091 = vmatprep.subr.bf16.mxu0 0
      %1092 = vmatpush1.bf16.msra.mxu0 0
      %1093 = vmatprep.subr.bf16.mxu0 0
      %1094 = vmatpush1.bf16.msra.mxu0 0
      %1095 = vmatprep.subr.bf16.mxu0 0
      %1096 = vmatpush1.bf16.msra.mxu0 0
      %1097 = vmatprep.mubr.bf16.mxu0 0
      %1098 = vmatmul.mubr.bf16.gmra.mrb[0].mxu0 %v533
      %v1099 = vpop.f32.mrb[0].mxu0
      %v1100 = vadd.f32 0.0, %v1099
      %v1101 = vpop.f32.mrb[0].mxu0
      %v1102 = vadd.f32 0.0, %v1101
      %v1103 = vpop.f32.mrb[0].mxu0
      %v1104 = vadd.f32 0.0, %v1103
      %v1105 = vpop.f32.mrb[0].mxu0
      %v1106 = vadd.f32 0.0, %v1105
      %1107 = vdwg.mxu0
      %1108 = vmatprep.subr.bf16.mxu0 %v458
      %1109 = vmatpush1.bf16.msra.mxu0 %v457
      %1110 = vmatprep.subr.bf16.mxu0 %v609
      %1111 = vmatpush1.bf16.msra.mxu0 %v606
      %1112 = vmatprep.subr.bf16.mxu0 0
      %1113 = vmatpush1.bf16.msra.mxu0 0
      %1114 = vmatprep.subr.bf16.mxu0 0
      %1115 = vmatpush1.bf16.msra.mxu0 0
      %1116 = vmatprep.subr.bf16.mxu0 0
      %1117 = vmatpush1.bf16.msra.mxu0 0
      %1118 = vmatprep.subr.bf16.mxu0 0
      %1119 = vmatpush1.bf16.msra.mxu0 0
      %1120 = vmatprep.subr.bf16.mxu0 0
      %1121 = vmatpush1.bf16.msra.mxu0 0
      %1122 = vmatprep.subr.bf16.mxu0 0
      %1123 = vmatpush1.bf16.msra.mxu0 0
      %1124 = vmatprep.subr.bf16.mxu0 0
      %1125 = vmatpush1.bf16.msra.mxu0 0
      %1126 = vmatprep.subr.bf16.mxu0 0
      %1127 = vmatpush1.bf16.msra.mxu0 0
      %1128 = vmatprep.subr.bf16.mxu0 0
      %1129 = vmatpush1.bf16.msra.mxu0 0
      %1130 = vmatprep.subr.bf16.mxu0 0
      %1131 = vmatpush1.bf16.msra.mxu0 0
      %1132 = vmatprep.subr.bf16.mxu0 0
      %1133 = vmatpush1.bf16.msra.mxu0 0
      %1134 = vmatprep.subr.bf16.mxu0 0
      %1135 = vmatpush1.bf16.msra.mxu0 0
      %1136 = vmatprep.subr.bf16.mxu0 0
      %1137 = vmatpush1.bf16.msra.mxu0 0
      %1138 = vmatprep.subr.bf16.mxu0 0
      %1139 = vmatpush1.bf16.msra.mxu0 0
      %1140 = vmatprep.mubr.bf16.mxu0 0
      %1141 = vmatmul.mubr.bf16.gmra.mrb[0].mxu0 %v533
      %v1142 = vpop.f32.mrb[0].mxu0
      %v1143 = vadd.f32 0.0, %v1142
      %v1144 = vpop.f32.mrb[0].mxu0
      %v1145 = vadd.f32 0.0, %v1144
      %v1146 = vpop.f32.mrb[0].mxu0
      %v1147 = vadd.f32 0.0, %v1146
      %v1148 = vpop.f32.mrb[0].mxu0
      %v1149 = vadd.f32 0.0, %v1148
      %1150 = vdwg.mxu0
      %1151 = vmatprep.subr.bf16.mxu0 %v460
      %1152 = vmatpush1.bf16.msra.mxu0 %v459
      %1153 = vmatprep.subr.bf16.mxu0 %v615
      %1154 = vmatpush1.bf16.msra.mxu0 %v612
      %1155 = vmatprep.subr.bf16.mxu0 0
      %1156 = vmatpush1.bf16.msra.mxu0 0
      %1157 = vmatprep.subr.bf16.mxu0 0
      %1158 = vmatpush1.bf16.msra.mxu0 0
      %1159 = vmatprep.subr.bf16.mxu0 0
      %1160 = vmatpush1.bf16.msra.mxu0 0
      %1161 = vmatprep.subr.bf16.mxu0 0
      %1162 = vmatpush1.bf16.msra.mxu0 0
      %1163 = vmatprep.subr.bf16.mxu0 0
      %1164 = vmatpush1.bf16.msra.mxu0 0
      %1165 = vmatprep.subr.bf16.mxu0 0
      %1166 = vmatpush1.bf16.msra.mxu0 0
      %1167 = vmatprep.subr.bf16.mxu0 0
      %1168 = vmatpush1.bf16.msra.mxu0 0
      %1169 = vmatprep.subr.bf16.mxu0 0
      %1170 = vmatpush1.bf16.msra.mxu0 0
      %1171 = vmatprep.subr.bf16.mxu0 0
      %1172 = vmatpush1.bf16.msra.mxu0 0
      %1173 = vmatprep.subr.bf16.mxu0 0
      %1174 = vmatpush1.bf16.msra.mxu0 0
      %1175 = vmatprep.subr.bf16.mxu0 0
      %1176 = vmatpush1.bf16.msra.mxu0 0
      %1177 = vmatprep.subr.bf16.mxu0 0
      %1178 = vmatpush1.bf16.msra.mxu0 0
      %1179 = vmatprep.subr.bf16.mxu0 0
      %1180 = vmatpush1.bf16.msra.mxu0 0
      %1181 = vmatprep.subr.bf16.mxu0 0
      %1182 = vmatpush1.bf16.msra.mxu0 0
      %1183 = vmatprep.mubr.bf16.mxu0 0
      %1184 = vmatmul.mubr.bf16.gmra.mrb[0].mxu0 %v533
      %v1185 = vpop.f32.mrb[0].mxu0
      %v1186 = vadd.f32 0.0, %v1185
      %v1187 = vpop.f32.mrb[0].mxu0
      %v1188 = vadd.f32 0.0, %v1187
      %v1189 = vpop.f32.mrb[0].mxu0
      %v1190 = vadd.f32 0.0, %v1189
      %v1191 = vpop.f32.mrb[0].mxu0
      %v1192 = vadd.f32 0.0, %v1191
      %1193 = vdwg.mxu0
      %1194 = vmatprep.subr.bf16.mxu0 %v462
      %1195 = vmatpush1.bf16.msra.mxu0 %v461
      %1196 = vmatprep.subr.bf16.mxu0 %v621
      %1197 = vmatpush1.bf16.msra.mxu0 %v618
      %1198 = vmatprep.subr.bf16.mxu0 0
      %1199 = vmatpush1.bf16.msra.mxu0 0
      %1200 = vmatprep.subr.bf16.mxu0 0
      %1201 = vmatpush1.bf16.msra.mxu0 0
      %1202 = vmatprep.subr.bf16.mxu0 0
      %1203 = vmatpush1.bf16.msra.mxu0 0
      %1204 = vmatprep.subr.bf16.mxu0 0
      %1205 = vmatpush1.bf16.msra.mxu0 0
      %1206 = vmatprep.subr.bf16.mxu0 0
      %1207 = vmatpush1.bf16.msra.mxu0 0
      %1208 = vmatprep.subr.bf16.mxu0 0
      %1209 = vmatpush1.bf16.msra.mxu0 0
      %1210 = vmatprep.subr.bf16.mxu0 0
      %1211 = vmatpush1.bf16.msra.mxu0 0
      %1212 = vmatprep.subr.bf16.mxu0 0
      %1213 = vmatpush1.bf16.msra.mxu0 0
      %1214 = vmatprep.subr.bf16.mxu0 0
      %1215 = vmatpush1.bf16.msra.mxu0 0
      %1216 = vmatprep.subr.bf16.mxu0 0
      %1217 = vmatpush1.bf16.msra.mxu0 0
      %1218 = vmatprep.subr.bf16.mxu0 0
      %1219 = vmatpush1.bf16.msra.mxu0 0
      %1220 = vmatprep.subr.bf16.mxu0 0
      %1221 = vmatpush1.bf16.msra.mxu0 0
      %1222 = vmatprep.subr.bf16.mxu0 0
      %1223 = vmatpush1.bf16.msra.mxu0 0
      %1224 = vmatprep.subr.bf16.mxu0 0
      %1225 = vmatpush1.bf16.msra.mxu0 0
      %1226 = vmatprep.mubr.bf16.mxu0 0
      %1227 = vmatmul.mubr.bf16.gmra.mrb[0].mxu0 %v533
      %v1228 = vpop.f32.mrb[0].mxu0
      %v1229 = vadd.f32 0.0, %v1228
      %v1230 = vpop.f32.mrb[0].mxu0
      %v1231 = vadd.f32 0.0, %v1230
      %v1232 = vpop.f32.mrb[0].mxu0
      %v1233 = vadd.f32 0.0, %v1232
      %v1234 = vpop.f32.mrb[0].mxu0
      %v1235 = vadd.f32 0.0, %v1234
      %1236 = vdwg.mxu0
      %1237 = vmatprep.subr.bf16.mxu0 %v464
      %1238 = vmatpush1.bf16.msra.mxu0 %v463
      %1239 = vmatprep.subr.bf16.mxu0 %v627
      %1240 = vmatpush1.bf16.msra.mxu0 %v624
      %1241 = vmatprep.subr.bf16.mxu0 0
      %1242 = vmatpush1.bf16.msra.mxu0 0
      %1243 = vmatprep.subr.bf16.mxu0 0
      %1244 = vmatpush1.bf16.msra.mxu0 0
      %1245 = vmatprep.subr.bf16.mxu0 0
      %1246 = vmatpush1.bf16.msra.mxu0 0
      %1247 = vmatprep.subr.bf16.mxu0 0
      %1248 = vmatpush1.bf16.msra.mxu0 0
      %1249 = vmatprep.subr.bf16.mxu0 0
      %1250 = vmatpush1.bf16.msra.mxu0 0
      %1251 = vmatprep.subr.bf16.mxu0 0
      %1252 = vmatpush1.bf16.msra.mxu0 0
      %1253 = vmatprep.subr.bf16.mxu0 0
      %1254 = vmatpush1.bf16.msra.mxu0 0
      %1255 = vmatprep.subr.bf16.mxu0 0
      %1256 = vmatpush1.bf16.msra.mxu0 0
      %1257 = vmatprep.subr.bf16.mxu0 0
      %1258 = vmatpush1.bf16.msra.mxu0 0
      %1259 = vmatprep.subr.bf16.mxu0 0
      %1260 = vmatpush1.bf16.msra.mxu0 0
      %1261 = vmatprep.subr.bf16.mxu0 0
      %1262 = vmatpush1.bf16.msra.mxu0 0
      %1263 = vmatprep.subr.bf16.mxu0 0
      %1264 = vmatpush1.bf16.msra.mxu0 0
      %1265 = vmatprep.subr.bf16.mxu0 0
      %1266 = vmatpush1.bf16.msra.mxu0 0
      %1267 = vmatprep.subr.bf16.mxu0 0
      %1268 = vmatpush1.bf16.msra.mxu0 0
      %1269 = vmatprep.mubr.bf16.mxu0 0
      %1270 = vmatmul.mubr.bf16.gmra.mrb[0].mxu0 %v533
      %v1271 = vpop.f32.mrb[0].mxu0
      %v1272 = vadd.f32 0.0, %v1271
      %v1273 = vpop.f32.mrb[0].mxu0
      %v1274 = vadd.f32 0.0, %v1273
      %v1275 = vpop.f32.mrb[0].mxu0
      %v1276 = vadd.f32 0.0, %v1275
      %v1277 = vpop.f32.mrb[0].mxu0
      %v1278 = vadd.f32 0.0, %v1277
      %1279 = vdwg.mxu0
      %1280 = vmatprep.subr.bf16.mxu0 %v466
      %1281 = vmatpush1.bf16.msra.mxu0 %v465
      %1282 = vmatprep.subr.bf16.mxu0 %v633
      %1283 = vmatpush1.bf16.msra.mxu0 %v630
      %1284 = vmatprep.subr.bf16.mxu0 0
      %1285 = vmatpush1.bf16.msra.mxu0 0
      %1286 = vmatprep.subr.bf16.mxu0 0
      %1287 = vmatpush1.bf16.msra.mxu0 0
      %1288 = vmatprep.subr.bf16.mxu0 0
      %1289 = vmatpush1.bf16.msra.mxu0 0
      %1290 = vmatprep.subr.bf16.mxu0 0
      %1291 = vmatpush1.bf16.msra.mxu0 0
      %1292 = vmatprep.subr.bf16.mxu0 0
      %1293 = vmatpush1.bf16.msra.mxu0 0
      %1294 = vmatprep.subr.bf16.mxu0 0
      %1295 = vmatpush1.bf16.msra.mxu0 0
      %1296 = vmatprep.subr.bf16.mxu0 0
      %1297 = vmatpush1.bf16.msra.mxu0 0
      %1298 = vmatprep.subr.bf16.mxu0 0
      %1299 = vmatpush1.bf16.msra.mxu0 0
      %1300 = vmatprep.subr.bf16.mxu0 0
      %1301 = vmatpush1.bf16.msra.mxu0 0
      %1302 = vmatprep.subr.bf16.mxu0 0
      %1303 = vmatpush1.bf16.msra.mxu0 0
      %1304 = vmatprep.subr.bf16.mxu0 0
      %1305 = vmatpush1.bf16.msra.mxu0 0
      %1306 = vmatprep.subr.bf16.mxu0 0
      %1307 = vmatpush1.bf16.msra.mxu0 0
      %1308 = vmatprep.subr.bf16.mxu0 0
      %1309 = vmatpush1.bf16.msra.mxu0 0
      %1310 = vmatprep.subr.bf16.mxu0 0
      %1311 = vmatpush1.bf16.msra.mxu0 0
      %1312 = vmatprep.mubr.bf16.mxu0 0
      %1313 = vmatmul.mubr.bf16.gmra.mrb[0].mxu0 %v533
      %v1314 = vpop.f32.mrb[0].mxu0
      %v1315 = vadd.f32 0.0, %v1314
      %v1316 = vpop.f32.mrb[0].mxu0
      %v1317 = vadd.f32 0.0, %v1316
      %v1318 = vpop.f32.mrb[0].mxu0
      %v1319 = vadd.f32 0.0, %v1318
      %v1320 = vpop.f32.mrb[0].mxu0
      %v1321 = vadd.f32 0.0, %v1320
      %1322 = vdwg.mxu0
      %v1323 = vmax.f32 %v670, %v842
      %v1324 = vmax.f32 %v672, %v844
      %v1325 = vmax.f32 %v713, %v885
      %v1326 = vmax.f32 %v715, %v887
      %v1327 = vmax.f32 %v756, %v928
      %v1328 = vmax.f32 %v758, %v930
      %v1329 = vmax.f32 %v799, %v971
      %v1330 = vmax.f32 %v801, %v973
      %v1331 = vmax.f32 %v674, %v846
      %v1332 = vmax.f32 %v676, %v848
      %v1333 = vmax.f32 %v717, %v889
      %v1334 = vmax.f32 %v719, %v891
      %v1335 = vmax.f32 %v760, %v932
      %v1336 = vmax.f32 %v762, %v934
      %v1337 = vmax.f32 %v803, %v975
      %v1338 = vmax.f32 %v805, %v977
      %v1339 = vmax.f32 %v1014, %v1186
      %v1340 = vmax.f32 %v1016, %v1188
      %v1341 = vmax.f32 %v1057, %v1229
      %v1342 = vmax.f32 %v1059, %v1231
      %v1343 = vmax.f32 %v1100, %v1272
      %v1344 = vmax.f32 %v1102, %v1274
      %v1345 = vmax.f32 %v1143, %v1315
      %v1346 = vmax.f32 %v1145, %v1317
      %v1347 = vmax.f32 %v1018, %v1190
      %v1348 = vmax.f32 %v1020, %v1192
      %v1349 = vmax.f32 %v1061, %v1233
      %v1350 = vmax.f32 %v1063, %v1235
      %v1351 = vmax.f32 %v1104, %v1276
      %v1352 = vmax.f32 %v1106, %v1278
      %v1353 = vmax.f32 %v1147, %v1319
      %v1354 = vmax.f32 %v1149, %v1321
      %v1355 = vmax.f32 %v1323, %v1339
      %v1356 = vmax.f32 %v1324, %v1340
      %v1357 = vmax.f32 %v1325, %v1341
      %v1358 = vmax.f32 %v1326, %v1342
      %v1359 = vmax.f32 %v1327, %v1343
      %v1360 = vmax.f32 %v1328, %v1344
      %v1361 = vmax.f32 %v1329, %v1345
      %v1362 = vmax.f32 %v1330, %v1346
      %v1363 = vmax.f32 %v1331, %v1347
      %v1364 = vmax.f32 %v1332, %v1348
      %v1365 = vmax.f32 %v1333, %v1349
      %v1366 = vmax.f32 %v1334, %v1350
      %v1367 = vmax.f32 %v1335, %v1351
      %v1368 = vmax.f32 %v1336, %v1352
      %v1369 = vmax.f32 %v1337, %v1353
      %v1370 = vmax.f32 %v1338, %v1354
      %v1371 = vld [vmem:[%s2] sm:$0xff]
      %v1372 = vld [vmem:[%s2 + $0x8] sm:$0xff]
      %1374 = vset.pattern.permute.xlu0 0
      %1375 = vperm.xlu0 %1374, %v1371
      %v1376 = vpop.permute.xlu0 %1375
      %1379 = vset.pattern.permute.xlu0 0
      %1380 = vperm.xlu0 %1379, %v1372
      %v1381 = vpop.permute.xlu0 %1380
      %v1383 = vadd.f32 %v1355, %v1376
      %v1384 = vadd.f32 %v1356, %v1376
      %v1385 = vadd.f32 %v1357, %v1376
      %v1386 = vadd.f32 %v1358, %v1376
      %v1387 = vadd.f32 %v1359, %v1376
      %v1388 = vadd.f32 %v1360, %v1376
      %v1389 = vadd.f32 %v1361, %v1376
      %v1390 = vadd.f32 %v1362, %v1376
      %v1391 = vadd.f32 %v1363, %v1381
      %v1392 = vadd.f32 %v1364, %v1381
      %v1393 = vadd.f32 %v1365, %v1381
      %v1394 = vadd.f32 %v1366, %v1381
      %v1395 = vadd.f32 %v1367, %v1381
      %v1396 = vadd.f32 %v1368, %v1381
      %v1397 = vadd.f32 %v1369, %v1381
      %v1398 = vadd.f32 %v1370, %v1381
      %v1399 = vmax.f32 %v1383, 0.0
      %v1400 = vmax.f32 %v1384, 0.0
      %v1401 = vmax.f32 %v1385, 0.0
      %v1402 = vmax.f32 %v1386, 0.0
      %v1403 = vmax.f32 %v1387, 0.0
      %v1404 = vmax.f32 %v1388, 0.0
      %v1405 = vmax.f32 %v1389, 0.0
      %v1406 = vmax.f32 %v1390, 0.0
      %v1407 = vmax.f32 %v1391, 0.0
      %v1408 = vmax.f32 %v1392, 0.0
      %v1409 = vmax.f32 %v1393, 0.0
      %v1410 = vmax.f32 %v1394, 0.0
      %v1411 = vmax.f32 %v1395, 0.0
      %v1412 = vmax.f32 %v1396, 0.0
      %v1413 = vmax.f32 %v1397, 0.0
      %v1414 = vmax.f32 %v1398, 0.0
      %v1415 = vpack.c.bf16 %v1407, %v1399
      %v1416 = vpack.c.bf16 %v1408, %v1400
      %v1417 = vpack.c.bf16 %v1409, %v1401
      %v1418 = vpack.c.bf16 %v1410, %v1402
      %v1419 = vpack.c.bf16 %v1411, %v1403
      %v1420 = vpack.c.bf16 %v1412, %v1404
      %v1421 = vpack.c.bf16 %v1413, %v1405
      %v1422 = vpack.c.bf16 %v1414, %v1406
      %v1431 = vunpack.c.l.b16 %v1415
      %v1432 = vunpack.c.l.b16 %v1416
      %v1433 = vunpack.c.l.b16 %v1417
      %v1434 = vunpack.c.l.b16 %v1418
      %v1435 = vunpack.c.l.b16 %v1419
      %v1436 = vunpack.c.l.b16 %v1420
      %v1437 = vunpack.c.l.b16 %v1421
      %v1438 = vunpack.c.l.b16 %v1422
      %v1439 = vunpack.c.h.b16 %v1415
      %v1440 = vunpack.c.h.b16 %v1416
      %v1441 = vunpack.c.h.b16 %v1417
      %v1442 = vunpack.c.h.b16 %v1418
      %v1443 = vunpack.c.h.b16 %v1419
      %v1444 = vunpack.c.h.b16 %v1420
      %v1445 = vunpack.c.h.b16 %v1421
      %v1446 = vunpack.c.h.b16 %v1422
      %v1447 = vpack.c.b16 %v1432, %v1431
      %v1448 = vpack.c.b16 %v1434, %v1433
      %v1449 = vpack.c.b16 %v1436, %v1435
      %v1450 = vpack.c.b16 %v1438, %v1437
      %v1451 = vpack.c.b16 %v1440, %v1439
      %v1452 = vpack.c.b16 %v1442, %v1441
      %v1453 = vpack.c.b16 %v1444, %v1443
      %v1454 = vpack.c.b16 %v1446, %v1445
      %1463 = vst [vmem:[%s170] sm:$0xff] %v1447
      %1464 = vst [vmem:[%s170 + $0x8] sm:$0xff] %v1448
      %1465 = vst [vmem:[%s170 + $0x10] sm:$0xff] %v1449
      %1466 = vst [vmem:[%s170 + $0x18] sm:$0xff] %v1450
      %1467 = vst [vmem:[%s170 + $0x20] sm:$0xff] %v1451
      %1468 = vst [vmem:[%s170 + $0x28] sm:$0xff] %v1452
      %1469 = vst [vmem:[%s170 + $0x30] sm:$0xff] %v1453
      %1470 = vst [vmem:[%s170 + $0x38] sm:$0xff] %v1454
      %p1471 = scmp.lt.s32.totalorder %s14, 1
      %s1472 = scalar_select %p1471, %s14, 1
      %s1473 = smul.addr %s1472, 16
      %s1474 = smul.addr %s1473, 4
      %s1475 = scalar_lea.vmem %s3, %s1474
      // Predicated region
      $region33: #{mon_cnn_forward.3} parent=31 // pred_check
        %p1476 = pneg %p100
      $region34: #{mon_cnn_forward.3} parent=31 // pred_check_branch
        %1478 = sbr.rel (%p1476) target = $region36
      $region35: #{mon_cnn_forward.3} parent=31 // pred_region
        _
      $region36: #{mon_cnn_forward.3} parent=31 // pred_fallthru
        _
    $region32: #{mon_cnn_forward.3} parent=5 // pred_fallthru
      _
    %p1479 = scmp.le.s32.totalorder 2, %s9
    // Predicated region
    $region37: #{mon_cnn_forward.3} parent=5 // pred_check
      %p1480 = pneg %p1479
    $region38: #{mon_cnn_forward.3} parent=5 // pred_check_branch
      %1482 = sbr.rel (%p1480) target = $region40
    $region39: #{mon_cnn_forward.3} parent=5 // pred_region
      %s1483 = ssub.s32 %s9, 2
      // Predicated region
      $region41: #{mon_cnn_forward.3} parent=39 // pred_check
        %p1484 = pneg %p106
      $region42: #{mon_cnn_forward.3} parent=39 // pred_check_branch
        %1486 = sbr.rel (%p1484) target = $region44
      $region43: #{mon_cnn_forward.3} parent=39 // pred_region
        %p1487 = scmp.lt.s32.totalorder %s15, 1
        %s1488 = scalar_select %p1487, %s15, 1
        %s1489 = smul.addr %s1488, 16
        %s1490 = smul.addr %s1489, 4
        %s1491 = scalar_lea.vmem %s3, %s1490
      $region44: #{mon_cnn_forward.3} parent=39 // pred_fallthru
        _
    $region40: #{mon_cnn_forward.3} parent=5 // pred_fallthru
      _
  $region6: #{mon_cnn_forward.3} parent=0 // loop_footer
    %s13 = sadd.s32 1, %s9
  $region7: #{mon_cnn_forward.3} parent=0 // loop_footer_branch
    %8 = sbr.rel target = $region3
  $region8: #{mon_cnn_forward.3} parent=0 // loop_exit
    _

// kernel: mon_cnn_forward.4
$region0: #{mon_cnn_forward.4}
  #allocation0 [shape = 'u32[]', space=smem, size = 0x4, offset = 0x4, fixed_abs, tag = 'smem constant byte address 0x4 - core index']
  #allocation1 [shape = 'u32[144,128]{1,0:T(1,128)}', space=vmem, size = 0x12000, scoped, tag = 'internal scratch']
  %s0 = inlined_call_operand.vmem [shape: bf16[2,144,1024], index: 0, kind: input, shape index: {}]
  %s1 = inlined_call_operand.vmem [shape: bf16[32,144], index: 1, kind: input, shape index: {}]
  %s2 = inlined_call_operand.vmem [shape: f32[32,1], index: 2, kind: input, shape index: {}]
  %s3 = inlined_call_operand.vmem [shape: bf16[2,32,256], index: 3, kind: output, shape index: {}]
  %s4 = sld [smem:[#allocation0]]
  $region45: #{mon_cnn_forward.4} parent=0
    _
  %s6 = ssub.s32 1, %s4
  %s7 = scalar_select 0, %s6, %s4
  loop: start=0, step=1, limit=4
  $region2: #{mon_cnn_forward.4} parent=0 // loop_pre_header
    _
  $region3: #{mon_cnn_forward.4} parent=0 // loop_header
    %s9 = sphi 0, %s13
    %p10 = scmp.ge.s32.totalorder %s9, 4
    %s19 = sphi 0, %s21
    %s22 = sphi 0, %s19
    %s23 = sphi 0, %s22
    %s39 = sphi 0, %s23
    %s43 = sphi 0, %s43
    %s45 = sphi 0, %s43
    %s46 = sphi 0, %s45
    %s60 = sphi 0, %s46
    %s64 = sphi 0, %s64
    %s66 = sphi 0, %s64
    %s67 = sphi 0, %s66
    %s81 = sphi 0, %s67
    %s87 = sphi 0, %s89
    %s90 = sphi 0, %s87
    %s91 = sphi 0, %s90
    %s107 = sphi 0, %s91
  $region4: #{mon_cnn_forward.4} parent=0 // loop_header_branch
    %12 = sbr.rel (%p10) target = $region8
  $region5: #{mon_cnn_forward.4} parent=0 // loop_body
    %s14 = ssub.s32 %s9, 1
    %s15 = ssub.s32 %s9, 2
    %s16 = sadd.s32 %s9, 1
    %s17 = ssub.s32 %s9, %s16
    %p18 = scmp.eq.s32.totalorder %s17, 0
    %s20 = sadd.s32 %s19, 1
    %s21 = scalar_select %p18, %s19, %s20
    %p24 = pneg %p18
    %p25 = scmp.eq.s32.totalorder %s9, 1
    %p26 = por %p24, %p25
    %p27 = scmp.ne.s32.totalorder %s19, %s22
    %p28 = scmp.eq.s32.totalorder %s9, 0
    %p29 = por %p27, %p28
    %p30 = scmp.ne.s32.totalorder %s19, %s22
    %p31 = scmp.eq.s32.totalorder %s14, 1
    %p32 = por %p30, %p31
    %p33 = scmp.ne.s32.totalorder %s22, %s23
    %p34 = scmp.eq.s32.totalorder %s14, 0
    %p35 = por %p33, %p34
    %p36 = scmp.ne.s32.totalorder %s22, %s23
    %p37 = scmp.eq.s32.totalorder %s15, 1
    %p38 = por %p36, %p37
    %p40 = scmp.ne.s32.totalorder %s23, %s39
    %p41 = scmp.eq.s32.totalorder %s15, 0
    %p42 = por %p40, %p41
    %s44 = sadd.s32 %s43, 1
    %p47 = scmp.eq.s32.totalorder %s9, 1
    %p48 = scmp.ne.s32.totalorder %s43, %s45
    %p49 = scmp.eq.s32.totalorder %s9, 0
    %p50 = por %p48, %p49
    %p51 = scmp.ne.s32.totalorder %s43, %s45
    %p52 = scmp.eq.s32.totalorder %s14, 1
    %p53 = por %p51, %p52
    %p54 = scmp.ne.s32.totalorder %s45, %s46
    %p55 = scmp.eq.s32.totalorder %s14, 0
    %p56 = por %p54, %p55
    %p57 = scmp.ne.s32.totalorder %s45, %s46
    %p58 = scmp.eq.s32.totalorder %s15, 1
    %p59 = por %p57, %p58
    %p61 = scmp.ne.s32.totalorder %s46, %s60
    %p62 = scmp.eq.s32.totalorder %s15, 0
    %p63 = por %p61, %p62
    %s65 = sadd.s32 %s64, 1
    %p68 = scmp.eq.s32.totalorder %s9, 1
    %p69 = scmp.ne.s32.totalorder %s64, %s66
    %p70 = scmp.eq.s32.totalorder %s9, 0
    %p71 = por %p69, %p70
    %p72 = scmp.ne.s32.totalorder %s64, %s66
    %p73 = scmp.eq.s32.totalorder %s14, 1
    %p74 = por %p72, %p73
    %p75 = scmp.ne.s32.totalorder %s66, %s67
    %p76 = scmp.eq.s32.totalorder %s14, 0
    %p77 = por %p75, %p76
    %p78 = scmp.ne.s32.totalorder %s66, %s67
    %p79 = scmp.eq.s32.totalorder %s15, 1
    %p80 = por %p78, %p79
    %p82 = scmp.ne.s32.totalorder %s67, %s81
    %p83 = scmp.eq.s32.totalorder %s15, 0
    %p84 = por %p82, %p83
    %s85 = ssub.s32 %s9, %s16
    %p86 = scmp.eq.s32.totalorder %s85, 0
    %s88 = sadd.s32 %s87, 1
    %s89 = scalar_select %p86, %s87, %s88
    %p92 = pneg %p86
    %p93 = scmp.eq.s32.totalorder %s9, 1
    %p94 = por %p92, %p93
    %p95 = scmp.ne.s32.totalorder %s87, %s90
    %p96 = scmp.eq.s32.totalorder %s9, 0
    %p97 = por %p95, %p96
    %p98 = scmp.ne.s32.totalorder %s87, %s90
    %p99 = scmp.eq.s32.totalorder %s14, 1
    %p100 = por %p98, %p99
    %p101 = scmp.ne.s32.totalorder %s90, %s91
    %p102 = scmp.eq.s32.totalorder %s14, 0
    %p103 = por %p101, %p102
    %p104 = scmp.ne.s32.totalorder %s90, %s91
    %p105 = scmp.eq.s32.totalorder %s15, 1
    %p106 = por %p104, %p105
    %p108 = scmp.ne.s32.totalorder %s91, %s107
    %p109 = scmp.eq.s32.totalorder %s15, 0
    %p110 = por %p108, %p109
    %p111 = scmp.le.s32.totalorder 1, %s9
    %p112 = scmp.lt.s32.totalorder %s9, 3
    %p113 = pnand %p111, %p112
    %p114 = pneg %p113
    // Predicated region
    $region9: #{mon_cnn_forward.4} parent=5 // pred_check
      _
    $region10: #{mon_cnn_forward.4} parent=5 // pred_check_branch
      %116 = sbr.rel (%p113) target = $region12
    $region11: #{mon_cnn_forward.4} parent=5 // pred_region
      %s117 = ssub.s32 %s9, 1
      // Predicated region
      $region13: #{mon_cnn_forward.4} parent=11 // pred_check
        %p118 = pneg %p56
      $region14: #{mon_cnn_forward.4} parent=11 // pred_check_branch
        %120 = sbr.rel (%p118) target = $region16
      $region15: #{mon_cnn_forward.4} parent=11 // pred_region
        _
      $region16: #{mon_cnn_forward.4} parent=11 // pred_fallthru
        _
      // Predicated region
      $region17: #{mon_cnn_forward.4} parent=11 // pred_check
        %p121 = pneg %p77
      $region18: #{mon_cnn_forward.4} parent=11 // pred_check_branch
        %123 = sbr.rel (%p121) target = $region20
      $region19: #{mon_cnn_forward.4} parent=11 // pred_region
        _
      $region20: #{mon_cnn_forward.4} parent=11 // pred_fallthru
        _
    $region12: #{mon_cnn_forward.4} parent=5 // pred_fallthru
      _
    %p124 = scmp.lt.s32.totalorder %s9, 2
    // Predicated region
    $region21: #{mon_cnn_forward.4} parent=5 // pred_check
      %p125 = pneg %p124
    $region22: #{mon_cnn_forward.4} parent=5 // pred_check_branch
      %127 = sbr.rel (%p125) target = $region24
    $region23: #{mon_cnn_forward.4} parent=5 // pred_region
      // Predicated region
      $region25: #{mon_cnn_forward.4} parent=23 // pred_check
        %p128 = pneg %p29
      $region26: #{mon_cnn_forward.4} parent=23 // pred_check_branch
        %130 = sbr.rel (%p128) target = $region28
      $region27: #{mon_cnn_forward.4} parent=23 // pred_region
        %p131 = scmp.lt.s32.totalorder %s9, 1
        %s132 = scalar_select %p131, %s9, 1
        %s133 = smul.addr %s132, 144
        %s134 = smul.addr %s133, 4
        %s135 = scalar_lea.vmem %s0, %s134
      $region28: #{mon_cnn_forward.4} parent=23 // pred_fallthru
        _
    $region24: #{mon_cnn_forward.4} parent=5 // pred_fallthru
      _
    %p136 = scmp.le.s32.totalorder 1, %s9
    %p137 = scmp.lt.s32.totalorder %s9, 3
    %p138 = pnand %p136, %p137
    %p139 = pneg %p138
    // Predicated region
    $region29: #{mon_cnn_forward.4} parent=5 // pred_check
      _
    $region30: #{mon_cnn_forward.4} parent=5 // pred_check_branch
      %141 = sbr.rel (%p138) target = $region32
    $region31: #{mon_cnn_forward.4} parent=5 // pred_region
      %s142 = ssub.s32 %s9, 1
      %p143 = scmp.lt.s32.totalorder %s14, 1
      %s144 = scalar_select %p143, %s14, 1
      %s145 = smul.addr %s144, 144
      %s146 = smul.addr %s145, 4
      %s147 = scalar_lea.vmem %s0, %s146
      %p148 = pneg %p35
      %p149 = pneg %p32
      %p150 = pneg %p56
      %p151 = pneg %p53
      %p152 = pneg %p77
      %p153 = pneg %p74
      %p154 = pneg %p103
      %p155 = pneg %p100
      %p156 = scmp.lt.s32.totalorder %s14, 1
      %s157 = scalar_select %p156, %s14, 1
      %s158 = smul.addr %s157, 8
      %s159 = smul.addr %s158, 4
      %s160 = scalar_lea.vmem %s3, %s159
      %p161 = scmp.lt.s32.totalorder %s14, 1
      %s162 = scalar_select %p161, %s14, 1
      %s163 = smul.addr %s162, 144
      %s164 = smul.addr %s163, 4
      %s165 = scalar_lea.vmem %s0, %s164
      %p166 = scmp.lt.s32.totalorder %s14, 1
      %s167 = scalar_select %p166, %s14, 1
      %s168 = smul.addr %s167, 8
      %s169 = smul.addr %s168, 4
      %s170 = scalar_lea.vmem %s3, %s169
      %v172 = vld [vmem:[%s1] sm:$0xff]
      %v173 = vld [vmem:[%s1 + $0x8] sm:$0xff]
      %v174 = vld [vmem:[%s1 + $0x10] sm:$0xff]
      %v175 = vld [vmem:[%s1 + $0x18] sm:$0xff]
      %v176 = vld [vmem:[%s165] sm:$0xff]
      %v177 = vld [vmem:[%s165 + $0x8] sm:$0xff]
      %v178 = vld [vmem:[%s165 + $0x10] sm:$0xff]
      %v179 = vld [vmem:[%s165 + $0x18] sm:$0xff]
      %v180 = vld [vmem:[%s165 + $0x20] sm:$0xff]
      %v181 = vld [vmem:[%s165 + $0x28] sm:$0xff]
      %v182 = vld [vmem:[%s165 + $0x30] sm:$0xff]
      %v183 = vld [vmem:[%s165 + $0x38] sm:$0xff]
      %v184 = vld [vmem:[%s165 + $0x40] sm:$0xff]
      %v185 = vld [vmem:[%s165 + $0x48] sm:$0xff]
      %v186 = vld [vmem:[%s165 + $0x50] sm:$0xff]
      %v187 = vld [vmem:[%s165 + $0x58] sm:$0xff]
      %v188 = vld [vmem:[%s165 + $0x60] sm:$0xff]
      %v189 = vld [vmem:[%s165 + $0x68] sm:$0xff]
      %v190 = vld [vmem:[%s165 + $0x70] sm:$0xff]
      %v191 = vld [vmem:[%s165 + $0x78] sm:$0xff]
      %v192 = vld [vmem:[%s165 + $0x80] sm:$0xff]
      %v193 = vld [vmem:[%s165 + $0x88] sm:$0xff]
      %v194 = vld [vmem:[%s165 + $0x90] sm:$0xff]
      %v195 = vld [vmem:[%s165 + $0x98] sm:$0xff]
      %v196 = vld [vmem:[%s165 + $0xa0] sm:$0xff]
      %v197 = vld [vmem:[%s165 + $0xa8] sm:$0xff]
      %v198 = vld [vmem:[%s165 + $0xb0] sm:$0xff]
      %v199 = vld [vmem:[%s165 + $0xb8] sm:$0xff]
      %v200 = vld [vmem:[%s165 + $0xc0] sm:$0xff]
      %v201 = vld [vmem:[%s165 + $0xc8] sm:$0xff]
      %v202 = vld [vmem:[%s165 + $0xd0] sm:$0xff]
      %v203 = vld [vmem:[%s165 + $0xd8] sm:$0xff]
      %v204 = vld [vmem:[%s165 + $0xe0] sm:$0xff]
      %v205 = vld [vmem:[%s165 + $0xe8] sm:$0xff]
      %v206 = vld [vmem:[%s165 + $0xf0] sm:$0xff]
      %v207 = vld [vmem:[%s165 + $0xf8] sm:$0xff]
      %v208 = vld [vmem:[%s165 + $0x100] sm:$0xff]
      %v209 = vld [vmem:[%s165 + $0x108] sm:$0xff]
      %v210 = vld [vmem:[%s165 + $0x110] sm:$0xff]
      %v211 = vld [vmem:[%s165 + $0x118] sm:$0xff]
      %v212 = vld [vmem:[%s165 + $0x120] sm:$0xff]
      %v213 = vld [vmem:[%s165 + $0x128] sm:$0xff]
      %v214 = vld [vmem:[%s165 + $0x130] sm:$0xff]
      %v215 = vld [vmem:[%s165 + $0x138] sm:$0xff]
      %v216 = vld [vmem:[%s165 + $0x140] sm:$0xff]
      %v217 = vld [vmem:[%s165 + $0x148] sm:$0xff]
      %v218 = vld [vmem:[%s165 + $0x150] sm:$0xff]
      %v219 = vld [vmem:[%s165 + $0x158] sm:$0xff]
      %v220 = vld [vmem:[%s165 + $0x160] sm:$0xff]
      %v221 = vld [vmem:[%s165 + $0x168] sm:$0xff]
      %v222 = vld [vmem:[%s165 + $0x170] sm:$0xff]
      %v223 = vld [vmem:[%s165 + $0x178] sm:$0xff]
      %v224 = vld [vmem:[%s165 + $0x180] sm:$0xff]
      %v225 = vld [vmem:[%s165 + $0x188] sm:$0xff]
      %v226 = vld [vmem:[%s165 + $0x190] sm:$0xff]
      %v227 = vld [vmem:[%s165 + $0x198] sm:$0xff]
      %v228 = vld [vmem:[%s165 + $0x1a0] sm:$0xff]
      %v229 = vld [vmem:[%s165 + $0x1a8] sm:$0xff]
      %v230 = vld [vmem:[%s165 + $0x1b0] sm:$0xff]
      %v231 = vld [vmem:[%s165 + $0x1b8] sm:$0xff]
      %v232 = vld [vmem:[%s165 + $0x1c0] sm:$0xff]
      %v233 = vld [vmem:[%s165 + $0x1c8] sm:$0xff]
      %v234 = vld [vmem:[%s165 + $0x1d0] sm:$0xff]
      %v235 = vld [vmem:[%s165 + $0x1d8] sm:$0xff]
      %v236 = vld [vmem:[%s165 + $0x1e0] sm:$0xff]
      %v237 = vld [vmem:[%s165 + $0x1e8] sm:$0xff]
      %v238 = vld [vmem:[%s165 + $0x1f0] sm:$0xff]
      %v239 = vld [vmem:[%s165 + $0x1f8] sm:$0xff]
      %v240 = vld [vmem:[%s165 + $0x200] sm:$0xff]
      %v241 = vld [vmem:[%s165 + $0x208] sm:$0xff]
      %v242 = vld [vmem:[%s165 + $0x210] sm:$0xff]
      %v243 = vld [vmem:[%s165 + $0x218] sm:$0xff]
      %v244 = vld [vmem:[%s165 + $0x220] sm:$0xff]
      %v245 = vld [vmem:[%s165 + $0x228] sm:$0xff]
      %v246 = vld [vmem:[%s165 + $0x230] sm:$0xff]
      %v247 = vld [vmem:[%s165 + $0x238] sm:$0xff]
      %v252 = vunpack.c.l.b16 %v172
      %v253 = vunpack.c.h.b16 %v172
      %v254 = vunpack.c.l.b16 %v173
      %v255 = vunpack.c.h.b16 %v173
      %v256 = vunpack.c.l.b16 %v174
      %v257 = vunpack.c.h.b16 %v174
      %v258 = vunpack.c.l.b16 %v175
      %v259 = vunpack.c.h.b16 %v175
      %v260 = vpack.c.b16 %v254, %v252
      %v261 = vpack.c.b16 %v255, %v253
      %v262 = vpack.c.b16 %v258, %v256
      %v263 = vpack.c.b16 %v259, %v257
      %v338 = vunpack.c.l.b16 %v176
      %v339 = vunpack.c.h.b16 %v176
      %v340 = vunpack.c.l.b16 %v177
      %v341 = vunpack.c.h.b16 %v177
      %v342 = vunpack.c.l.b16 %v178
      %v343 = vunpack.c.h.b16 %v178
      %v344 = vunpack.c.l.b16 %v179
      %v345 = vunpack.c.h.b16 %v179
      %v346 = vunpack.c.l.b16 %v180
      %v347 = vunpack.c.h.b16 %v180
      %v348 = vunpack.c.l.b16 %v181
      %v349 = vunpack.c.h.b16 %v181
      %v350 = vunpack.c.l.b16 %v182
      %v351 = vunpack.c.h.b16 %v182
      %v352 = vunpack.c.l.b16 %v183
      %v353 = vunpack.c.h.b16 %v183
      %v354 = vunpack.c.l.b16 %v184
      %v355 = vunpack.c.h.b16 %v184
      %v356 = vunpack.c.l.b16 %v185
      %v357 = vunpack.c.h.b16 %v185
      %v358 = vunpack.c.l.b16 %v186
      %v359 = vunpack.c.h.b16 %v186
      %v360 = vunpack.c.l.b16 %v187
      %v361 = vunpack.c.h.b16 %v187
      %v362 = vunpack.c.l.b16 %v188
      %v363 = vunpack.c.h.b16 %v188
      %v364 = vunpack.c.l.b16 %v189
      %v365 = vunpack.c.h.b16 %v189
      %v366 = vunpack.c.l.b16 %v190
      %v367 = vunpack.c.h.b16 %v190
      %v368 = vunpack.c.l.b16 %v191
      %v369 = vunpack.c.h.b16 %v191
      %v370 = vunpack.c.l.b16 %v192
      %v371 = vunpack.c.h.b16 %v192
      %v372 = vunpack.c.l.b16 %v193
      %v373 = vunpack.c.h.b16 %v193
      %v374 = vunpack.c.l.b16 %v194
      %v375 = vunpack.c.h.b16 %v194
      %v376 = vunpack.c.l.b16 %v195
      %v377 = vunpack.c.h.b16 %v195
      %v378 = vunpack.c.l.b16 %v196
      %v379 = vunpack.c.h.b16 %v196
      %v380 = vunpack.c.l.b16 %v197
      %v381 = vunpack.c.h.b16 %v197
      %v382 = vunpack.c.l.b16 %v198
      %v383 = vunpack.c.h.b16 %v198
      %v384 = vunpack.c.l.b16 %v199
      %v385 = vunpack.c.h.b16 %v199
      %v386 = vunpack.c.l.b16 %v200
      %v387 = vunpack.c.h.b16 %v200
      %v388 = vunpack.c.l.b16 %v201
      %v389 = vunpack.c.h.b16 %v201
      %v390 = vunpack.c.l.b16 %v202
      %v391 = vunpack.c.h.b16 %v202
      %v392 = vunpack.c.l.b16 %v203
      %v393 = vunpack.c.h.b16 %v203
      %v394 = vunpack.c.l.b16 %v204
      %v395 = vunpack.c.h.b16 %v204
      %v396 = vunpack.c.l.b16 %v205
      %v397 = vunpack.c.h.b16 %v205
      %v398 = vunpack.c.l.b16 %v206
      %v399 = vunpack.c.h.b16 %v206
      %v400 = vunpack.c.l.b16 %v207
      %v401 = vunpack.c.h.b16 %v207
      %v402 = vunpack.c.l.b16 %v208
      %v403 = vunpack.c.h.b16 %v208
      %v404 = vunpack.c.l.b16 %v209
      %v405 = vunpack.c.h.b16 %v209
      %v406 = vunpack.c.l.b16 %v210
      %v407 = vunpack.c.h.b16 %v210
      %v408 = vunpack.c.l.b16 %v211
      %v409 = vunpack.c.h.b16 %v211
      %v410 = vunpack.c.l.b16 %v212
      %v411 = vunpack.c.h.b16 %v212
      %v412 = vunpack.c.l.b16 %v213
      %v413 = vunpack.c.h.b16 %v213
      %v414 = vunpack.c.l.b16 %v214
      %v415 = vunpack.c.h.b16 %v214
      %v416 = vunpack.c.l.b16 %v215
      %v417 = vunpack.c.h.b16 %v215
      %v418 = vunpack.c.l.b16 %v216
      %v419 = vunpack.c.h.b16 %v216
      %v420 = vunpack.c.l.b16 %v217
      %v421 = vunpack.c.h.b16 %v217
      %v422 = vunpack.c.l.b16 %v218
      %v423 = vunpack.c.h.b16 %v218
      %v424 = vunpack.c.l.b16 %v219
      %v425 = vunpack.c.h.b16 %v219
      %v426 = vunpack.c.l.b16 %v220
      %v427 = vunpack.c.h.b16 %v220
      %v428 = vunpack.c.l.b16 %v221
      %v429 = vunpack.c.h.b16 %v221
      %v430 = vunpack.c.l.b16 %v222
      %v431 = vunpack.c.h.b16 %v222
      %v432 = vunpack.c.l.b16 %v223
      %v433 = vunpack.c.h.b16 %v223
      %v434 = vunpack.c.l.b16 %v224
      %v435 = vunpack.c.h.b16 %v224
      %v436 = vunpack.c.l.b16 %v225
      %v437 = vunpack.c.h.b16 %v225
      %v438 = vunpack.c.l.b16 %v226
      %v439 = vunpack.c.h.b16 %v226
      %v440 = vunpack.c.l.b16 %v227
      %v441 = vunpack.c.h.b16 %v227
      %v442 = vunpack.c.l.b16 %v228
      %v443 = vunpack.c.h.b16 %v228
      %v444 = vunpack.c.l.b16 %v229
      %v445 = vunpack.c.h.b16 %v229
      %v446 = vunpack.c.l.b16 %v230
      %v447 = vunpack.c.h.b16 %v230
      %v448 = vunpack.c.l.b16 %v231
      %v449 = vunpack.c.h.b16 %v231
      %v450 = vunpack.c.l.b16 %v232
      %v451 = vunpack.c.h.b16 %v232
      %v452 = vunpack.c.l.b16 %v233
      %v453 = vunpack.c.h.b16 %v233
      %v454 = vunpack.c.l.b16 %v234
      %v455 = vunpack.c.h.b16 %v234
      %v456 = vunpack.c.l.b16 %v235
      %v457 = vunpack.c.h.b16 %v235
      %v458 = vunpack.c.l.b16 %v236
      %v459 = vunpack.c.h.b16 %v236
      %v460 = vunpack.c.l.b16 %v237
      %v461 = vunpack.c.h.b16 %v237
      %v462 = vunpack.c.l.b16 %v238
      %v463 = vunpack.c.h.b16 %v238
      %v464 = vunpack.c.l.b16 %v239
      %v465 = vunpack.c.h.b16 %v239
      %v466 = vunpack.c.l.b16 %v240
      %v467 = vunpack.c.h.b16 %v240
      %v468 = vunpack.c.l.b16 %v241
      %v469 = vunpack.c.h.b16 %v241
      %v470 = vunpack.c.l.b16 %v242
      %v471 = vunpack.c.h.b16 %v242
      %v472 = vunpack.c.l.b16 %v243
      %v473 = vunpack.c.h.b16 %v243
      %v474 = vunpack.c.l.b16 %v244
      %v475 = vunpack.c.h.b16 %v244
      %v476 = vunpack.c.l.b16 %v245
      %v477 = vunpack.c.h.b16 %v245
      %v478 = vunpack.c.l.b16 %v246
      %v479 = vunpack.c.h.b16 %v246
      %v480 = vunpack.c.l.b16 %v247
      %v481 = vunpack.c.h.b16 %v247
      %v482 = vpack.c.b16 %v346, %v338
      %v483 = vpack.c.b16 %v347, %v339
      %v484 = vpack.c.b16 %v348, %v340
      %v485 = vpack.c.b16 %v349, %v341
      %v486 = vpack.c.b16 %v350, %v342
      %v487 = vpack.c.b16 %v351, %v343
      %v488 = vpack.c.b16 %v352, %v344
      %v489 = vpack.c.b16 %v353, %v345
      %v490 = vpack.c.b16 %v362, %v354
      %v491 = vpack.c.b16 %v363, %v355
      %v492 = vpack.c.b16 %v364, %v356
      %v493 = vpack.c.b16 %v365, %v357
      %v494 = vpack.c.b16 %v366, %v358
      %v495 = vpack.c.b16 %v367, %v359
      %v496 = vpack.c.b16 %v368, %v360
      %v497 = vpack.c.b16 %v369, %v361
      %v498 = vpack.c.b16 %v378, %v370
      %v499 = vpack.c.b16 %v379, %v371
      %v500 = vpack.c.b16 %v380, %v372
      %v501 = vpack.c.b16 %v381, %v373
      %v502 = vpack.c.b16 %v382, %v374
      %v503 = vpack.c.b16 %v383, %v375
      %v504 = vpack.c.b16 %v384, %v376
      %v505 = vpack.c.b16 %v385, %v377
      %v506 = vpack.c.b16 %v394, %v386
      %v507 = vpack.c.b16 %v395, %v387
      %v508 = vpack.c.b16 %v396, %v388
      %v509 = vpack.c.b16 %v397, %v389
      %v510 = vpack.c.b16 %v398, %v390
      %v511 = vpack.c.b16 %v399, %v391
      %v512 = vpack.c.b16 %v400, %v392
      %v513 = vpack.c.b16 %v401, %v393
      %v514 = vpack.c.b16 %v410, %v402
      %v515 = vpack.c.b16 %v411, %v403
      %v516 = vpack.c.b16 %v412, %v404
      %v517 = vpack.c.b16 %v413, %v405
      %v518 = vpack.c.b16 %v414, %v406
      %v519 = vpack.c.b16 %v415, %v407
      %v520 = vpack.c.b16 %v416, %v408
      %v521 = vpack.c.b16 %v417, %v409
      %v522 = vpack.c.b16 %v426, %v418
      %v523 = vpack.c.b16 %v427, %v419
      %v524 = vpack.c.b16 %v428, %v420
      %v525 = vpack.c.b16 %v429, %v421
      %v526 = vpack.c.b16 %v430, %v422
      %v527 = vpack.c.b16 %v431, %v423
      %v528 = vpack.c.b16 %v432, %v424
      %v529 = vpack.c.b16 %v433, %v425
      %v530 = vpack.c.b16 %v442, %v434
      %v531 = vpack.c.b16 %v443, %v435
      %v532 = vpack.c.b16 %v444, %v436
      %v533 = vpack.c.b16 %v445, %v437
      %v534 = vpack.c.b16 %v446, %v438
      %v535 = vpack.c.b16 %v447, %v439
      %v536 = vpack.c.b16 %v448, %v440
      %v537 = vpack.c.b16 %v449, %v441
      %v538 = vpack.c.b16 %v458, %v450
      %v539 = vpack.c.b16 %v459, %v451
      %v540 = vpack.c.b16 %v460, %v452
      %v541 = vpack.c.b16 %v461, %v453
      %v542 = vpack.c.b16 %v462, %v454
      %v543 = vpack.c.b16 %v463, %v455
      %v544 = vpack.c.b16 %v464, %v456
      %v545 = vpack.c.b16 %v465, %v457
      %v546 = vpack.c.b16 %v474, %v466
      %v547 = vpack.c.b16 %v475, %v467
      %v548 = vpack.c.b16 %v476, %v468
      %v549 = vpack.c.b16 %v477, %v469
      %v550 = vpack.c.b16 %v478, %v470
      %v551 = vpack.c.b16 %v479, %v471
      %v552 = vpack.c.b16 %v480, %v472
      %v553 = vpack.c.b16 %v481, %v473
      %vm626 = vcmask 130048
      %v628 = vsel %vm626, %v261, 0
      %v631 = vsel %vm626, %v263, 0
      %633 = vmatprep.subr.bf16.mxu0 %v483
      %634 = vmatpush1.bf16.msra.mxu0 %v482
      %635 = vmatprep.subr.bf16.mxu0 %v491
      %636 = vmatpush1.bf16.msra.mxu0 %v490
      %637 = vmatprep.subr.bf16.mxu0 %v499
      %638 = vmatpush1.bf16.msra.mxu0 %v498
      %639 = vmatprep.subr.bf16.mxu0 %v507
      %640 = vmatpush1.bf16.msra.mxu0 %v506
      %641 = vmatprep.subr.bf16.mxu0 %v515
      %642 = vmatpush1.bf16.msra.mxu0 %v514
      %643 = vmatprep.subr.bf16.mxu0 %v523
      %644 = vmatpush1.bf16.msra.mxu0 %v522
      %645 = vmatprep.subr.bf16.mxu0 %v531
      %646 = vmatpush1.bf16.msra.mxu0 %v530
      %647 = vmatprep.subr.bf16.mxu0 %v539
      %648 = vmatpush1.bf16.msra.mxu0 %v538
      %649 = vmatprep.subr.bf16.mxu0 %v547
      %650 = vmatpush1.bf16.msra.mxu0 %v546
      %651 = vmatprep.subr.bf16.mxu0 0
      %652 = vmatpush1.bf16.msra.mxu0 0
      %653 = vmatprep.subr.bf16.mxu0 0
      %654 = vmatpush1.bf16.msra.mxu0 0
      %655 = vmatprep.subr.bf16.mxu0 0
      %656 = vmatpush1.bf16.msra.mxu0 0
      %657 = vmatprep.subr.bf16.mxu0 0
      %658 = vmatpush1.bf16.msra.mxu0 0
      %659 = vmatprep.subr.bf16.mxu0 0
      %660 = vmatpush1.bf16.msra.mxu0 0
      %661 = vmatprep.subr.bf16.mxu0 0
      %662 = vmatpush1.bf16.msra.mxu0 0
      %663 = vmatprep.subr.bf16.mxu0 0
      %664 = vmatpush1.bf16.msra.mxu0 0
      %665 = vmatprep.mubr.bf16.mxu0 %v628
      %666 = vmatmul.mubr.bf16.gmra.mrb[0].mxu0 %v260
      %v667 = vpop.f32.mrb[0].mxu0
      %v668 = vadd.f32 0.0, %v667
      %v669 = vpop.f32.mrb[0].mxu0
      %v670 = vadd.f32 0.0, %v669
      %v671 = vpop.f32.mrb[0].mxu0
      %v672 = vadd.f32 0.0, %v671
      %v673 = vpop.f32.mrb[0].mxu0
      %v674 = vadd.f32 0.0, %v673
      %675 = vmatprep.mubr.bf16.mxu0 %v631
      %676 = vmatmul.mubr.bf16.gmra.mrb[0].mxu0 %v262
      %v677 = vpop.f32.mrb[0].mxu0
      %v678 = vadd.f32 0.0, %v677
      %v679 = vpop.f32.mrb[0].mxu0
      %v680 = vadd.f32 0.0, %v679
      %v681 = vpop.f32.mrb[0].mxu0
      %v682 = vadd.f32 0.0, %v681
      %v683 = vpop.f32.mrb[0].mxu0
      %v684 = vadd.f32 0.0, %v683
      %685 = vdwg.mxu0
      %686 = vmatprep.subr.bf16.mxu0 %v485
      %687 = vmatpush1.bf16.msra.mxu0 %v484
      %688 = vmatprep.subr.bf16.mxu0 %v493
      %689 = vmatpush1.bf16.msra.mxu0 %v492
      %690 = vmatprep.subr.bf16.mxu0 %v501
      %691 = vmatpush1.bf16.msra.mxu0 %v500
      %692 = vmatprep.subr.bf16.mxu0 %v509
      %693 = vmatpush1.bf16.msra.mxu0 %v508
      %694 = vmatprep.subr.bf16.mxu0 %v517
      %695 = vmatpush1.bf16.msra.mxu0 %v516
      %696 = vmatprep.subr.bf16.mxu0 %v525
      %697 = vmatpush1.bf16.msra.mxu0 %v524
      %698 = vmatprep.subr.bf16.mxu0 %v533
      %699 = vmatpush1.bf16.msra.mxu0 %v532
      %700 = vmatprep.subr.bf16.mxu0 %v541
      %701 = vmatpush1.bf16.msra.mxu0 %v540
      %702 = vmatprep.subr.bf16.mxu0 %v549
      %703 = vmatpush1.bf16.msra.mxu0 %v548
      %704 = vmatprep.subr.bf16.mxu0 0
      %705 = vmatpush1.bf16.msra.mxu0 0
      %706 = vmatprep.subr.bf16.mxu0 0
      %707 = vmatpush1.bf16.msra.mxu0 0
      %708 = vmatprep.subr.bf16.mxu0 0
      %709 = vmatpush1.bf16.msra.mxu0 0
      %710 = vmatprep.subr.bf16.mxu0 0
      %711 = vmatpush1.bf16.msra.mxu0 0
      %712 = vmatprep.subr.bf16.mxu0 0
      %713 = vmatpush1.bf16.msra.mxu0 0
      %714 = vmatprep.subr.bf16.mxu0 0
      %715 = vmatpush1.bf16.msra.mxu0 0
      %716 = vmatprep.subr.bf16.mxu0 0
      %717 = vmatpush1.bf16.msra.mxu0 0
      %718 = vmatprep.mubr.bf16.mxu0 %v628
      %719 = vmatmul.mubr.bf16.gmra.mrb[0].mxu0 %v260
      %v720 = vpop.f32.mrb[0].mxu0
      %v721 = vadd.f32 0.0, %v720
      %v722 = vpop.f32.mrb[0].mxu0
      %v723 = vadd.f32 0.0, %v722
      %v724 = vpop.f32.mrb[0].mxu0
      %v725 = vadd.f32 0.0, %v724
      %v726 = vpop.f32.mrb[0].mxu0
      %v727 = vadd.f32 0.0, %v726
      %728 = vmatprep.mubr.bf16.mxu0 %v631
      %729 = vmatmul.mubr.bf16.gmra.mrb[0].mxu0 %v262
      %v730 = vpop.f32.mrb[0].mxu0
      %v731 = vadd.f32 0.0, %v730
      %v732 = vpop.f32.mrb[0].mxu0
      %v733 = vadd.f32 0.0, %v732
      %v734 = vpop.f32.mrb[0].mxu0
      %v735 = vadd.f32 0.0, %v734
      %v736 = vpop.f32.mrb[0].mxu0
      %v737 = vadd.f32 0.0, %v736
      %738 = vdwg.mxu0
      %739 = vmatprep.subr.bf16.mxu0 %v487
      %740 = vmatpush1.bf16.msra.mxu0 %v486
      %741 = vmatprep.subr.bf16.mxu0 %v495
      %742 = vmatpush1.bf16.msra.mxu0 %v494
      %743 = vmatprep.subr.bf16.mxu0 %v503
      %744 = vmatpush1.bf16.msra.mxu0 %v502
      %745 = vmatprep.subr.bf16.mxu0 %v511
      %746 = vmatpush1.bf16.msra.mxu0 %v510
      %747 = vmatprep.subr.bf16.mxu0 %v519
      %748 = vmatpush1.bf16.msra.mxu0 %v518
      %749 = vmatprep.subr.bf16.mxu0 %v527
      %750 = vmatpush1.bf16.msra.mxu0 %v526
      %751 = vmatprep.subr.bf16.mxu0 %v535
      %752 = vmatpush1.bf16.msra.mxu0 %v534
      %753 = vmatprep.subr.bf16.mxu0 %v543
      %754 = vmatpush1.bf16.msra.mxu0 %v542
      %755 = vmatprep.subr.bf16.mxu0 %v551
      %756 = vmatpush1.bf16.msra.mxu0 %v550
      %757 = vmatprep.subr.bf16.mxu0 0
      %758 = vmatpush1.bf16.msra.mxu0 0
      %759 = vmatprep.subr.bf16.mxu0 0
      %760 = vmatpush1.bf16.msra.mxu0 0
      %761 = vmatprep.subr.bf16.mxu0 0
      %762 = vmatpush1.bf16.msra.mxu0 0
      %763 = vmatprep.subr.bf16.mxu0 0
      %764 = vmatpush1.bf16.msra.mxu0 0
      %765 = vmatprep.subr.bf16.mxu0 0
      %766 = vmatpush1.bf16.msra.mxu0 0
      %767 = vmatprep.subr.bf16.mxu0 0
      %768 = vmatpush1.bf16.msra.mxu0 0
      %769 = vmatprep.subr.bf16.mxu0 0
      %770 = vmatpush1.bf16.msra.mxu0 0
      %771 = vmatprep.mubr.bf16.mxu0 %v628
      %772 = vmatmul.mubr.bf16.gmra.mrb[0].mxu0 %v260
      %v773 = vpop.f32.mrb[0].mxu0
      %v774 = vadd.f32 0.0, %v773
      %v775 = vpop.f32.mrb[0].mxu0
      %v776 = vadd.f32 0.0, %v775
      %v777 = vpop.f32.mrb[0].mxu0
      %v778 = vadd.f32 0.0, %v777
      %v779 = vpop.f32.mrb[0].mxu0
      %v780 = vadd.f32 0.0, %v779
      %781 = vmatprep.mubr.bf16.mxu0 %v631
      %782 = vmatmul.mubr.bf16.gmra.mrb[0].mxu0 %v262
      %v783 = vpop.f32.mrb[0].mxu0
      %v784 = vadd.f32 0.0, %v783
      %v785 = vpop.f32.mrb[0].mxu0
      %v786 = vadd.f32 0.0, %v785
      %v787 = vpop.f32.mrb[0].mxu0
      %v788 = vadd.f32 0.0, %v787
      %v789 = vpop.f32.mrb[0].mxu0
      %v790 = vadd.f32 0.0, %v789
      %791 = vdwg.mxu0
      %792 = vmatprep.subr.bf16.mxu0 %v489
      %793 = vmatpush1.bf16.msra.mxu0 %v488
      %794 = vmatprep.subr.bf16.mxu0 %v497
      %795 = vmatpush1.bf16.msra.mxu0 %v496
      %796 = vmatprep.subr.bf16.mxu0 %v505
      %797 = vmatpush1.bf16.msra.mxu0 %v504
      %798 = vmatprep.subr.bf16.mxu0 %v513
      %799 = vmatpush1.bf16.msra.mxu0 %v512
      %800 = vmatprep.subr.bf16.mxu0 %v521
      %801 = vmatpush1.bf16.msra.mxu0 %v520
      %802 = vmatprep.subr.bf16.mxu0 %v529
      %803 = vmatpush1.bf16.msra.mxu0 %v528
      %804 = vmatprep.subr.bf16.mxu0 %v537
      %805 = vmatpush1.bf16.msra.mxu0 %v536
      %806 = vmatprep.subr.bf16.mxu0 %v545
      %807 = vmatpush1.bf16.msra.mxu0 %v544
      %808 = vmatprep.subr.bf16.mxu0 %v553
      %809 = vmatpush1.bf16.msra.mxu0 %v552
      %810 = vmatprep.subr.bf16.mxu0 0
      %811 = vmatpush1.bf16.msra.mxu0 0
      %812 = vmatprep.subr.bf16.mxu0 0
      %813 = vmatpush1.bf16.msra.mxu0 0
      %814 = vmatprep.subr.bf16.mxu0 0
      %815 = vmatpush1.bf16.msra.mxu0 0
      %816 = vmatprep.subr.bf16.mxu0 0
      %817 = vmatpush1.bf16.msra.mxu0 0
      %818 = vmatprep.subr.bf16.mxu0 0
      %819 = vmatpush1.bf16.msra.mxu0 0
      %820 = vmatprep.subr.bf16.mxu0 0
      %821 = vmatpush1.bf16.msra.mxu0 0
      %822 = vmatprep.subr.bf16.mxu0 0
      %823 = vmatpush1.bf16.msra.mxu0 0
      %824 = vmatprep.mubr.bf16.mxu0 %v628
      %825 = vmatmul.mubr.bf16.gmra.mrb[0].mxu0 %v260
      %v826 = vpop.f32.mrb[0].mxu0
      %v827 = vadd.f32 0.0, %v826
      %v828 = vpop.f32.mrb[0].mxu0
      %v829 = vadd.f32 0.0, %v828
      %v830 = vpop.f32.mrb[0].mxu0
      %v831 = vadd.f32 0.0, %v830
      %v832 = vpop.f32.mrb[0].mxu0
      %v833 = vadd.f32 0.0, %v832
      %834 = vmatprep.mubr.bf16.mxu0 %v631
      %835 = vmatmul.mubr.bf16.gmra.mrb[0].mxu0 %v262
      %v836 = vpop.f32.mrb[0].mxu0
      %v837 = vadd.f32 0.0, %v836
      %v838 = vpop.f32.mrb[0].mxu0
      %v839 = vadd.f32 0.0, %v838
      %v840 = vpop.f32.mrb[0].mxu0
      %v841 = vadd.f32 0.0, %v840
      %v842 = vpop.f32.mrb[0].mxu0
      %v843 = vadd.f32 0.0, %v842
      %844 = vdwg.mxu0
      %v845 = vmax.f32 %v668, %v721
      %v846 = vmax.f32 %v670, %v723
      %v847 = vmax.f32 %v672, %v725
      %v848 = vmax.f32 %v674, %v727
      %v849 = vmax.f32 %v678, %v731
      %v850 = vmax.f32 %v680, %v733
      %v851 = vmax.f32 %v682, %v735
      %v852 = vmax.f32 %v684, %v737
      %v853 = vmax.f32 %v774, %v827
      %v854 = vmax.f32 %v776, %v829
      %v855 = vmax.f32 %v778, %v831
      %v856 = vmax.f32 %v780, %v833
      %v857 = vmax.f32 %v784, %v837
      %v858 = vmax.f32 %v786, %v839
      %v859 = vmax.f32 %v788, %v841
      %v860 = vmax.f32 %v790, %v843
      %v861 = vmax.f32 %v845, %v853
      %v862 = vmax.f32 %v846, %v854
      %v863 = vmax.f32 %v847, %v855
      %v864 = vmax.f32 %v848, %v856
      %v865 = vmax.f32 %v849, %v857
      %v866 = vmax.f32 %v850, %v858
      %v867 = vmax.f32 %v851, %v859
      %v868 = vmax.f32 %v852, %v860
      %v869 = vld [vmem:[%s2] sm:$0xff]
      %v870 = vld [vmem:[%s2 + $0x8] sm:$0xff]
      %v871 = vld [vmem:[%s2 + $0x10] sm:$0xff]
      %v872 = vld [vmem:[%s2 + $0x18] sm:$0xff]
      %874 = vset.pattern.permute.xlu0 0
      %875 = vperm.xlu0 %874, %v869
      %v876 = vpop.permute.xlu0 %875
      %879 = vset.pattern.permute.xlu0 0
      %880 = vperm.xlu0 %879, %v870
      %v881 = vpop.permute.xlu0 %880
      %884 = vset.pattern.permute.xlu0 0
      %885 = vperm.xlu0 %884, %v871
      %v886 = vpop.permute.xlu0 %885
      %889 = vset.pattern.permute.xlu0 0
      %890 = vperm.xlu0 %889, %v872
      %v891 = vpop.permute.xlu0 %890
      %v893 = vadd.f32 %v861, %v876
      %v894 = vadd.f32 %v862, %v876
      %v895 = vadd.f32 %v863, %v881
      %v896 = vadd.f32 %v864, %v881
      %v897 = vadd.f32 %v865, %v886
      %v898 = vadd.f32 %v866, %v886
      %v899 = vadd.f32 %v867, %v891
      %v900 = vadd.f32 %v868, %v891
      %v901 = vmax.f32 %v893, 0.0
      %v902 = vmax.f32 %v894, 0.0
      %v903 = vmax.f32 %v895, 0.0
      %v904 = vmax.f32 %v896, 0.0
      %v905 = vmax.f32 %v897, 0.0
      %v906 = vmax.f32 %v898, 0.0
      %v907 = vmax.f32 %v899, 0.0
      %v908 = vmax.f32 %v900, 0.0
      %v909 = vpack.c.bf16 %v903, %v901
      %v910 = vpack.c.bf16 %v904, %v902
      %v911 = vpack.c.bf16 %v907, %v905
      %v912 = vpack.c.bf16 %v908, %v906
      %v917 = vunpack.c.l.b16 %v909
      %v918 = vunpack.c.l.b16 %v910
      %v919 = vunpack.c.h.b16 %v909
      %v920 = vunpack.c.h.b16 %v910
      %v921 = vunpack.c.l.b16 %v911
      %v922 = vunpack.c.l.b16 %v912
      %v923 = vunpack.c.h.b16 %v911
      %v924 = vunpack.c.h.b16 %v912
      %v925 = vpack.c.b16 %v918, %v917
      %v926 = vpack.c.b16 %v920, %v919
      %v927 = vpack.c.b16 %v922, %v921
      %v928 = vpack.c.b16 %v924, %v923
      %933 = vst [vmem:[%s170] sm:$0xff] %v925
      %934 = vst [vmem:[%s170 + $0x8] sm:$0xff] %v926
      %935 = vst [vmem:[%s170 + $0x10] sm:$0xff] %v927
      %936 = vst [vmem:[%s170 + $0x18] sm:$0xff] %v928
      %p937 = scmp.lt.s32.totalorder %s14, 1
      %s938 = scalar_select %p937, %s14, 1
      %s939 = smul.addr %s938, 8
      %s940 = smul.addr %s939, 4
      %s941 = scalar_lea.vmem %s3, %s940
      // Predicated region
      $region33: #{mon_cnn_forward.4} parent=31 // pred_check
        %p942 = pneg %p100
      $region34: #{mon_cnn_forward.4} parent=31 // pred_check_branch
        %944 = sbr.rel (%p942) target = $region36
      $region35: #{mon_cnn_forward.4} parent=31 // pred_region
        _
      $region36: #{mon_cnn_forward.4} parent=31 // pred_fallthru
        _
    $region32: #{mon_cnn_forward.4} parent=5 // pred_fallthru
      _
    %p945 = scmp.le.s32.totalorder 2, %s9
    // Predicated region
    $region37: #{mon_cnn_forward.4} parent=5 // pred_check
      %p946 = pneg %p945
    $region38: #{mon_cnn_forward.4} parent=5 // pred_check_branch
      %948 = sbr.rel (%p946) target = $region40
    $region39: #{mon_cnn_forward.4} parent=5 // pred_region
      %s949 = ssub.s32 %s9, 2
      // Predicated region
      $region41: #{mon_cnn_forward.4} parent=39 // pred_check
        %p950 = pneg %p106
      $region42: #{mon_cnn_forward.4} parent=39 // pred_check_branch
        %952 = sbr.rel (%p950) target = $region44
      $region43: #{mon_cnn_forward.4} parent=39 // pred_region
        %p953 = scmp.lt.s32.totalorder %s15, 1
        %s954 = scalar_select %p953, %s15, 1
        %s955 = smul.addr %s954, 8
        %s956 = smul.addr %s955, 4
        %s957 = scalar_lea.vmem %s3, %s956
      $region44: #{mon_cnn_forward.4} parent=39 // pred_fallthru
        _
    $region40: #{mon_cnn_forward.4} parent=5 // pred_fallthru
      _
  $region6: #{mon_cnn_forward.4} parent=0 // loop_footer
    %s13 = sadd.s32 1, %s9
  $region7: #{mon_cnn_forward.4} parent=0 // loop_footer_branch
    %8 = sbr.rel target = $region3
  $region8: #{mon_cnn_forward.4} parent=0 // loop_exit
    _

// kernel: mon_cnn_forward.5
$region0: #{mon_cnn_forward.5}
  #allocation0 [shape = 'u32[]', space=smem, size = 0x4, offset = 0x4, fixed_abs, tag = 'smem constant byte address 0x4 - core index']
  #allocation1 [shape = 'u32[144,128]{1,0:T(1,128)}', space=vmem, size = 0x12000, scoped, tag = 'internal scratch']
  #allocation2 [shape = 'f32[2,64]{1,0:T(2,128)}', space=vmem, size = 0x400, scoped, tag = 'scratch operand']
  %s0 = inlined_call_operand.vmem [shape: bf16[2,8192], index: 0, kind: input, shape index: {}]
  %s1 = inlined_call_operand.vmem [shape: bf16[8192,64], index: 1, kind: input, shape index: {}]
  %s2 = inlined_call_operand.vmem [shape: f32[1,64], index: 2, kind: input, shape index: {}]
  %s3 = inlined_call_operand.vmem [shape: f32[64,3], index: 3, kind: input, shape index: {}]
  %s4 = inlined_call_operand.vmem [shape: f32[1,3], index: 4, kind: input, shape index: {}]
  %s5 = inlined_call_operand.hbm [shape: f32[2,3], index: 5, kind: output, shape index: {}]
  %s6 = sld [smem:[#allocation0]]
  $region61: #{mon_cnn_forward.5} parent=0
    _
  %s8 = ssub.s32 1, %s6
  %s9 = scalar_select 0, %s8, %s6
  $region1: #{mon_cnn_forward.5} parent=0
    #allocation3 [shape = 'u8[1024]{0}', space=vmem, size = 0x400, scoped, tag = 'output window, operand 0, single buffered']
    #allocation4 [shape = 's32[2]{0}', space=sflag, size = 0x8, scoped, tag = 'scoped memory for mon_cnn_forward.5']
    %10 = vsyncpa [#allocation4], 0
    loop: start=0, step=1, limit=6
    $region2: #{mon_cnn_forward.5} parent=1 // loop_pre_header
      _
    $region3: #{mon_cnn_forward.5} parent=1 // loop_header
      %s12 = sphi 0, %s16
      %p13 = scmp.ge.s32.totalorder %s12, 6
      %s22 = sphi 0, %s24
      %s25 = sphi 0, %s22
      %s26 = sphi 0, %s25
      %s42 = sphi 0, %s26
      %s48 = sphi 0, %s50
      %s51 = sphi 0, %s48
      %s52 = sphi 0, %s51
      %s68 = sphi 0, %s52
      %s72 = sphi 0, %s72
      %s74 = sphi 0, %s72
      %s75 = sphi 0, %s74
      %s89 = sphi 0, %s75
      %s93 = sphi 0, %s93
      %s95 = sphi 0, %s93
      %s96 = sphi 0, %s95
      %s110 = sphi 0, %s96
      %s114 = sphi 0, %s114
      %s116 = sphi 0, %s114
      %s117 = sphi 0, %s116
      %s131 = sphi 0, %s117
      %s135 = sphi 0, %s135
      %s137 = sphi 0, %s135
      %s138 = sphi 0, %s137
      %s152 = sphi 0, %s138
    $region4: #{mon_cnn_forward.5} parent=1 // loop_header_branch
      %15 = sbr.rel (%p13) target = $region8
    $region5: #{mon_cnn_forward.5} parent=1 // loop_body
      %s17 = ssub.s32 %s12, 1
      %s18 = ssub.s32 %s12, 2
      %s19 = sadd.s32 %s12, 1
      %s20 = ssub.s32 %s12, %s19
      %p21 = scmp.eq.s32.totalorder %s20, 0
      %s23 = sadd.s32 %s22, 1
      %s24 = scalar_select %p21, %s22, %s23
      %p27 = pneg %p21
      %p28 = scmp.eq.s32.totalorder %s12, 3
      %p29 = por %p27, %p28
      %p30 = scmp.ne.s32.totalorder %s22, %s25
      %p31 = scmp.eq.s32.totalorder %s12, 0
      %p32 = por %p30, %p31
      %p33 = scmp.ne.s32.totalorder %s22, %s25
      %p34 = scmp.eq.s32.totalorder %s17, 3
      %p35 = por %p33, %p34
      %p36 = scmp.ne.s32.totalorder %s25, %s26
      %p37 = scmp.eq.s32.totalorder %s17, 0
      %p38 = por %p36, %p37
      %p39 = scmp.ne.s32.totalorder %s25, %s26
      %p40 = scmp.eq.s32.totalorder %s18, 3
      %p41 = por %p39, %p40
      %p43 = scmp.ne.s32.totalorder %s26, %s42
      %p44 = scmp.eq.s32.totalorder %s18, 0
      %p45 = por %p43, %p44
      %s46 = ssub.s32 %s12, %s19
      %p47 = scmp.eq.s32.totalorder %s46, 0
      %s49 = sadd.s32 %s48, 1
      %s50 = scalar_select %p47, %s48, %s49
      %p53 = pneg %p47
      %p54 = scmp.eq.s32.totalorder %s12, 3
      %p55 = por %p53, %p54
      %p56 = scmp.ne.s32.totalorder %s48, %s51
      %p57 = scmp.eq.s32.totalorder %s12, 0
      %p58 = por %p56, %p57
      %p59 = scmp.ne.s32.totalorder %s48, %s51
      %p60 = scmp.eq.s32.totalorder %s17, 3
      %p61 = por %p59, %p60
      %p62 = scmp.ne.s32.totalorder %s51, %s52
      %p63 = scmp.eq.s32.totalorder %s17, 0
      %p64 = por %p62, %p63
      %p65 = scmp.ne.s32.totalorder %s51, %s52
      %p66 = scmp.eq.s32.totalorder %s18, 3
      %p67 = por %p65, %p66
      %p69 = scmp.ne.s32.totalorder %s52, %s68
      %p70 = scmp.eq.s32.totalorder %s18, 0
      %p71 = por %p69, %p70
      %s73 = sadd.s32 %s72, 1
      %p76 = scmp.eq.s32.totalorder %s12, 3
      %p77 = scmp.ne.s32.totalorder %s72, %s74
      %p78 = scmp.eq.s32.totalorder %s12, 0
      %p79 = por %p77, %p78
      %p80 = scmp.ne.s32.totalorder %s72, %s74
      %p81 = scmp.eq.s32.totalorder %s17, 3
      %p82 = por %p80, %p81
      %p83 = scmp.ne.s32.totalorder %s74, %s75
      %p84 = scmp.eq.s32.totalorder %s17, 0
      %p85 = por %p83, %p84
      %p86 = scmp.ne.s32.totalorder %s74, %s75
      %p87 = scmp.eq.s32.totalorder %s18, 3
      %p88 = por %p86, %p87
      %p90 = scmp.ne.s32.totalorder %s75, %s89
      %p91 = scmp.eq.s32.totalorder %s18, 0
      %p92 = por %p90, %p91
      %s94 = sadd.s32 %s93, 1
      %p97 = scmp.eq.s32.totalorder %s12, 3
      %p98 = scmp.ne.s32.totalorder %s93, %s95
      %p99 = scmp.eq.s32.totalorder %s12, 0
      %p100 = por %p98, %p99
      %p101 = scmp.ne.s32.totalorder %s93, %s95
      %p102 = scmp.eq.s32.totalorder %s17, 3
      %p103 = por %p101, %p102
      %p104 = scmp.ne.s32.totalorder %s95, %s96
      %p105 = scmp.eq.s32.totalorder %s17, 0
      %p106 = por %p104, %p105
      %p107 = scmp.ne.s32.totalorder %s95, %s96
      %p108 = scmp.eq.s32.totalorder %s18, 3
      %p109 = por %p107, %p108
      %p111 = scmp.ne.s32.totalorder %s96, %s110
      %p112 = scmp.eq.s32.totalorder %s18, 0
      %p113 = por %p111, %p112
      %s115 = sadd.s32 %s114, 1
      %p118 = scmp.eq.s32.totalorder %s12, 3
      %p119 = scmp.ne.s32.totalorder %s114, %s116
      %p120 = scmp.eq.s32.totalorder %s12, 0
      %p121 = por %p119, %p120
      %p122 = scmp.ne.s32.totalorder %s114, %s116
      %p123 = scmp.eq.s32.totalorder %s17, 3
      %p124 = por %p122, %p123
      %p125 = scmp.ne.s32.totalorder %s116, %s117
      %p126 = scmp.eq.s32.totalorder %s17, 0
      %p127 = por %p125, %p126
      %p128 = scmp.ne.s32.totalorder %s116, %s117
      %p129 = scmp.eq.s32.totalorder %s18, 3
      %p130 = por %p128, %p129
      %p132 = scmp.ne.s32.totalorder %s117, %s131
      %p133 = scmp.eq.s32.totalorder %s18, 0
      %p134 = por %p132, %p133
      %s136 = sadd.s32 %s135, 1
      %p139 = scmp.eq.s32.totalorder %s12, 3
      %p140 = scmp.ne.s32.totalorder %s135, %s137
      %p141 = scmp.eq.s32.totalorder %s12, 0
      %p142 = por %p140, %p141
      %p143 = scmp.ne.s32.totalorder %s135, %s137
      %p144 = scmp.eq.s32.totalorder %s17, 3
      %p145 = por %p143, %p144
      %p146 = scmp.ne.s32.totalorder %s137, %s138
      %p147 = scmp.eq.s32.totalorder %s17, 0
      %p148 = por %p146, %p147
      %p149 = scmp.ne.s32.totalorder %s137, %s138
      %p150 = scmp.eq.s32.totalorder %s18, 3
      %p151 = por %p149, %p150
      %p153 = scmp.ne.s32.totalorder %s138, %s152
      %p154 = scmp.eq.s32.totalorder %s18, 0
      %p155 = por %p153, %p154
      %p156 = scmp.le.s32.totalorder 1, %s12
      %p157 = scmp.lt.s32.totalorder %s12, 5
      %p158 = pnand %p156, %p157
      %p159 = pneg %p158
      // Predicated region
      $region9: #{mon_cnn_forward.5} parent=5 // pred_check
        _
      $region10: #{mon_cnn_forward.5} parent=5 // pred_check_branch
        %161 = sbr.rel (%p158) target = $region12
      $region11: #{mon_cnn_forward.5} parent=5 // pred_region
        %s162 = ssub.s32 %s12, 1
        // Predicated region
        $region13: #{mon_cnn_forward.5} parent=11 // pred_check
          %p163 = pneg %p85
        $region14: #{mon_cnn_forward.5} parent=11 // pred_check_branch
          %165 = sbr.rel (%p163) target = $region16
        $region15: #{mon_cnn_forward.5} parent=11 // pred_region
          _
        $region16: #{mon_cnn_forward.5} parent=11 // pred_fallthru
          _
        // Predicated region
        $region17: #{mon_cnn_forward.5} parent=11 // pred_check
          %p166 = pneg %p106
        $region18: #{mon_cnn_forward.5} parent=11 // pred_check_branch
          %168 = sbr.rel (%p166) target = $region20
        $region19: #{mon_cnn_forward.5} parent=11 // pred_region
          _
        $region20: #{mon_cnn_forward.5} parent=11 // pred_fallthru
          _
        // Predicated region
        $region21: #{mon_cnn_forward.5} parent=11 // pred_check
          %p169 = pneg %p127
        $region22: #{mon_cnn_forward.5} parent=11 // pred_check_branch
          %171 = sbr.rel (%p169) target = $region24
        $region23: #{mon_cnn_forward.5} parent=11 // pred_region
          _
        $region24: #{mon_cnn_forward.5} parent=11 // pred_fallthru
          _
      $region12: #{mon_cnn_forward.5} parent=5 // pred_fallthru
        _
      %p172 = scmp.lt.s32.totalorder %s12, 4
      // Predicated region
      $region25: #{mon_cnn_forward.5} parent=5 // pred_check
        %p173 = pneg %p172
      $region26: #{mon_cnn_forward.5} parent=5 // pred_check_branch
        %175 = sbr.rel (%p173) target = $region28
      $region27: #{mon_cnn_forward.5} parent=5 // pred_region
        // Predicated region
        $region29: #{mon_cnn_forward.5} parent=27 // pred_check
          %p176 = pneg %p32
        $region30: #{mon_cnn_forward.5} parent=27 // pred_check_branch
          %178 = sbr.rel (%p176) target = $region32
        $region31: #{mon_cnn_forward.5} parent=27 // pred_region
          %s179 = smul.u32 16, %s12
          %p180 = scmp.lt.s32.totalorder %s179, 63
          %s181 = scalar_select %p180, %s179, 63
          %s182 = scalar_lea.vmem %s0, %s181
          %s183 = smul.u32 16, %s12
        $region32: #{mon_cnn_forward.5} parent=27 // pred_fallthru
          _
        // Predicated region
        $region33: #{mon_cnn_forward.5} parent=27 // pred_check
          %p184 = pneg %p58
        $region34: #{mon_cnn_forward.5} parent=27 // pred_check_branch
          %186 = sbr.rel (%p184) target = $region36
        $region35: #{mon_cnn_forward.5} parent=27 // pred_region
          %s187 = smul.u32 256, %s12
          %p188 = scmp.lt.s32.totalorder %s187, 1023
          %s189 = scalar_select %p188, %s187, 1023
          %s190 = smul.addr %s189, 4
          %s191 = scalar_lea.vmem %s1, %s190
          %s192 = smul.u32 256, %s12
        $region36: #{mon_cnn_forward.5} parent=27 // pred_fallthru
          _
      $region28: #{mon_cnn_forward.5} parent=5 // pred_fallthru
        _
      %p193 = scmp.le.s32.totalorder 1, %s12
      %p194 = scmp.lt.s32.totalorder %s12, 5
      %p195 = pnand %p193, %p194
      %p196 = pneg %p195
      // Predicated region
      $region37: #{mon_cnn_forward.5} parent=5 // pred_check
        _
      $region38: #{mon_cnn_forward.5} parent=5 // pred_check_branch
        %198 = sbr.rel (%p195) target = $region40
      $region39: #{mon_cnn_forward.5} parent=5 // pred_region
        %s199 = ssub.s32 %s12, 1
        %s200 = smul.u32 16, %s17
        %p201 = scmp.lt.s32.totalorder %s200, 63
        %s202 = scalar_select %p201, %s200, 63
        %s203 = scalar_lea.vmem %s0, %s202
        %p204 = pneg %p38
        %p205 = pneg %p35
        %s206 = smul.u32 256, %s17
        %p207 = scmp.lt.s32.totalorder %s206, 1023
        %s208 = scalar_select %p207, %s206, 1023
        %s209 = smul.addr %s208, 4
        %s210 = scalar_lea.vmem %s1, %s209
        %p211 = pneg %p64
        %p212 = pneg %p61
        %p213 = pneg %p85
        %p214 = pneg %p82
        %p215 = pneg %p106
        %p216 = pneg %p103
        %p217 = pneg %p127
        %p218 = pneg %p124
        %p219 = pneg %p148
        %p220 = pneg %p145
        %s221 = smul.u32 16, %s17
        %p222 = scmp.lt.s32.totalorder %s221, 63
        %s223 = scalar_select %p222, %s221, 63
        %s224 = scalar_lea.vmem %s0, %s223
        %s225 = smul.u32 16, %s17
        %s226 = smul.u32 256, %s17
        %p227 = scmp.lt.s32.totalorder %s226, 1023
        %s228 = scalar_select %p227, %s226, 1023
        %s229 = smul.addr %s228, 4
        %s230 = scalar_lea.vmem %s1, %s229
        %s231 = smul.u32 256, %s17
        %p233 = scmp.eq.s32.totalorder %s17, 0
        // Predicated region
        $region41: #{mon_cnn_forward.5} parent=39 // pred_check
          %p234 = pneg %p233
        $region42: #{mon_cnn_forward.5} parent=39 // pred_check_branch
          %236 = sbr.rel (%p234) target = $region44
        $region43: #{mon_cnn_forward.5} parent=39 // pred_region
          %vm237 = vcmask 517120
          %238 = vst.msk [vmem:[#allocation2] sm:$0x3] %vm237, 0.0
        $region44: #{mon_cnn_forward.5} parent=39 // pred_fallthru
          _
        %v239 = vld [vmem:[#allocation2] sm:$0x3]
        %v240 = vld [vmem:[%s224] sm:$0xff]
        %v241 = vld [vmem:[%s224 + $0x8] sm:$0xff]
        %v242 = vld [vmem:[%s230] sm:$0xf]
        %v243 = vld [vmem:[%s230 + $0x4] sm:$0xf]
        %v244 = vld [vmem:[%s230 + $0x8] sm:$0xf]
        %v245 = vld [vmem:[%s230 + $0xc] sm:$0xf]
        %v246 = vld [vmem:[%s230 + $0x10] sm:$0xf]
        %v247 = vld [vmem:[%s230 + $0x14] sm:$0xf]
        %v248 = vld [vmem:[%s230 + $0x18] sm:$0xf]
        %v249 = vld [vmem:[%s230 + $0x1c] sm:$0xf]
        %v250 = vld [vmem:[%s230 + $0x20] sm:$0xf]
        %v251 = vld [vmem:[%s230 + $0x24] sm:$0xf]
        %v252 = vld [vmem:[%s230 + $0x28] sm:$0xf]
        %v253 = vld [vmem:[%s230 + $0x2c] sm:$0xf]
        %v254 = vld [vmem:[%s230 + $0x30] sm:$0xf]
        %v255 = vld [vmem:[%s230 + $0x34] sm:$0xf]
        %v256 = vld [vmem:[%s230 + $0x38] sm:$0xf]
        %v257 = vld [vmem:[%s230 + $0x3c] sm:$0xf]
        %v258 = vld [vmem:[%s230 + $0x40] sm:$0xf]
        %v259 = vld [vmem:[%s230 + $0x44] sm:$0xf]
        %v260 = vld [vmem:[%s230 + $0x48] sm:$0xf]
        %v261 = vld [vmem:[%s230 + $0x4c] sm:$0xf]
        %v262 = vld [vmem:[%s230 + $0x50] sm:$0xf]
        %v263 = vld [vmem:[%s230 + $0x54] sm:$0xf]
        %v264 = vld [vmem:[%s230 + $0x58] sm:$0xf]
        %v265 = vld [vmem:[%s230 + $0x5c] sm:$0xf]
        %v266 = vld [vmem:[%s230 + $0x60] sm:$0xf]
        %v267 = vld [vmem:[%s230 + $0x64] sm:$0xf]
        %v268 = vld [vmem:[%s230 + $0x68] sm:$0xf]
        %v269 = vld [vmem:[%s230 + $0x6c] sm:$0xf]
        %v270 = vld [vmem:[%s230 + $0x70] sm:$0xf]
        %v271 = vld [vmem:[%s230 + $0x74] sm:$0xf]
        %v272 = vld [vmem:[%s230 + $0x78] sm:$0xf]
        %v273 = vld [vmem:[%s230 + $0x7c] sm:$0xf]
        %v274 = vld [vmem:[%s230 + $0x80] sm:$0xf]
        %v275 = vld [vmem:[%s230 + $0x84] sm:$0xf]
        %v276 = vld [vmem:[%s230 + $0x88] sm:$0xf]
        %v277 = vld [vmem:[%s230 + $0x8c] sm:$0xf]
        %v278 = vld [vmem:[%s230 + $0x90] sm:$0xf]
        %v279 = vld [vmem:[%s230 + $0x94] sm:$0xf]
        %v280 = vld [vmem:[%s230 + $0x98] sm:$0xf]
        %v281 = vld [vmem:[%s230 + $0x9c] sm:$0xf]
        %v282 = vld [vmem:[%s230 + $0xa0] sm:$0xf]
        %v283 = vld [vmem:[%s230 + $0xa4] sm:$0xf]
        %v284 = vld [vmem:[%s230 + $0xa8] sm:$0xf]
        %v285 = vld [vmem:[%s230 + $0xac] sm:$0xf]
        %v286 = vld [vmem:[%s230 + $0xb0] sm:$0xf]
        %v287 = vld [vmem:[%s230 + $0xb4] sm:$0xf]
        %v288 = vld [vmem:[%s230 + $0xb8] sm:$0xf]
        %v289 = vld [vmem:[%s230 + $0xbc] sm:$0xf]
        %v290 = vld [vmem:[%s230 + $0xc0] sm:$0xf]
        %v291 = vld [vmem:[%s230 + $0xc4] sm:$0xf]
        %v292 = vld [vmem:[%s230 + $0xc8] sm:$0xf]
        %v293 = vld [vmem:[%s230 + $0xcc] sm:$0xf]
        %v294 = vld [vmem:[%s230 + $0xd0] sm:$0xf]
        %v295 = vld [vmem:[%s230 + $0xd4] sm:$0xf]
        %v296 = vld [vmem:[%s230 + $0xd8] sm:$0xf]
        %v297 = vld [vmem:[%s230 + $0xdc] sm:$0xf]
        %v298 = vld [vmem:[%s230 + $0xe0] sm:$0xf]
        %v299 = vld [vmem:[%s230 + $0xe4] sm:$0xf]
        %v300 = vld [vmem:[%s230 + $0xe8] sm:$0xf]
        %v301 = vld [vmem:[%s230 + $0xec] sm:$0xf]
        %v302 = vld [vmem:[%s230 + $0xf0] sm:$0xf]
        %v303 = vld [vmem:[%s230 + $0xf4] sm:$0xf]
        %v304 = vld [vmem:[%s230 + $0xf8] sm:$0xf]
        %v305 = vld [vmem:[%s230 + $0xfc] sm:$0xf]
        %v306 = vld [vmem:[%s230 + $0x100] sm:$0xf]
        %v307 = vld [vmem:[%s230 + $0x104] sm:$0xf]
        %v308 = vld [vmem:[%s230 + $0x108] sm:$0xf]
        %v309 = vld [vmem:[%s230 + $0x10c] sm:$0xf]
        %v310 = vld [vmem:[%s230 + $0x110] sm:$0xf]
        %v311 = vld [vmem:[%s230 + $0x114] sm:$0xf]
        %v312 = vld [vmem:[%s230 + $0x118] sm:$0xf]
        %v313 = vld [vmem:[%s230 + $0x11c] sm:$0xf]
        %v314 = vld [vmem:[%s230 + $0x120] sm:$0xf]
        %v315 = vld [vmem:[%s230 + $0x124] sm:$0xf]
        %v316 = vld [vmem:[%s230 + $0x128] sm:$0xf]
        %v317 = vld [vmem:[%s230 + $0x12c] sm:$0xf]
        %v318 = vld [vmem:[%s230 + $0x130] sm:$0xf]
        %v319 = vld [vmem:[%s230 + $0x134] sm:$0xf]
        %v320 = vld [vmem:[%s230 + $0x138] sm:$0xf]
        %v321 = vld [vmem:[%s230 + $0x13c] sm:$0xf]
        %v322 = vld [vmem:[%s230 + $0x140] sm:$0xf]
        %v323 = vld [vmem:[%s230 + $0x144] sm:$0xf]
        %v324 = vld [vmem:[%s230 + $0x148] sm:$0xf]
        %v325 = vld [vmem:[%s230 + $0x14c] sm:$0xf]
        %v326 = vld [vmem:[%s230 + $0x150] sm:$0xf]
        %v327 = vld [vmem:[%s230 + $0x154] sm:$0xf]
        %v328 = vld [vmem:[%s230 + $0x158] sm:$0xf]
        %v329 = vld [vmem:[%s230 + $0x15c] sm:$0xf]
        %v330 = vld [vmem:[%s230 + $0x160] sm:$0xf]
        %v331 = vld [vmem:[%s230 + $0x164] sm:$0xf]
        %v332 = vld [vmem:[%s230 + $0x168] sm:$0xf]
        %v333 = vld [vmem:[%s230 + $0x16c] sm:$0xf]
        %v334 = vld [vmem:[%s230 + $0x170] sm:$0xf]
        %v335 = vld [vmem:[%s230 + $0x174] sm:$0xf]
        %v336 = vld [vmem:[%s230 + $0x178] sm:$0xf]
        %v337 = vld [vmem:[%s230 + $0x17c] sm:$0xf]
        %v338 = vld [vmem:[%s230 + $0x180] sm:$0xf]
        %v339 = vld [vmem:[%s230 + $0x184] sm:$0xf]
        %v340 = vld [vmem:[%s230 + $0x188] sm:$0xf]
        %v341 = vld [vmem:[%s230 + $0x18c] sm:$0xf]
        %v342 = vld [vmem:[%s230 + $0x190] sm:$0xf]
        %v343 = vld [vmem:[%s230 + $0x194] sm:$0xf]
        %v344 = vld [vmem:[%s230 + $0x198] sm:$0xf]
        %v345 = vld [vmem:[%s230 + $0x19c] sm:$0xf]
        %v346 = vld [vmem:[%s230 + $0x1a0] sm:$0xf]
        %v347 = vld [vmem:[%s230 + $0x1a4] sm:$0xf]
        %v348 = vld [vmem:[%s230 + $0x1a8] sm:$0xf]
        %v349 = vld [vmem:[%s230 + $0x1ac] sm:$0xf]
        %v350 = vld [vmem:[%s230 + $0x1b0] sm:$0xf]
        %v351 = vld [vmem:[%s230 + $0x1b4] sm:$0xf]
        %v352 = vld [vmem:[%s230 + $0x1b8] sm:$0xf]
        %v353 = vld [vmem:[%s230 + $0x1bc] sm:$0xf]
        %v354 = vld [vmem:[%s230 + $0x1c0] sm:$0xf]
        %v355 = vld [vmem:[%s230 + $0x1c4] sm:$0xf]
        %v356 = vld [vmem:[%s230 + $0x1c8] sm:$0xf]
        %v357 = vld [vmem:[%s230 + $0x1cc] sm:$0xf]
        %v358 = vld [vmem:[%s230 + $0x1d0] sm:$0xf]
        %v359 = vld [vmem:[%s230 + $0x1d4] sm:$0xf]
        %v360 = vld [vmem:[%s230 + $0x1d8] sm:$0xf]
        %v361 = vld [vmem:[%s230 + $0x1dc] sm:$0xf]
        %v362 = vld [vmem:[%s230 + $0x1e0] sm:$0xf]
        %v363 = vld [vmem:[%s230 + $0x1e4] sm:$0xf]
        %v364 = vld [vmem:[%s230 + $0x1e8] sm:$0xf]
        %v365 = vld [vmem:[%s230 + $0x1ec] sm:$0xf]
        %v366 = vld [vmem:[%s230 + $0x1f0] sm:$0xf]
        %v367 = vld [vmem:[%s230 + $0x1f4] sm:$0xf]
        %v368 = vld [vmem:[%s230 + $0x1f8] sm:$0xf]
        %v369 = vld [vmem:[%s230 + $0x1fc] sm:$0xf]
        %v370 = vld [vmem:[%s230 + $0x200] sm:$0xf]
        %v371 = vld [vmem:[%s230 + $0x204] sm:$0xf]
        %v372 = vld [vmem:[%s230 + $0x208] sm:$0xf]
        %v373 = vld [vmem:[%s230 + $0x20c] sm:$0xf]
        %v374 = vld [vmem:[%s230 + $0x210] sm:$0xf]
        %v375 = vld [vmem:[%s230 + $0x214] sm:$0xf]
        %v376 = vld [vmem:[%s230 + $0x218] sm:$0xf]
        %v377 = vld [vmem:[%s230 + $0x21c] sm:$0xf]
        %v378 = vld [vmem:[%s230 + $0x220] sm:$0xf]
        %v379 = vld [vmem:[%s230 + $0x224] sm:$0xf]
        %v380 = vld [vmem:[%s230 + $0x228] sm:$0xf]
        %v381 = vld [vmem:[%s230 + $0x22c] sm:$0xf]
        %v382 = vld [vmem:[%s230 + $0x230] sm:$0xf]
        %v383 = vld [vmem:[%s230 + $0x234] sm:$0xf]
        %v384 = vld [vmem:[%s230 + $0x238] sm:$0xf]
        %v385 = vld [vmem:[%s230 + $0x23c] sm:$0xf]
        %v386 = vld [vmem:[%s230 + $0x240] sm:$0xf]
        %v387 = vld [vmem:[%s230 + $0x244] sm:$0xf]
        %v388 = vld [vmem:[%s230 + $0x248] sm:$0xf]
        %v389 = vld [vmem:[%s230 + $0x24c] sm:$0xf]
        %v390 = vld [vmem:[%s230 + $0x250] sm:$0xf]
        %v391 = vld [vmem:[%s230 + $0x254] sm:$0xf]
        %v392 = vld [vmem:[%s230 + $0x258] sm:$0xf]
        %v393 = vld [vmem:[%s230 + $0x25c] sm:$0xf]
        %v394 = vld [vmem:[%s230 + $0x260] sm:$0xf]
        %v395 = vld [vmem:[%s230 + $0x264] sm:$0xf]
        %v396 = vld [vmem:[%s230 + $0x268] sm:$0xf]
        %v397 = vld [vmem:[%s230 + $0x26c] sm:$0xf]
        %v398 = vld [vmem:[%s230 + $0x270] sm:$0xf]
        %v399 = vld [vmem:[%s230 + $0x274] sm:$0xf]
        %v400 = vld [vmem:[%s230 + $0x278] sm:$0xf]
        %v401 = vld [vmem:[%s230 + $0x27c] sm:$0xf]
        %v402 = vld [vmem:[%s230 + $0x280] sm:$0xf]
        %v403 = vld [vmem:[%s230 + $0x284] sm:$0xf]
        %v404 = vld [vmem:[%s230 + $0x288] sm:$0xf]
        %v405 = vld [vmem:[%s230 + $0x28c] sm:$0xf]
        %v406 = vld [vmem:[%s230 + $0x290] sm:$0xf]
        %v407 = vld [vmem:[%s230 + $0x294] sm:$0xf]
        %v408 = vld [vmem:[%s230 + $0x298] sm:$0xf]
        %v409 = vld [vmem:[%s230 + $0x29c] sm:$0xf]
        %v410 = vld [vmem:[%s230 + $0x2a0] sm:$0xf]
        %v411 = vld [vmem:[%s230 + $0x2a4] sm:$0xf]
        %v412 = vld [vmem:[%s230 + $0x2a8] sm:$0xf]
        %v413 = vld [vmem:[%s230 + $0x2ac] sm:$0xf]
        %v414 = vld [vmem:[%s230 + $0x2b0] sm:$0xf]
        %v415 = vld [vmem:[%s230 + $0x2b4] sm:$0xf]
        %v416 = vld [vmem:[%s230 + $0x2b8] sm:$0xf]
        %v417 = vld [vmem:[%s230 + $0x2bc] sm:$0xf]
        %v418 = vld [vmem:[%s230 + $0x2c0] sm:$0xf]
        %v419 = vld [vmem:[%s230 + $0x2c4] sm:$0xf]
        %v420 = vld [vmem:[%s230 + $0x2c8] sm:$0xf]
        %v421 = vld [vmem:[%s230 + $0x2cc] sm:$0xf]
        %v422 = vld [vmem:[%s230 + $0x2d0] sm:$0xf]
        %v423 = vld [vmem:[%s230 + $0x2d4] sm:$0xf]
        %v424 = vld [vmem:[%s230 + $0x2d8] sm:$0xf]
        %v425 = vld [vmem:[%s230 + $0x2dc] sm:$0xf]
        %v426 = vld [vmem:[%s230 + $0x2e0] sm:$0xf]
        %v427 = vld [vmem:[%s230 + $0x2e4] sm:$0xf]
        %v428 = vld [vmem:[%s230 + $0x2e8] sm:$0xf]
        %v429 = vld [vmem:[%s230 + $0x2ec] sm:$0xf]
        %v430 = vld [vmem:[%s230 + $0x2f0] sm:$0xf]
        %v431 = vld [vmem:[%s230 + $0x2f4] sm:$0xf]
        %v432 = vld [vmem:[%s230 + $0x2f8] sm:$0xf]
        %v433 = vld [vmem:[%s230 + $0x2fc] sm:$0xf]
        %v434 = vld [vmem:[%s230 + $0x300] sm:$0xf]
        %v435 = vld [vmem:[%s230 + $0x304] sm:$0xf]
        %v436 = vld [vmem:[%s230 + $0x308] sm:$0xf]
        %v437 = vld [vmem:[%s230 + $0x30c] sm:$0xf]
        %v438 = vld [vmem:[%s230 + $0x310] sm:$0xf]
        %v439 = vld [vmem:[%s230 + $0x314] sm:$0xf]
        %v440 = vld [vmem:[%s230 + $0x318] sm:$0xf]
        %v441 = vld [vmem:[%s230 + $0x31c] sm:$0xf]
        %v442 = vld [vmem:[%s230 + $0x320] sm:$0xf]
        %v443 = vld [vmem:[%s230 + $0x324] sm:$0xf]
        %v444 = vld [vmem:[%s230 + $0x328] sm:$0xf]
        %v445 = vld [vmem:[%s230 + $0x32c] sm:$0xf]
        %v446 = vld [vmem:[%s230 + $0x330] sm:$0xf]
        %v447 = vld [vmem:[%s230 + $0x334] sm:$0xf]
        %v448 = vld [vmem:[%s230 + $0x338] sm:$0xf]
        %v449 = vld [vmem:[%s230 + $0x33c] sm:$0xf]
        %v450 = vld [vmem:[%s230 + $0x340] sm:$0xf]
        %v451 = vld [vmem:[%s230 + $0x344] sm:$0xf]
        %v452 = vld [vmem:[%s230 + $0x348] sm:$0xf]
        %v453 = vld [vmem:[%s230 + $0x34c] sm:$0xf]
        %v454 = vld [vmem:[%s230 + $0x350] sm:$0xf]
        %v455 = vld [vmem:[%s230 + $0x354] sm:$0xf]
        %v456 = vld [vmem:[%s230 + $0x358] sm:$0xf]
        %v457 = vld [vmem:[%s230 + $0x35c] sm:$0xf]
        %v458 = vld [vmem:[%s230 + $0x360] sm:$0xf]
        %v459 = vld [vmem:[%s230 + $0x364] sm:$0xf]
        %v460 = vld [vmem:[%s230 + $0x368] sm:$0xf]
        %v461 = vld [vmem:[%s230 + $0x36c] sm:$0xf]
        %v462 = vld [vmem:[%s230 + $0x370] sm:$0xf]
        %v463 = vld [vmem:[%s230 + $0x374] sm:$0xf]
        %v464 = vld [vmem:[%s230 + $0x378] sm:$0xf]
        %v465 = vld [vmem:[%s230 + $0x37c] sm:$0xf]
        %v466 = vld [vmem:[%s230 + $0x380] sm:$0xf]
        %v467 = vld [vmem:[%s230 + $0x384] sm:$0xf]
        %v468 = vld [vmem:[%s230 + $0x388] sm:$0xf]
        %v469 = vld [vmem:[%s230 + $0x38c] sm:$0xf]
        %v470 = vld [vmem:[%s230 + $0x390] sm:$0xf]
        %v471 = vld [vmem:[%s230 + $0x394] sm:$0xf]
        %v472 = vld [vmem:[%s230 + $0x398] sm:$0xf]
        %v473 = vld [vmem:[%s230 + $0x39c] sm:$0xf]
        %v474 = vld [vmem:[%s230 + $0x3a0] sm:$0xf]
        %v475 = vld [vmem:[%s230 + $0x3a4] sm:$0xf]
        %v476 = vld [vmem:[%s230 + $0x3a8] sm:$0xf]
        %v477 = vld [vmem:[%s230 + $0x3ac] sm:$0xf]
        %v478 = vld [vmem:[%s230 + $0x3b0] sm:$0xf]
        %v479 = vld [vmem:[%s230 + $0x3b4] sm:$0xf]
        %v480 = vld [vmem:[%s230 + $0x3b8] sm:$0xf]
        %v481 = vld [vmem:[%s230 + $0x3bc] sm:$0xf]
        %v482 = vld [vmem:[%s230 + $0x3c0] sm:$0xf]
        %v483 = vld [vmem:[%s230 + $0x3c4] sm:$0xf]
        %v484 = vld [vmem:[%s230 + $0x3c8] sm:$0xf]
        %v485 = vld [vmem:[%s230 + $0x3cc] sm:$0xf]
        %v486 = vld [vmem:[%s230 + $0x3d0] sm:$0xf]
        %v487 = vld [vmem:[%s230 + $0x3d4] sm:$0xf]
        %v488 = vld [vmem:[%s230 + $0x3d8] sm:$0xf]
        %v489 = vld [vmem:[%s230 + $0x3dc] sm:$0xf]
        %v490 = vld [vmem:[%s230 + $0x3e0] sm:$0xf]
        %v491 = vld [vmem:[%s230 + $0x3e4] sm:$0xf]
        %v492 = vld [vmem:[%s230 + $0x3e8] sm:$0xf]
        %v493 = vld [vmem:[%s230 + $0x3ec] sm:$0xf]
        %v494 = vld [vmem:[%s230 + $0x3f0] sm:$0xf]
        %v495 = vld [vmem:[%s230 + $0x3f4] sm:$0xf]
        %v496 = vld [vmem:[%s230 + $0x3f8] sm:$0xf]
        %v497 = vld [vmem:[%s230 + $0x3fc] sm:$0xf]
        %v500 = vcombine.high %v240, %v240
        %v502 = vunpack.c.l.s4 1966171168
        %v503 = vunpack.c.0.s8 %v502
        %v504 = vlaneseq
        %v505 = vshrl.u32 %v504, 7
        %v506 = vsub.s32 %v503, %v505
        %v507 = vrot.slane %v240, %v506
        %v509 = vunpack.c.l.s4 1966171168
        %v510 = vunpack.c.0.s8 %v509
        %v511 = vlaneseq
        %v512 = vshrl.u32 %v511, 7
        %v513 = vsub.s32 %v510, %v512
        %v514 = vrot.slane %v500, %v513
        %v515 = vcombine.high %v507, %v507
        %v516 = vcombine.high %v514, %v514
        %v518 = vunpack.c.l.s4 1966171168
        %v519 = vunpack.c.0.s8 %v518
        %v520 = vlaneseq
        %v521 = vshrl.u32 %v520, 7
        %v522 = vsub.s32 %v519, %v521
        %v523 = vrot.slane %v507, %v522
        %v525 = vunpack.c.l.s4 1966171168
        %v526 = vunpack.c.0.s8 %v525
        %v527 = vlaneseq
        %v528 = vshrl.u32 %v527, 7
        %v529 = vsub.s32 %v526, %v528
        %v530 = vrot.slane %v514, %v529
        %v532 = vunpack.c.l.s4 1966171168
        %v533 = vunpack.c.0.s8 %v532
        %v534 = vlaneseq
        %v535 = vshrl.u32 %v534, 7
        %v536 = vsub.s32 %v533, %v535
        %v537 = vrot.slane %v515, %v536
        %v539 = vunpack.c.l.s4 1966171168
        %v540 = vunpack.c.0.s8 %v539
        %v541 = vlaneseq
        %v542 = vshrl.u32 %v541, 7
        %v543 = vsub.s32 %v540, %v542
        %v544 = vrot.slane %v516, %v543
        %v545 = vcombine.high %v523, %v523
        %v546 = vcombine.high %v530, %v530
        %v547 = vcombine.high %v537, %v537
        %v548 = vcombine.high %v544, %v544
        %v549 = vcombine.high %v241, %v241
        %v551 = vunpack.c.l.s4 1966171168
        %v552 = vunpack.c.0.s8 %v551
        %v553 = vlaneseq
        %v554 = vshrl.u32 %v553, 7
        %v555 = vsub.s32 %v552, %v554
        %v556 = vrot.slane %v241, %v555
        %v558 = vunpack.c.l.s4 1966171168
        %v559 = vunpack.c.0.s8 %v558
        %v560 = vlaneseq
        %v561 = vshrl.u32 %v560, 7
        %v562 = vsub.s32 %v559, %v561
        %v563 = vrot.slane %v549, %v562
        %v564 = vcombine.high %v556, %v556
        %v565 = vcombine.high %v563, %v563
        %v567 = vunpack.c.l.s4 1966171168
        %v568 = vunpack.c.0.s8 %v567
        %v569 = vlaneseq
        %v570 = vshrl.u32 %v569, 7
        %v571 = vsub.s32 %v568, %v570
        %v572 = vrot.slane %v556, %v571
        %v574 = vunpack.c.l.s4 1966171168
        %v575 = vunpack.c.0.s8 %v574
        %v576 = vlaneseq
        %v577 = vshrl.u32 %v576, 7
        %v578 = vsub.s32 %v575, %v577
        %v579 = vrot.slane %v563, %v578
        %v581 = vunpack.c.l.s4 1966171168
        %v582 = vunpack.c.0.s8 %v581
        %v583 = vlaneseq
        %v584 = vshrl.u32 %v583, 7
        %v585 = vsub.s32 %v582, %v584
        %v586 = vrot.slane %v564, %v585
        %v588 = vunpack.c.l.s4 1966171168
        %v589 = vunpack.c.0.s8 %v588
        %v590 = vlaneseq
        %v591 = vshrl.u32 %v590, 7
        %v592 = vsub.s32 %v589, %v591
        %v593 = vrot.slane %v565, %v592
        %v594 = vcombine.high %v572, %v572
        %v595 = vcombine.high %v579, %v579
        %v596 = vcombine.high %v586, %v586
        %v597 = vcombine.high %v593, %v593
        %v870 = vunpack.c.l.b16 %v242
        %v871 = vunpack.c.l.b16 %v243
        %v872 = vunpack.c.l.b16 %v244
        %v873 = vunpack.c.l.b16 %v245
        %v874 = vunpack.c.l.b16 %v246
        %v875 = vunpack.c.l.b16 %v247
        %v876 = vunpack.c.l.b16 %v248
        %v877 = vunpack.c.l.b16 %v249
        %v878 = vunpack.c.l.b16 %v250
        %v879 = vunpack.c.l.b16 %v251
        %v880 = vunpack.c.l.b16 %v252
        %v881 = vunpack.c.l.b16 %v253
        %v882 = vunpack.c.l.b16 %v254
        %v883 = vunpack.c.l.b16 %v255
        %v884 = vunpack.c.l.b16 %v256
        %v885 = vunpack.c.l.b16 %v257
        %v886 = vunpack.c.l.b16 %v258
        %v887 = vunpack.c.l.b16 %v259
        %v888 = vunpack.c.l.b16 %v260
        %v889 = vunpack.c.l.b16 %v261
        %v890 = vunpack.c.l.b16 %v262
        %v891 = vunpack.c.l.b16 %v263
        %v892 = vunpack.c.l.b16 %v264
        %v893 = vunpack.c.l.b16 %v265
        %v894 = vunpack.c.l.b16 %v266
        %v895 = vunpack.c.l.b16 %v267
        %v896 = vunpack.c.l.b16 %v268
        %v897 = vunpack.c.l.b16 %v269
        %v898 = vunpack.c.l.b16 %v270
        %v899 = vunpack.c.l.b16 %v271
        %v900 = vunpack.c.l.b16 %v272
        %v901 = vunpack.c.l.b16 %v273
        %v902 = vunpack.c.l.b16 %v274
        %v903 = vunpack.c.l.b16 %v275
        %v904 = vunpack.c.l.b16 %v276
        %v905 = vunpack.c.l.b16 %v277
        %v906 = vunpack.c.l.b16 %v278
        %v907 = vunpack.c.l.b16 %v279
        %v908 = vunpack.c.l.b16 %v280
        %v909 = vunpack.c.l.b16 %v281
        %v910 = vunpack.c.l.b16 %v282
        %v911 = vunpack.c.l.b16 %v283
        %v912 = vunpack.c.l.b16 %v284
        %v913 = vunpack.c.l.b16 %v285
        %v914 = vunpack.c.l.b16 %v286
        %v915 = vunpack.c.l.b16 %v287
        %v916 = vunpack.c.l.b16 %v288
        %v917 = vunpack.c.l.b16 %v289
        %v918 = vunpack.c.l.b16 %v290
        %v919 = vunpack.c.l.b16 %v291
        %v920 = vunpack.c.l.b16 %v292
        %v921 = vunpack.c.l.b16 %v293
        %v922 = vunpack.c.l.b16 %v294
        %v923 = vunpack.c.l.b16 %v295
        %v924 = vunpack.c.l.b16 %v296
        %v925 = vunpack.c.l.b16 %v297
        %v926 = vunpack.c.l.b16 %v298
        %v927 = vunpack.c.l.b16 %v299
        %v928 = vunpack.c.l.b16 %v300
        %v929 = vunpack.c.l.b16 %v301
        %v930 = vunpack.c.l.b16 %v302
        %v931 = vunpack.c.l.b16 %v303
        %v932 = vunpack.c.l.b16 %v304
        %v933 = vunpack.c.l.b16 %v305
        %v934 = vunpack.c.l.b16 %v306
        %v935 = vunpack.c.l.b16 %v307
        %v936 = vunpack.c.l.b16 %v308
        %v937 = vunpack.c.l.b16 %v309
        %v938 = vunpack.c.l.b16 %v310
        %v939 = vunpack.c.l.b16 %v311
        %v940 = vunpack.c.l.b16 %v312
        %v941 = vunpack.c.l.b16 %v313
        %v942 = vunpack.c.l.b16 %v314
        %v943 = vunpack.c.l.b16 %v315
        %v944 = vunpack.c.l.b16 %v316
        %v945 = vunpack.c.l.b16 %v317
        %v946 = vunpack.c.l.b16 %v318
        %v947 = vunpack.c.l.b16 %v319
        %v948 = vunpack.c.l.b16 %v320
        %v949 = vunpack.c.l.b16 %v321
        %v950 = vunpack.c.l.b16 %v322
        %v951 = vunpack.c.l.b16 %v323
        %v952 = vunpack.c.l.b16 %v324
        %v953 = vunpack.c.l.b16 %v325
        %v954 = vunpack.c.l.b16 %v326
        %v955 = vunpack.c.l.b16 %v327
        %v956 = vunpack.c.l.b16 %v328
        %v957 = vunpack.c.l.b16 %v329
        %v958 = vunpack.c.l.b16 %v330
        %v959 = vunpack.c.l.b16 %v331
        %v960 = vunpack.c.l.b16 %v332
        %v961 = vunpack.c.l.b16 %v333
        %v962 = vunpack.c.l.b16 %v334
        %v963 = vunpack.c.l.b16 %v335
        %v964 = vunpack.c.l.b16 %v336
        %v965 = vunpack.c.l.b16 %v337
        %v966 = vunpack.c.l.b16 %v338
        %v967 = vunpack.c.l.b16 %v339
        %v968 = vunpack.c.l.b16 %v340
        %v969 = vunpack.c.l.b16 %v341
        %v970 = vunpack.c.l.b16 %v342
        %v971 = vunpack.c.l.b16 %v343
        %v972 = vunpack.c.l.b16 %v344
        %v973 = vunpack.c.l.b16 %v345
        %v974 = vunpack.c.l.b16 %v346
        %v975 = vunpack.c.l.b16 %v347
        %v976 = vunpack.c.l.b16 %v348
        %v977 = vunpack.c.l.b16 %v349
        %v978 = vunpack.c.l.b16 %v350
        %v979 = vunpack.c.l.b16 %v351
        %v980 = vunpack.c.l.b16 %v352
        %v981 = vunpack.c.l.b16 %v353
        %v982 = vunpack.c.l.b16 %v354
        %v983 = vunpack.c.l.b16 %v355
        %v984 = vunpack.c.l.b16 %v356
        %v985 = vunpack.c.l.b16 %v357
        %v986 = vunpack.c.l.b16 %v358
        %v987 = vunpack.c.l.b16 %v359
        %v988 = vunpack.c.l.b16 %v360
        %v989 = vunpack.c.l.b16 %v361
        %v990 = vunpack.c.l.b16 %v362
        %v991 = vunpack.c.l.b16 %v363
        %v992 = vunpack.c.l.b16 %v364
        %v993 = vunpack.c.l.b16 %v365
        %v994 = vunpack.c.l.b16 %v366
        %v995 = vunpack.c.l.b16 %v367
        %v996 = vunpack.c.l.b16 %v368
        %v997 = vunpack.c.l.b16 %v369
        %v998 = vunpack.c.l.b16 %v370
        %v999 = vunpack.c.l.b16 %v371
        %v1000 = vunpack.c.l.b16 %v372
        %v1001 = vunpack.c.l.b16 %v373
        %v1002 = vunpack.c.l.b16 %v374
        %v1003 = vunpack.c.l.b16 %v375
        %v1004 = vunpack.c.l.b16 %v376
        %v1005 = vunpack.c.l.b16 %v377
        %v1006 = vunpack.c.l.b16 %v378
        %v1007 = vunpack.c.l.b16 %v379
        %v1008 = vunpack.c.l.b16 %v380
        %v1009 = vunpack.c.l.b16 %v381
        %v1010 = vunpack.c.l.b16 %v382
        %v1011 = vunpack.c.l.b16 %v383
        %v1012 = vunpack.c.l.b16 %v384
        %v1013 = vunpack.c.l.b16 %v385
        %v1014 = vunpack.c.l.b16 %v386
        %v1015 = vunpack.c.l.b16 %v387
        %v1016 = vunpack.c.l.b16 %v388
        %v1017 = vunpack.c.l.b16 %v389
        %v1018 = vunpack.c.l.b16 %v390
        %v1019 = vunpack.c.l.b16 %v391
        %v1020 = vunpack.c.l.b16 %v392
        %v1021 = vunpack.c.l.b16 %v393
        %v1022 = vunpack.c.l.b16 %v394
        %v1023 = vunpack.c.l.b16 %v395
        %v1024 = vunpack.c.l.b16 %v396
        %v1025 = vunpack.c.l.b16 %v397
        %v1026 = vunpack.c.l.b16 %v398
        %v1027 = vunpack.c.l.b16 %v399
        %v1028 = vunpack.c.l.b16 %v400
        %v1029 = vunpack.c.l.b16 %v401
        %v1030 = vunpack.c.l.b16 %v402
        %v1031 = vunpack.c.l.b16 %v403
        %v1032 = vunpack.c.l.b16 %v404
        %v1033 = vunpack.c.l.b16 %v405
        %v1034 = vunpack.c.l.b16 %v406
        %v1035 = vunpack.c.l.b16 %v407
        %v1036 = vunpack.c.l.b16 %v408
        %v1037 = vunpack.c.l.b16 %v409
        %v1038 = vunpack.c.l.b16 %v410
        %v1039 = vunpack.c.l.b16 %v411
        %v1040 = vunpack.c.l.b16 %v412
        %v1041 = vunpack.c.l.b16 %v413
        %v1042 = vunpack.c.l.b16 %v414
        %v1043 = vunpack.c.l.b16 %v415
        %v1044 = vunpack.c.l.b16 %v416
        %v1045 = vunpack.c.l.b16 %v417
        %v1046 = vunpack.c.l.b16 %v418
        %v1047 = vunpack.c.l.b16 %v419
        %v1048 = vunpack.c.l.b16 %v420
        %v1049 = vunpack.c.l.b16 %v421
        %v1050 = vunpack.c.l.b16 %v422
        %v1051 = vunpack.c.l.b16 %v423
        %v1052 = vunpack.c.l.b16 %v424
        %v1053 = vunpack.c.l.b16 %v425
        %v1054 = vunpack.c.l.b16 %v426
        %v1055 = vunpack.c.l.b16 %v427
        %v1056 = vunpack.c.l.b16 %v428
        %v1057 = vunpack.c.l.b16 %v429
        %v1058 = vunpack.c.l.b16 %v430
        %v1059 = vunpack.c.l.b16 %v431
        %v1060 = vunpack.c.l.b16 %v432
        %v1061 = vunpack.c.l.b16 %v433
        %v1062 = vunpack.c.l.b16 %v434
        %v1063 = vunpack.c.l.b16 %v435
        %v1064 = vunpack.c.l.b16 %v436
        %v1065 = vunpack.c.l.b16 %v437
        %v1066 = vunpack.c.l.b16 %v438
        %v1067 = vunpack.c.l.b16 %v439
        %v1068 = vunpack.c.l.b16 %v440
        %v1069 = vunpack.c.l.b16 %v441
        %v1070 = vunpack.c.l.b16 %v442
        %v1071 = vunpack.c.l.b16 %v443
        %v1072 = vunpack.c.l.b16 %v444
        %v1073 = vunpack.c.l.b16 %v445
        %v1074 = vunpack.c.l.b16 %v446
        %v1075 = vunpack.c.l.b16 %v447
        %v1076 = vunpack.c.l.b16 %v448
        %v1077 = vunpack.c.l.b16 %v449
        %v1078 = vunpack.c.l.b16 %v450
        %v1079 = vunpack.c.l.b16 %v451
        %v1080 = vunpack.c.l.b16 %v452
        %v1081 = vunpack.c.l.b16 %v453
        %v1082 = vunpack.c.l.b16 %v454
        %v1083 = vunpack.c.l.b16 %v455
        %v1084 = vunpack.c.l.b16 %v456
        %v1085 = vunpack.c.l.b16 %v457
        %v1086 = vunpack.c.l.b16 %v458
        %v1087 = vunpack.c.l.b16 %v459
        %v1088 = vunpack.c.l.b16 %v460
        %v1089 = vunpack.c.l.b16 %v461
        %v1090 = vunpack.c.l.b16 %v462
        %v1091 = vunpack.c.l.b16 %v463
        %v1092 = vunpack.c.l.b16 %v464
        %v1093 = vunpack.c.l.b16 %v465
        %v1094 = vunpack.c.l.b16 %v466
        %v1095 = vunpack.c.l.b16 %v467
        %v1096 = vunpack.c.l.b16 %v468
        %v1097 = vunpack.c.l.b16 %v469
        %v1098 = vunpack.c.l.b16 %v470
        %v1099 = vunpack.c.l.b16 %v471
        %v1100 = vunpack.c.l.b16 %v472
        %v1101 = vunpack.c.l.b16 %v473
        %v1102 = vunpack.c.l.b16 %v474
        %v1103 = vunpack.c.l.b16 %v475
        %v1104 = vunpack.c.l.b16 %v476
        %v1105 = vunpack.c.l.b16 %v477
        %v1106 = vunpack.c.l.b16 %v478
        %v1107 = vunpack.c.l.b16 %v479
        %v1108 = vunpack.c.l.b16 %v480
        %v1109 = vunpack.c.l.b16 %v481
        %v1110 = vunpack.c.l.b16 %v482
        %v1111 = vunpack.c.l.b16 %v483
        %v1112 = vunpack.c.l.b16 %v484
        %v1113 = vunpack.c.l.b16 %v485
        %v1114 = vunpack.c.l.b16 %v486
        %v1115 = vunpack.c.l.b16 %v487
        %v1116 = vunpack.c.l.b16 %v488
        %v1117 = vunpack.c.l.b16 %v489
        %v1118 = vunpack.c.l.b16 %v490
        %v1119 = vunpack.c.l.b16 %v491
        %v1120 = vunpack.c.l.b16 %v492
        %v1121 = vunpack.c.l.b16 %v493
        %v1122 = vunpack.c.l.b16 %v494
        %v1123 = vunpack.c.l.b16 %v495
        %v1124 = vunpack.c.l.b16 %v496
        %v1125 = vunpack.c.l.b16 %v497
        %v1126 = vpack.c.b16 %v871, %v870
        %v1127 = vpack.c.b16 %v873, %v872
        %v1128 = vpack.c.b16 %v875, %v874
        %v1129 = vpack.c.b16 %v877, %v876
        %v1130 = vpack.c.b16 %v879, %v878
        %v1131 = vpack.c.b16 %v881, %v880
        %v1132 = vpack.c.b16 %v883, %v882
        %v1133 = vpack.c.b16 %v885, %v884
        %v1134 = vpack.c.b16 %v887, %v886
        %v1135 = vpack.c.b16 %v889, %v888
        %v1136 = vpack.c.b16 %v891, %v890
        %v1137 = vpack.c.b16 %v893, %v892
        %v1138 = vpack.c.b16 %v895, %v894
        %v1139 = vpack.c.b16 %v897, %v896
        %v1140 = vpack.c.b16 %v899, %v898
        %v1141 = vpack.c.b16 %v901, %v900
        %v1142 = vpack.c.b16 %v903, %v902
        %v1143 = vpack.c.b16 %v905, %v904
        %v1144 = vpack.c.b16 %v907, %v906
        %v1145 = vpack.c.b16 %v909, %v908
        %v1146 = vpack.c.b16 %v911, %v910
        %v1147 = vpack.c.b16 %v913, %v912
        %v1148 = vpack.c.b16 %v915, %v914
        %v1149 = vpack.c.b16 %v917, %v916
        %v1150 = vpack.c.b16 %v919, %v918
        %v1151 = vpack.c.b16 %v921, %v920
        %v1152 = vpack.c.b16 %v923, %v922
        %v1153 = vpack.c.b16 %v925, %v924
        %v1154 = vpack.c.b16 %v927, %v926
        %v1155 = vpack.c.b16 %v929, %v928
        %v1156 = vpack.c.b16 %v931, %v930
        %v1157 = vpack.c.b16 %v933, %v932
        %v1158 = vpack.c.b16 %v935, %v934
        %v1159 = vpack.c.b16 %v937, %v936
        %v1160 = vpack.c.b16 %v939, %v938
        %v1161 = vpack.c.b16 %v941, %v940
        %v1162 = vpack.c.b16 %v943, %v942
        %v1163 = vpack.c.b16 %v945, %v944
        %v1164 = vpack.c.b16 %v947, %v946
        %v1165 = vpack.c.b16 %v949, %v948
        %v1166 = vpack.c.b16 %v951, %v950
        %v1167 = vpack.c.b16 %v953, %v952
        %v1168 = vpack.c.b16 %v955, %v954
        %v1169 = vpack.c.b16 %v957, %v956
        %v1170 = vpack.c.b16 %v959, %v958
        %v1171 = vpack.c.b16 %v961, %v960
        %v1172 = vpack.c.b16 %v963, %v962
        %v1173 = vpack.c.b16 %v965, %v964
        %v1174 = vpack.c.b16 %v967, %v966
        %v1175 = vpack.c.b16 %v969, %v968
        %v1176 = vpack.c.b16 %v971, %v970
        %v1177 = vpack.c.b16 %v973, %v972
        %v1178 = vpack.c.b16 %v975, %v974
        %v1179 = vpack.c.b16 %v977, %v976
        %v1180 = vpack.c.b16 %v979, %v978
        %v1181 = vpack.c.b16 %v981, %v980
        %v1182 = vpack.c.b16 %v983, %v982
        %v1183 = vpack.c.b16 %v985, %v984
        %v1184 = vpack.c.b16 %v987, %v986
        %v1185 = vpack.c.b16 %v989, %v988
        %v1186 = vpack.c.b16 %v991, %v990
        %v1187 = vpack.c.b16 %v993, %v992
        %v1188 = vpack.c.b16 %v995, %v994
        %v1189 = vpack.c.b16 %v997, %v996
        %v1190 = vpack.c.b16 %v999, %v998
        %v1191 = vpack.c.b16 %v1001, %v1000
        %v1192 = vpack.c.b16 %v1003, %v1002
        %v1193 = vpack.c.b16 %v1005, %v1004
        %v1194 = vpack.c.b16 %v1007, %v1006
        %v1195 = vpack.c.b16 %v1009, %v1008
        %v1196 = vpack.c.b16 %v1011, %v1010
        %v1197 = vpack.c.b16 %v1013, %v1012
        %v1198 = vpack.c.b16 %v1015, %v1014
        %v1199 = vpack.c.b16 %v1017, %v1016
        %v1200 = vpack.c.b16 %v1019, %v1018
        %v1201 = vpack.c.b16 %v1021, %v1020
        %v1202 = vpack.c.b16 %v1023, %v1022
        %v1203 = vpack.c.b16 %v1025, %v1024
        %v1204 = vpack.c.b16 %v1027, %v1026
        %v1205 = vpack.c.b16 %v1029, %v1028
        %v1206 = vpack.c.b16 %v1031, %v1030
        %v1207 = vpack.c.b16 %v1033, %v1032
        %v1208 = vpack.c.b16 %v1035, %v1034
        %v1209 = vpack.c.b16 %v1037, %v1036
        %v1210 = vpack.c.b16 %v1039, %v1038
        %v1211 = vpack.c.b16 %v1041, %v1040
        %v1212 = vpack.c.b16 %v1043, %v1042
        %v1213 = vpack.c.b16 %v1045, %v1044
        %v1214 = vpack.c.b16 %v1047, %v1046
        %v1215 = vpack.c.b16 %v1049, %v1048
        %v1216 = vpack.c.b16 %v1051, %v1050
        %v1217 = vpack.c.b16 %v1053, %v1052
        %v1218 = vpack.c.b16 %v1055, %v1054
        %v1219 = vpack.c.b16 %v1057, %v1056
        %v1220 = vpack.c.b16 %v1059, %v1058
        %v1221 = vpack.c.b16 %v1061, %v1060
        %v1222 = vpack.c.b16 %v1063, %v1062
        %v1223 = vpack.c.b16 %v1065, %v1064
        %v1224 = vpack.c.b16 %v1067, %v1066
        %v1225 = vpack.c.b16 %v1069, %v1068
        %v1226 = vpack.c.b16 %v1071, %v1070
        %v1227 = vpack.c.b16 %v1073, %v1072
        %v1228 = vpack.c.b16 %v1075, %v1074
        %v1229 = vpack.c.b16 %v1077, %v1076
        %v1230 = vpack.c.b16 %v1079, %v1078
        %v1231 = vpack.c.b16 %v1081, %v1080
        %v1232 = vpack.c.b16 %v1083, %v1082
        %v1233 = vpack.c.b16 %v1085, %v1084
        %v1234 = vpack.c.b16 %v1087, %v1086
        %v1235 = vpack.c.b16 %v1089, %v1088
        %v1236 = vpack.c.b16 %v1091, %v1090
        %v1237 = vpack.c.b16 %v1093, %v1092
        %v1238 = vpack.c.b16 %v1095, %v1094
        %v1239 = vpack.c.b16 %v1097, %v1096
        %v1240 = vpack.c.b16 %v1099, %v1098
        %v1241 = vpack.c.b16 %v1101, %v1100
        %v1242 = vpack.c.b16 %v1103, %v1102
        %v1243 = vpack.c.b16 %v1105, %v1104
        %v1244 = vpack.c.b16 %v1107, %v1106
        %v1245 = vpack.c.b16 %v1109, %v1108
        %v1246 = vpack.c.b16 %v1111, %v1110
        %v1247 = vpack.c.b16 %v1113, %v1112
        %v1248 = vpack.c.b16 %v1115, %v1114
        %v1249 = vpack.c.b16 %v1117, %v1116
        %v1250 = vpack.c.b16 %v1119, %v1118
        %v1251 = vpack.c.b16 %v1121, %v1120
        %v1252 = vpack.c.b16 %v1123, %v1122
        %v1253 = vpack.c.b16 %v1125, %v1124
        %1382 = vmatprep.subr.bf16.mxu0 0
        %1383 = vmatpush1.bf16.msra.mxu0 %v1126
        %1384 = vmatprep.subr.bf16.mxu0 0
        %1385 = vmatpush1.bf16.msra.mxu0 %v1127
        %1386 = vmatprep.subr.bf16.mxu0 0
        %1387 = vmatpush1.bf16.msra.mxu0 %v1128
        %1388 = vmatprep.subr.bf16.mxu0 0
        %1389 = vmatpush1.bf16.msra.mxu0 %v1129
        %1390 = vmatprep.subr.bf16.mxu0 0
        %1391 = vmatpush1.bf16.msra.mxu0 %v1130
        %1392 = vmatprep.subr.bf16.mxu0 0
        %1393 = vmatpush1.bf16.msra.mxu0 %v1131
        %1394 = vmatprep.subr.bf16.mxu0 0
        %1395 = vmatpush1.bf16.msra.mxu0 %v1132
        %1396 = vmatprep.subr.bf16.mxu0 0
        %1397 = vmatpush1.bf16.msra.mxu0 %v1133
        %1398 = vmatprep.subr.bf16.mxu0 0
        %1399 = vmatpush1.bf16.msra.mxu0 %v1134
        %1400 = vmatprep.subr.bf16.mxu0 0
        %1401 = vmatpush1.bf16.msra.mxu0 %v1135
        %1402 = vmatprep.subr.bf16.mxu0 0
        %1403 = vmatpush1.bf16.msra.mxu0 %v1136
        %1404 = vmatprep.subr.bf16.mxu0 0
        %1405 = vmatpush1.bf16.msra.mxu0 %v1137
        %1406 = vmatprep.subr.bf16.mxu0 0
        %1407 = vmatpush1.bf16.msra.mxu0 %v1138
        %1408 = vmatprep.subr.bf16.mxu0 0
        %1409 = vmatpush1.bf16.msra.mxu0 %v1139
        %1410 = vmatprep.subr.bf16.mxu0 0
        %1411 = vmatpush1.bf16.msra.mxu0 %v1140
        %1412 = vmatprep.subr.bf16.mxu0 0
        %1413 = vmatpush1.bf16.msra.mxu0 %v1141
        %1414 = vmatprep.mubr.bf16.mxu0 %v537
        %1415 = vmatmul.mubr.bf16.gmra.mrb[0].mxu0 %v523
        %v1416 = vpop.f32.mrb[0].mxu0
        %v1417 = vadd.f32 0.0, %v1416
        %v1418 = vpop.f32.mrb[0].mxu0
        %v1419 = vpop.f32.mrb[0].mxu0
        %v1420 = vpop.f32.mrb[0].mxu0
        %1421 = vdwg.mxu0
        %1422 = vmatprep.subr.bf16.mxu0 0
        %1423 = vmatpush1.bf16.msra.mxu0 %v1142
        %1424 = vmatprep.subr.bf16.mxu0 0
        %1425 = vmatpush1.bf16.msra.mxu0 %v1143
        %1426 = vmatprep.subr.bf16.mxu0 0
        %1427 = vmatpush1.bf16.msra.mxu0 %v1144
        %1428 = vmatprep.subr.bf16.mxu0 0
        %1429 = vmatpush1.bf16.msra.mxu0 %v1145
        %1430 = vmatprep.subr.bf16.mxu0 0
        %1431 = vmatpush1.bf16.msra.mxu0 %v1146
        %1432 = vmatprep.subr.bf16.mxu0 0
        %1433 = vmatpush1.bf16.msra.mxu0 %v1147
        %1434 = vmatprep.subr.bf16.mxu0 0
        %1435 = vmatpush1.bf16.msra.mxu0 %v1148
        %1436 = vmatprep.subr.bf16.mxu0 0
        %1437 = vmatpush1.bf16.msra.mxu0 %v1149
        %1438 = vmatprep.subr.bf16.mxu0 0
        %1439 = vmatpush1.bf16.msra.mxu0 %v1150
        %1440 = vmatprep.subr.bf16.mxu0 0
        %1441 = vmatpush1.bf16.msra.mxu0 %v1151
        %1442 = vmatprep.subr.bf16.mxu0 0
        %1443 = vmatpush1.bf16.msra.mxu0 %v1152
        %1444 = vmatprep.subr.bf16.mxu0 0
        %1445 = vmatpush1.bf16.msra.mxu0 %v1153
        %1446 = vmatprep.subr.bf16.mxu0 0
        %1447 = vmatpush1.bf16.msra.mxu0 %v1154
        %1448 = vmatprep.subr.bf16.mxu0 0
        %1449 = vmatpush1.bf16.msra.mxu0 %v1155
        %1450 = vmatprep.subr.bf16.mxu0 0
        %1451 = vmatpush1.bf16.msra.mxu0 %v1156
        %1452 = vmatprep.subr.bf16.mxu0 0
        %1453 = vmatpush1.bf16.msra.mxu0 %v1157
        %1454 = vmatprep.mubr.bf16.mxu0 %v547
        %1455 = vmatmul.mubr.bf16.gmra.mrb[0].mxu0 %v545
        %v1456 = vpop.f32.mrb[0].mxu0
        %v1457 = vadd.f32 %v1417, %v1456
        %v1458 = vpop.f32.mrb[0].mxu0
        %v1459 = vpop.f32.mrb[0].mxu0
        %v1460 = vpop.f32.mrb[0].mxu0
        %1461 = vdwg.mxu0
        %1462 = vmatprep.subr.bf16.mxu0 0
        %1463 = vmatpush1.bf16.msra.mxu0 %v1158
        %1464 = vmatprep.subr.bf16.mxu0 0
        %1465 = vmatpush1.bf16.msra.mxu0 %v1159
        %1466 = vmatprep.subr.bf16.mxu0 0
        %1467 = vmatpush1.bf16.msra.mxu0 %v1160
        %1468 = vmatprep.subr.bf16.mxu0 0
        %1469 = vmatpush1.bf16.msra.mxu0 %v1161
        %1470 = vmatprep.subr.bf16.mxu0 0
        %1471 = vmatpush1.bf16.msra.mxu0 %v1162
        %1472 = vmatprep.subr.bf16.mxu0 0
        %1473 = vmatpush1.bf16.msra.mxu0 %v1163
        %1474 = vmatprep.subr.bf16.mxu0 0
        %1475 = vmatpush1.bf16.msra.mxu0 %v1164
        %1476 = vmatprep.subr.bf16.mxu0 0
        %1477 = vmatpush1.bf16.msra.mxu0 %v1165
        %1478 = vmatprep.subr.bf16.mxu0 0
        %1479 = vmatpush1.bf16.msra.mxu0 %v1166
        %1480 = vmatprep.subr.bf16.mxu0 0
        %1481 = vmatpush1.bf16.msra.mxu0 %v1167
        %1482 = vmatprep.subr.bf16.mxu0 0
        %1483 = vmatpush1.bf16.msra.mxu0 %v1168
        %1484 = vmatprep.subr.bf16.mxu0 0
        %1485 = vmatpush1.bf16.msra.mxu0 %v1169
        %1486 = vmatprep.subr.bf16.mxu0 0
        %1487 = vmatpush1.bf16.msra.mxu0 %v1170
        %1488 = vmatprep.subr.bf16.mxu0 0
        %1489 = vmatpush1.bf16.msra.mxu0 %v1171
        %1490 = vmatprep.subr.bf16.mxu0 0
        %1491 = vmatpush1.bf16.msra.mxu0 %v1172
        %1492 = vmatprep.subr.bf16.mxu0 0
        %1493 = vmatpush1.bf16.msra.mxu0 %v1173
        %1494 = vmatprep.mubr.bf16.mxu0 %v544
        %1495 = vmatmul.mubr.bf16.gmra.mrb[0].mxu0 %v530
        %v1496 = vpop.f32.mrb[0].mxu0
        %v1497 = vadd.f32 %v1457, %v1496
        %v1498 = vpop.f32.mrb[0].mxu0
        %v1499 = vpop.f32.mrb[0].mxu0
        %v1500 = vpop.f32.mrb[0].mxu0
        %1501 = vdwg.mxu0
        %1502 = vmatprep.subr.bf16.mxu0 0
        %1503 = vmatpush1.bf16.msra.mxu0 %v1174
        %1504 = vmatprep.subr.bf16.mxu0 0
        %1505 = vmatpush1.bf16.msra.mxu0 %v1175
        %1506 = vmatprep.subr.bf16.mxu0 0
        %1507 = vmatpush1.bf16.msra.mxu0 %v1176
        %1508 = vmatprep.subr.bf16.mxu0 0
        %1509 = vmatpush1.bf16.msra.mxu0 %v1177
        %1510 = vmatprep.subr.bf16.mxu0 0
        %1511 = vmatpush1.bf16.msra.mxu0 %v1178
        %1512 = vmatprep.subr.bf16.mxu0 0
        %1513 = vmatpush1.bf16.msra.mxu0 %v1179
        %1514 = vmatprep.subr.bf16.mxu0 0
        %1515 = vmatpush1.bf16.msra.mxu0 %v1180
        %1516 = vmatprep.subr.bf16.mxu0 0
        %1517 = vmatpush1.bf16.msra.mxu0 %v1181
        %1518 = vmatprep.subr.bf16.mxu0 0
        %1519 = vmatpush1.bf16.msra.mxu0 %v1182
        %1520 = vmatprep.subr.bf16.mxu0 0
        %1521 = vmatpush1.bf16.msra.mxu0 %v1183
        %1522 = vmatprep.subr.bf16.mxu0 0
        %1523 = vmatpush1.bf16.msra.mxu0 %v1184
        %1524 = vmatprep.subr.bf16.mxu0 0
        %1525 = vmatpush1.bf16.msra.mxu0 %v1185
        %1526 = vmatprep.subr.bf16.mxu0 0
        %1527 = vmatpush1.bf16.msra.mxu0 %v1186
        %1528 = vmatprep.subr.bf16.mxu0 0
        %1529 = vmatpush1.bf16.msra.mxu0 %v1187
        %1530 = vmatprep.subr.bf16.mxu0 0
        %1531 = vmatpush1.bf16.msra.mxu0 %v1188
        %1532 = vmatprep.subr.bf16.mxu0 0
        %1533 = vmatpush1.bf16.msra.mxu0 %v1189
        %1534 = vmatprep.mubr.bf16.mxu0 %v548
        %1535 = vmatmul.mubr.bf16.gmra.mrb[0].mxu0 %v546
        %v1536 = vpop.f32.mrb[0].mxu0
        %v1537 = vadd.f32 %v1497, %v1536
        %v1538 = vpop.f32.mrb[0].mxu0
        %v1539 = vpop.f32.mrb[0].mxu0
        %v1540 = vpop.f32.mrb[0].mxu0
        %1541 = vdwg.mxu0
        %1542 = vmatprep.subr.bf16.mxu0 0
        %1543 = vmatpush1.bf16.msra.mxu0 %v1190
        %1544 = vmatprep.subr.bf16.mxu0 0
        %1545 = vmatpush1.bf16.msra.mxu0 %v1191
        %1546 = vmatprep.subr.bf16.mxu0 0
        %1547 = vmatpush1.bf16.msra.mxu0 %v1192
        %1548 = vmatprep.subr.bf16.mxu0 0
        %1549 = vmatpush1.bf16.msra.mxu0 %v1193
        %1550 = vmatprep.subr.bf16.mxu0 0
        %1551 = vmatpush1.bf16.msra.mxu0 %v1194
        %1552 = vmatprep.subr.bf16.mxu0 0
        %1553 = vmatpush1.bf16.msra.mxu0 %v1195
        %1554 = vmatprep.subr.bf16.mxu0 0
        %1555 = vmatpush1.bf16.msra.mxu0 %v1196
        %1556 = vmatprep.subr.bf16.mxu0 0
        %1557 = vmatpush1.bf16.msra.mxu0 %v1197
        %1558 = vmatprep.subr.bf16.mxu0 0
        %1559 = vmatpush1.bf16.msra.mxu0 %v1198
        %1560 = vmatprep.subr.bf16.mxu0 0
        %1561 = vmatpush1.bf16.msra.mxu0 %v1199
        %1562 = vmatprep.subr.bf16.mxu0 0
        %1563 = vmatpush1.bf16.msra.mxu0 %v1200
        %1564 = vmatprep.subr.bf16.mxu0 0
        %1565 = vmatpush1.bf16.msra.mxu0 %v1201
        %1566 = vmatprep.subr.bf16.mxu0 0
        %1567 = vmatpush1.bf16.msra.mxu0 %v1202
        %1568 = vmatprep.subr.bf16.mxu0 0
        %1569 = vmatpush1.bf16.msra.mxu0 %v1203
        %1570 = vmatprep.subr.bf16.mxu0 0
        %1571 = vmatpush1.bf16.msra.mxu0 %v1204
        %1572 = vmatprep.subr.bf16.mxu0 0
        %1573 = vmatpush1.bf16.msra.mxu0 %v1205
        %1574 = vmatprep.mubr.bf16.mxu0 %v586
        %1575 = vmatmul.mubr.bf16.gmra.mrb[0].mxu0 %v572
        %v1576 = vpop.f32.mrb[0].mxu0
        %v1577 = vadd.f32 %v1537, %v1576
        %v1578 = vpop.f32.mrb[0].mxu0
        %v1579 = vpop.f32.mrb[0].mxu0
        %v1580 = vpop.f32.mrb[0].mxu0
        %1581 = vdwg.mxu0
        %1582 = vmatprep.subr.bf16.mxu0 0
        %1583 = vmatpush1.bf16.msra.mxu0 %v1206
        %1584 = vmatprep.subr.bf16.mxu0 0
        %1585 = vmatpush1.bf16.msra.mxu0 %v1207
        %1586 = vmatprep.subr.bf16.mxu0 0
        %1587 = vmatpush1.bf16.msra.mxu0 %v1208
        %1588 = vmatprep.subr.bf16.mxu0 0
        %1589 = vmatpush1.bf16.msra.mxu0 %v1209
        %1590 = vmatprep.subr.bf16.mxu0 0
        %1591 = vmatpush1.bf16.msra.mxu0 %v1210
        %1592 = vmatprep.subr.bf16.mxu0 0
        %1593 = vmatpush1.bf16.msra.mxu0 %v1211
        %1594 = vmatprep.subr.bf16.mxu0 0
        %1595 = vmatpush1.bf16.msra.mxu0 %v1212
        %1596 = vmatprep.subr.bf16.mxu0 0
        %1597 = vmatpush1.bf16.msra.mxu0 %v1213
        %1598 = vmatprep.subr.bf16.mxu0 0
        %1599 = vmatpush1.bf16.msra.mxu0 %v1214
        %1600 = vmatprep.subr.bf16.mxu0 0
        %1601 = vmatpush1.bf16.msra.mxu0 %v1215
        %1602 = vmatprep.subr.bf16.mxu0 0
        %1603 = vmatpush1.bf16.msra.mxu0 %v1216
        %1604 = vmatprep.subr.bf16.mxu0 0
        %1605 = vmatpush1.bf16.msra.mxu0 %v1217
        %1606 = vmatprep.subr.bf16.mxu0 0
        %1607 = vmatpush1.bf16.msra.mxu0 %v1218
        %1608 = vmatprep.subr.bf16.mxu0 0
        %1609 = vmatpush1.bf16.msra.mxu0 %v1219
        %1610 = vmatprep.subr.bf16.mxu0 0
        %1611 = vmatpush1.bf16.msra.mxu0 %v1220
        %1612 = vmatprep.subr.bf16.mxu0 0
        %1613 = vmatpush1.bf16.msra.mxu0 %v1221
        %1614 = vmatprep.mubr.bf16.mxu0 %v596
        %1615 = vmatmul.mubr.bf16.gmra.mrb[0].mxu0 %v594
        %v1616 = vpop.f32.mrb[0].mxu0
        %v1617 = vadd.f32 %v1577, %v1616
        %v1618 = vpop.f32.mrb[0].mxu0
        %v1619 = vpop.f32.mrb[0].mxu0
        %v1620 = vpop.f32.mrb[0].mxu0
        %1621 = vdwg.mxu0
        %1622 = vmatprep.subr.bf16.mxu0 0
        %1623 = vmatpush1.bf16.msra.mxu0 %v1222
        %1624 = vmatprep.subr.bf16.mxu0 0
        %1625 = vmatpush1.bf16.msra.mxu0 %v1223
        %1626 = vmatprep.subr.bf16.mxu0 0
        %1627 = vmatpush1.bf16.msra.mxu0 %v1224
        %1628 = vmatprep.subr.bf16.mxu0 0
        %1629 = vmatpush1.bf16.msra.mxu0 %v1225
        %1630 = vmatprep.subr.bf16.mxu0 0
        %1631 = vmatpush1.bf16.msra.mxu0 %v1226
        %1632 = vmatprep.subr.bf16.mxu0 0
        %1633 = vmatpush1.bf16.msra.mxu0 %v1227
        %1634 = vmatprep.subr.bf16.mxu0 0
        %1635 = vmatpush1.bf16.msra.mxu0 %v1228
        %1636 = vmatprep.subr.bf16.mxu0 0
        %1637 = vmatpush1.bf16.msra.mxu0 %v1229
        %1638 = vmatprep.subr.bf16.mxu0 0
        %1639 = vmatpush1.bf16.msra.mxu0 %v1230
        %1640 = vmatprep.subr.bf16.mxu0 0
        %1641 = vmatpush1.bf16.msra.mxu0 %v1231
        %1642 = vmatprep.subr.bf16.mxu0 0
        %1643 = vmatpush1.bf16.msra.mxu0 %v1232
        %1644 = vmatprep.subr.bf16.mxu0 0
        %1645 = vmatpush1.bf16.msra.mxu0 %v1233
        %1646 = vmatprep.subr.bf16.mxu0 0
        %1647 = vmatpush1.bf16.msra.mxu0 %v1234
        %1648 = vmatprep.subr.bf16.mxu0 0
        %1649 = vmatpush1.bf16.msra.mxu0 %v1235
        %1650 = vmatprep.subr.bf16.mxu0 0
        %1651 = vmatpush1.bf16.msra.mxu0 %v1236
        %1652 = vmatprep.subr.bf16.mxu0 0
        %1653 = vmatpush1.bf16.msra.mxu0 %v1237
        %1654 = vmatprep.mubr.bf16.mxu0 %v593
        %1655 = vmatmul.mubr.bf16.gmra.mrb[0].mxu0 %v579
        %v1656 = vpop.f32.mrb[0].mxu0
        %v1657 = vadd.f32 %v1617, %v1656
        %v1658 = vpop.f32.mrb[0].mxu0
        %v1659 = vpop.f32.mrb[0].mxu0
        %v1660 = vpop.f32.mrb[0].mxu0
        %1661 = vdwg.mxu0
        %1662 = vmatprep.subr.bf16.mxu0 0
        %1663 = vmatpush1.bf16.msra.mxu0 %v1238
        %1664 = vmatprep.subr.bf16.mxu0 0
        %1665 = vmatpush1.bf16.msra.mxu0 %v1239
        %1666 = vmatprep.subr.bf16.mxu0 0
        %1667 = vmatpush1.bf16.msra.mxu0 %v1240
        %1668 = vmatprep.subr.bf16.mxu0 0
        %1669 = vmatpush1.bf16.msra.mxu0 %v1241
        %1670 = vmatprep.subr.bf16.mxu0 0
        %1671 = vmatpush1.bf16.msra.mxu0 %v1242
        %1672 = vmatprep.subr.bf16.mxu0 0
        %1673 = vmatpush1.bf16.msra.mxu0 %v1243
        %1674 = vmatprep.subr.bf16.mxu0 0
        %1675 = vmatpush1.bf16.msra.mxu0 %v1244
        %1676 = vmatprep.subr.bf16.mxu0 0
        %1677 = vmatpush1.bf16.msra.mxu0 %v1245
        %1678 = vmatprep.subr.bf16.mxu0 0
        %1679 = vmatpush1.bf16.msra.mxu0 %v1246
        %1680 = vmatprep.subr.bf16.mxu0 0
        %1681 = vmatpush1.bf16.msra.mxu0 %v1247
        %1682 = vmatprep.subr.bf16.mxu0 0
        %1683 = vmatpush1.bf16.msra.mxu0 %v1248
        %1684 = vmatprep.subr.bf16.mxu0 0
        %1685 = vmatpush1.bf16.msra.mxu0 %v1249
        %1686 = vmatprep.subr.bf16.mxu0 0
        %1687 = vmatpush1.bf16.msra.mxu0 %v1250
        %1688 = vmatprep.subr.bf16.mxu0 0
        %1689 = vmatpush1.bf16.msra.mxu0 %v1251
        %1690 = vmatprep.subr.bf16.mxu0 0
        %1691 = vmatpush1.bf16.msra.mxu0 %v1252
        %1692 = vmatprep.subr.bf16.mxu0 0
        %1693 = vmatpush1.bf16.msra.mxu0 %v1253
        %1694 = vmatprep.mubr.bf16.mxu0 %v597
        %1695 = vmatmul.mubr.bf16.gmra.mrb[0].mxu0 %v595
        %v1696 = vpop.f32.mrb[0].mxu0
        %v1697 = vadd.f32 %v1657, %v1696
        %v1698 = vpop.f32.mrb[0].mxu0
        %v1699 = vpop.f32.mrb[0].mxu0
        %v1700 = vpop.f32.mrb[0].mxu0
        %1701 = vdwg.mxu0
        %v1702 = vadd.f32 %v239, %v1697
        %vm1703 = vcmask 517120
        %1704 = vst.msk [vmem:[#allocation2] sm:$0x3] %vm1703, %v1702
        %p1705 = scmp.eq.s32.totalorder %s17, 3
        // Predicated region
        $region45: #{mon_cnn_forward.5} parent=39 // pred_check
          %p1706 = pneg %p1705
        $region46: #{mon_cnn_forward.5} parent=39 // pred_check_branch
          %1708 = sbr.rel (%p1706) target = $region48
        $region47: #{mon_cnn_forward.5} parent=39 // pred_region
          %v1709 = vld [vmem:[#allocation2] sm:$0x3]
          %v1710 = vld [vmem:[%s2] sm:$0x1]
          %v1712 = vlaneseq
          %v1713 = vshrl.u32 %v1712, 7
          %v1714 = vsub.s32 0, %v1713
          %v1715 = vrot.slane %v1710, %v1714
          %v1717 = vadd.f32 %v1709, %v1715
          %v1718 = vmax.f32 %v1717, 0.0
          %v1719 = vld [vmem:[%s3] sm:$0xff]
          %v1720 = vld [vmem:[%s3 + $0x8] sm:$0xff]
          %v1721 = vld [vmem:[%s3 + $0x10] sm:$0xff]
          %v1722 = vld [vmem:[%s3 + $0x18] sm:$0xff]
          %v1723 = vld [vmem:[%s3 + $0x20] sm:$0xff]
          %v1724 = vld [vmem:[%s3 + $0x28] sm:$0xff]
          %v1725 = vld [vmem:[%s3 + $0x30] sm:$0xff]
          %v1726 = vld [vmem:[%s3 + $0x38] sm:$0xff]
          %v1727 = vld [vmem:[%s4] sm:$0x1]
          %v1729 = vlaneseq
          %v1730 = vshrl.u32 %v1729, 7
          %v1731 = vsub.s32 0, %v1730
          %v1732 = vrot.slane %v1727, %v1731
          %vm1734 = vcmask 523264
          %v1736 = vsel %vm1734, %v1718, 0
          %1738 = vmatprep.subr.mxu0 0.0
          %1739 = vmatpush1.msra.mxu0 %v1719
          %1740 = vmatprep.subr.mxu0 0.0
          %1741 = vmatpush1.msra.mxu0 %v1720
          %1742 = vmatprep.subr.mxu0 0.0
          %1743 = vmatpush1.msra.mxu0 %v1721
          %1744 = vmatprep.subr.mxu0 0.0
          %1745 = vmatpush1.msra.mxu0 %v1722
          %1746 = vmatprep.subr.mxu0 0.0
          %1747 = vmatpush1.msra.mxu0 %v1723
          %1748 = vmatprep.subr.mxu0 0.0
          %1749 = vmatpush1.msra.mxu0 %v1724
          %1750 = vmatprep.subr.mxu0 0.0
          %1751 = vmatpush1.msra.mxu0 %v1725
          %1752 = vmatprep.subr.mxu0 0.0
          %1753 = vmatpush1.msra.mxu0 %v1726
          %1754 = vmatprep.subr.mxu0 0.0
          %1755 = vmatpush1.msra.mxu0 0.0
          %1756 = vmatprep.subr.mxu0 0.0
          %1757 = vmatpush1.msra.mxu0 0.0
          %1758 = vmatprep.subr.mxu0 0.0
          %1759 = vmatpush1.msra.mxu0 0.0
          %1760 = vmatprep.subr.mxu0 0.0
          %1761 = vmatpush1.msra.mxu0 0.0
          %1762 = vmatprep.subr.mxu0 0.0
          %1763 = vmatpush1.msra.mxu0 0.0
          %1764 = vmatprep.subr.mxu0 0.0
          %1765 = vmatpush1.msra.mxu0 0.0
          %1766 = vmatprep.subr.mxu0 0.0
          %1767 = vmatpush1.msra.mxu0 0.0
          %1768 = vmatprep.subr.mxu0 0.0
          %1769 = vmatpush1.msra.mxu0 0.0
          %1770 = vmatprep.subr.mxu0 0.0
          %1771 = vmatpush1.msra.mxu0 0.0
          %1772 = vmatprep.subr.mxu0 0.0
          %1773 = vmatpush1.msra.mxu0 0.0
          %1774 = vmatprep.subr.mxu0 0.0
          %1775 = vmatpush1.msra.mxu0 0.0
          %1776 = vmatprep.subr.mxu0 0.0
          %1777 = vmatpush1.msra.mxu0 0.0
          %1778 = vmatprep.subr.mxu0 0.0
          %1779 = vmatpush1.msra.mxu0 0.0
          %1780 = vmatprep.subr.mxu0 0.0
          %1781 = vmatpush1.msra.mxu0 0.0
          %1782 = vmatprep.subr.mxu0 0.0
          %1783 = vmatpush1.msra.mxu0 0.0
          %1784 = vmatprep.subr.mxu0 0.0
          %1785 = vmatpush1.msra.mxu0 0.0
          %1786 = vmatprep.subr.mxu0 0.0
          %1787 = vmatpush1.msra.mxu0 0.0
          %1788 = vmatprep.subr.mxu0 0.0
          %1789 = vmatpush1.msra.mxu0 0.0
          %1790 = vmatprep.subr.mxu0 0.0
          %1791 = vmatpush1.msra.mxu0 0.0
          %1792 = vmatprep.subr.mxu0 0.0
          %1793 = vmatpush1.msra.mxu0 0.0
          %1794 = vmatprep.subr.mxu0 0.0
          %1795 = vmatpush1.msra.mxu0 0.0
          %1796 = vmatprep.subr.mxu0 0.0
          %1797 = vmatpush1.msra.mxu0 0.0
          %1798 = vmatprep.subr.mxu0 0.0
          %1799 = vmatpush1.msra.mxu0 0.0
          %1800 = vmatprep.subr.mxu0 0.0
          %1801 = vmatpush1.msra.mxu0 0.0
          %1802 = vmatprep.mubr.f32.mxu0 0.0
          %1803 = vmatmul.mubr.f32.gmra.mrb[0].mxu0 %v1736
          %v1804 = vpop.f32.mrb[0].mxu0
          %v1805 = vadd.f32 %v1732, %v1804
          %v1806 = vpop.f32.mrb[0].mxu0
          %1807 = vdwg.mxu0
          %vm1808 = vcmask 17408
          %1809 = vst.msk [vmem:[#allocation3] sm:$0x3] %vm1808, %v1805
        $region48: #{mon_cnn_forward.5} parent=39 // pred_fallthru
          _
        // Predicated region
        $region49: #{mon_cnn_forward.5} parent=39 // pred_check
          %p1810 = pneg %p145
        $region50: #{mon_cnn_forward.5} parent=39 // pred_check_branch
          %1812 = sbr.rel (%p1810) target = $region52
        $region51: #{mon_cnn_forward.5} parent=39 // pred_region
          %s1814 = ssub.s32 32, 32
          %1815 = vsyncadd [#allocation4], %s1814
          %s1817 = sshll.u32 [#allocation3], 4
          %s1818 = int_to_ptr.vmem [resolvable:$true] %s1817
          %1820 = dma.vmem_to_hbm [thread:$0]  %s1818, 32, %s5, [#allocation4]
        $region52: #{mon_cnn_forward.5} parent=39 // pred_fallthru
          _
        // Predicated region
        $region53: #{mon_cnn_forward.5} parent=39 // pred_check
          %p1821 = pneg %p145
        $region54: #{mon_cnn_forward.5} parent=39 // pred_check_branch
          %1823 = sbr.rel (%p1821) target = $region56
        $region55: #{mon_cnn_forward.5} parent=39 // pred_region
          %1824 = dma.done [#allocation4], 32
        $region56: #{mon_cnn_forward.5} parent=39 // pred_fallthru
          _
      $region40: #{mon_cnn_forward.5} parent=5 // pred_fallthru
        _
      %p1825 = scmp.le.s32.totalorder 2, %s12
      // Predicated region
      $region57: #{mon_cnn_forward.5} parent=5 // pred_check
        %p1826 = pneg %p1825
      $region58: #{mon_cnn_forward.5} parent=5 // pred_check_branch
        %1828 = sbr.rel (%p1826) target = $region60
      $region59: #{mon_cnn_forward.5} parent=5 // pred_region
        %s1829 = ssub.s32 %s12, 2
      $region60: #{mon_cnn_forward.5} parent=5 // pred_fallthru
        _
    $region6: #{mon_cnn_forward.5} parent=1 // loop_footer
      %s16 = sadd.s32 1, %s12
    $region7: #{mon_cnn_forward.5} parent=1 // loop_footer_branch
      %11 = sbr.rel target = $region3
    $region8: #{mon_cnn_forward.5} parent=1 // loop_exit
      _
    %1830 = vsyncpa [#allocation4], 1
    %s1831 = scalar_lea.sflag [#allocation4], 1
    %1832 = vsyncpa %s1831, 1

</llo_original>
